<compile_context>
chip_gen: v7x
topology: tpu7x:2x2x1
jax: 0.10.0
libtpu: 0.0.40
codegen_flags: <defaults>
</compile_context>

<pallas_src>
import jax
import jax.numpy as jnp
from jax.experimental import pallas as pl
from jax.experimental.pallas import tpu as pltpu

# ----- model config (small, consistent with the module's constructor args) -----
EMBED_SIZE = 32
HIDDEN_SIZE = 32
VOCAB_SIZE = 128        # one-hot-embedding + lane-dense output assume VOCAB_SIZE == 128
NUM_LAYERS = 2          # decoder kernel below is written for exactly 2 layers (wavefront)
FEAT_CH = 64            # stand-in for inception's 2048-d pooled feature width
KH = KW = 3             # conv stem kernel
CKK = 3 * KH * KW       # 27 patch columns (3 input channels)
CKK_PAD = 32            # lane-pad the patch dim (extra conv_w rows see only zeros)
_SUBLANE = 8            # f32 sublane count: batch is padded to a multiple of this


# --------------------------------------------------------------------------- #
# Encoder: fused conv-stem + global-average-pool + fc + ReLU, one 8-image block / step
# --------------------------------------------------------------------------- #
def _encoder_kernel(patch_ref, convw_ref, convb_ref, fcw_ref, fcb_ref, o_ref):
    conv = (jnp.dot(patch_ref[...], convw_ref[...], preferred_element_type=jnp.float32)
            + convb_ref[...])
    conv = jnp.maximum(conv, 0.0)                                 # conv stem + ReLU, (8*HW, F)
    nb = o_ref.shape[0]                                           # 8 images per block
    per = conv.shape[0] // nb                                     # H*W rows per image
    pooled = jnp.mean(conv.reshape(nb, per, conv.shape[1]), axis=1)   # GAP -> (8, F)
    y = jnp.dot(pooled, fcw_ref[...], preferred_element_type=jnp.float32) + fcb_ref[...]
    o_ref[...] = jnp.maximum(y, 0.0).astype(o_ref.dtype)          # fc + ReLU (dropout = identity)


def fused_encoder(params, images_padded):
    """images_padded: (NP, C, H, W) with NP a multiple of 8 -> features (NP, EMBED_SIZE)."""
    NP, _, H, W = images_padded.shape
    HW = H * W
    patches = im2col_same_flat(images_padded)                     # (NP*HW, CKK_PAD) plain-JAX glue
    nblk = NP // _SUBLANE
    return pl.pallas_call(
        _encoder_kernel,
        out_shape=jax.ShapeDtypeStruct((NP, EMBED_SIZE), jnp.float32),
        grid=(nblk,),
        in_specs=[pl.BlockSpec((_SUBLANE * HW, CKK_PAD), lambda i: (i, 0)),
                  pl.BlockSpec((CKK_PAD, FEAT_CH), lambda i: (0, 0)),
                  pl.BlockSpec((1, FEAT_CH), lambda i: (0, 0)),
                  pl.BlockSpec((FEAT_CH, EMBED_SIZE), lambda i: (0, 0)),
                  pl.BlockSpec((1, EMBED_SIZE), lambda i: (0, 0))],
        out_specs=pl.BlockSpec((_SUBLANE, EMBED_SIZE), lambda i: (i, 0)),
        compiler_params=pltpu.CompilerParams(dimension_semantics=("parallel",)),
    )(patches, params["conv_w"], params["conv_b"], params["fc_w"], params["fc_b"])


# --------------------------------------------------------------------------- #
# Decoder: embedding + 2-layer wavefronted LSTM + linear, fully fused in one kernel
# --------------------------------------------------------------------------- #
def _decoder_kernel(feat_ref, ids_ref, wih0_ref, b0_ref, wtok0_ref, b1_ref,
                    wblk_ref, linw_ref, linb_ref, out_ref, hseq1_scr):
    """feat_ref: (NP, E) padded features; ids_ref: (T*NP, 1) int32 padded ids;
    wtok0_ref: embed @ wih0 + b0 (V, 4H); wblk_ref: [[whh0, wih1],[0, whh1]] (2H, 8H);
    out_ref: ((T+1)*NP, V) logits (lane-dense, V = 128)."""
    NP = feat_ref.shape[0]
    TN = ids_ref.shape[0]
    V = wtok0_ref.shape[0]
    H = linw_ref.shape[0]
    Tt = out_ref.shape[0] // NP                 # T + 1
    f32 = jnp.float32

    # ---- embedding folded into the layer-0 input projection: ONE (TN,V)x(V,4H) matmul ----
    onehot = (ids_ref[...] == jax.lax.broadcasted_iota(jnp.int32, (TN, V), 1)).astype(f32)
    gx_emb = jnp.dot(onehot, wtok0_ref[...], preferred_element_type=f32)      # (TN, 4H), b0 folded
    gx_feat = (jnp.dot(feat_ref[...], wih0_ref[...], preferred_element_type=f32)
               + b0_ref[...])                                                  # (NP, 4H)
    # decoder dropout(p=0.5): identity (eval)

    wblk = wblk_ref[...]                                                       # (2H, 8H)
    b1_b = jnp.broadcast_to(b1_ref[...], (NP, 4 * H))                          # hoisted out of loop

    def half_update(g4, c_prev):
        """One LSTM cell update from pre-activation gates (i,f,g,o) of one layer."""
        sg = jax.nn.sigmoid(g4)                     # one vreg-wide pass (i,f,o used)
        tg = jnp.tanh(g4[:, 2 * H:3 * H])           # tanh only on the cell-gate slice
        c_new = sg[:, H:2 * H] * c_prev + sg[:, 0:H] * tg
        h_new = sg[:, 3 * H:4 * H] * jnp.tanh(c_new)
        return h_new, c_new

    h0 = jnp.zeros((NP, H), f32); c0 = jnp.zeros((NP, H), f32)
    h1 = jnp.zeros((NP, H), f32); c1 = jnp.zeros((NP, H), f32)

    # ---- wavefront: wave s computes layer0@t=s and layer1@t=s-1 with ONE block matmul ----
    for s in range(Tt + 1):                       # static unroll (small T)
        if s == 0:
            h0, c0 = half_update(gx_feat, c0)     # h0_prev == 0 -> no recurrent matmul needed
            continue
        v = jnp.concatenate([h0, h1], axis=1)                     # [h0_{s-1} | h1_{s-2}] (NP, 2H)
        rec = jnp.dot(v, wblk, preferred_element_type=f32)        # (NP, 8H)
        h1n, c1n = half_update(rec[:, 4 * H:] + b1_b, c1)         # layer 1 @ time s-1
        hseq1_scr[(s - 1) * NP:s * NP, :] = h1n                   # sublane-aligned (NP == 8)
        if s < Tt:                                                # layer 0 @ time s
            h0, c0 = half_update(rec[:, :4 * H] + gx_emb[(s - 1) * NP:s * NP, :], c0)
        h1, c1 = h1n, c1n

    # ---- final H -> VOCAB projection over all time steps at once, 128-lane-dense stores ----
    logits = jnp.dot(hseq1_scr[...], linw_ref[...], preferred_element_type=f32) + linb_ref[...]
    out_ref[...] = logits.astype(out_ref.dtype)


def fused_decoder(params, features_padded, captions):
    """features_padded: (NP, E) float32 ; captions: (T, N) int32 -> logits (T+1, N, V)."""
    T, N = captions.shape
    NP = features_padded.shape[0]
    Tt = T + 1
    H = HIDDEN_SIZE

    ids_pad = jnp.pad(captions, ((0, 0), (0, NP - N))).reshape(T * NP, 1)

    # Tiny one-off XLA matmuls/concats (outside the serial recurrence):
    #   fold embedding table + b0 into the layer-0 token projection, and build the
    #   wavefront block weight [[whh0, wih1], [0, whh1]].
    w_tok0 = jnp.dot(params["embed"], params["wih"][0]) + params["b"][0]       # (V, 4H)
    w_blk = jnp.concatenate(
        [jnp.concatenate([params["whh"][0], params["wih"][1]], axis=1),
         jnp.concatenate([jnp.zeros((H, 4 * H), jnp.float32), params["whh"][1]], axis=1)],
        axis=0)                                                                # (2H, 8H)

    # Single kernel invocation; batch (NP = 8) is one sublane tile, so no batch grid axis.
    # TODO(synk): if NP grows past 8, add a batch grid axis with dimension_semantics=("parallel",)
    #   so both v7x TensorCores run independent recurrences.
    logits_pad = pl.pallas_call(
        _decoder_kernel,
        out_shape=jax.ShapeDtypeStruct((Tt * NP, VOCAB_SIZE), jnp.float32),
        scratch_shapes=[pltpu.VMEM((Tt * NP, HIDDEN_SIZE), jnp.float32)],
    )(features_padded, ids_pad, params["wih"][0], params["b"][0], w_tok0,
      params["b"][1], w_blk, params["lin_w"], params["lin_b"])

    return logits_pad.reshape(Tt, NP, VOCAB_SIZE)[:, :N, :]


# --------------------------------------------------------------------------- #
# Glue (im2col, params, full forward)
# --------------------------------------------------------------------------- #
def im2col_same_flat(x):
    """NCHW -> (N*H*W, CKK_PAD) patches, padding=1 (SAME for 3x3), lane-padded to 32."""
    N, C, H, W = x.shape
    xp = jnp.pad(x, ((0, 0), (0, 0), (1, 1), (1, 1)))
    cols = [xp[:, :, dy:dy + H, dx:dx + W] for dy in range(KH) for dx in range(KW)]
    patches = jnp.stack(cols, axis=0)                  # (KH*KW, N, C, H, W)
    patches = patches.transpose(1, 3, 4, 2, 0)         # (N, H, W, C, KH*KW)
    patches = patches.reshape(N * H * W, C * KH * KW)  # (N*HW, 27)
    return jnp.pad(patches, ((0, 0), (0, CKK_PAD - C * KH * KW)))


def init_params(key):
    ks = jax.random.split(key, 8)

    def rnd(k, shape, scale=0.1):
        return scale * jax.random.normal(k, shape, jnp.float32)

    params = {
        # conv_w rows 27..31 only ever multiply zero-padded patch columns (no effect).
        "conv_w": rnd(ks[0], (CKK_PAD, FEAT_CH)),
        "conv_b": rnd(ks[1], (1, FEAT_CH)),
        "fc_w": rnd(ks[2], (FEAT_CH, EMBED_SIZE)),
        "fc_b": rnd(ks[3], (1, EMBED_SIZE)),
        "embed": rnd(ks[4], (VOCAB_SIZE, EMBED_SIZE), 1.0),
        "lin_w": rnd(ks[5], (HIDDEN_SIZE, VOCAB_SIZE)),
        "lin_b": rnd(ks[6], (1, VOCAB_SIZE)),
        "wih": [], "whh": [], "b": [],
    }
    kk = jax.random.split(ks[7], 3 * NUM_LAYERS)
    for l in range(NUM_LAYERS):
        ein = EMBED_SIZE if l == 0 else HIDDEN_SIZE
        params["wih"].append(rnd(kk[3 * l + 0], (ein, 4 * HIDDEN_SIZE)))
        params["whh"].append(rnd(kk[3 * l + 1], (HIDDEN_SIZE, 4 * HIDDEN_SIZE)))
        params["b"].append(rnd(kk[3 * l + 2], (1, 4 * HIDDEN_SIZE)))  # b_ih + b_hh combined
    return params


@jax.jit
def cnn_to_rnn_forward(params, images, captions):
    N = images.shape[0]
    NP = -(-N // _SUBLANE) * _SUBLANE
    images_p = jnp.pad(images, ((0, NP - N), (0, 0), (0, 0), (0, 0)))
    features = fused_encoder(params, images_p)           # (NP, E), padded; ReLU'd (dropout = id)
    return fused_decoder(params, features, captions)     # (T+1, N, VOCAB_SIZE)


if __name__ == "__main__":
    key = jax.random.PRNGKey(0)
    k_img, k_cap = jax.random.split(key)
    images = jax.random.normal(k_img, (2, 3, 16, 16), jnp.float32)                    # NCHW
    captions = jax.random.randint(k_cap, (8, 2), 0, VOCAB_SIZE, dtype=jnp.int32)      # (seq, batch)

    params = init_params(jax.random.PRNGKey(42))
    out = cnn_to_rnn_forward(params, images, captions)
    out = jax.block_until_ready(out)

    assert out.shape == (8 + 1, 2, VOCAB_SIZE), out.shape
    assert out.dtype == jnp.float32
    assert bool(jnp.all(jnp.isfinite(out)))
    print("KERNEL_OK")
</pallas_src>

<mosaic_0001>
module attributes {stable_mosaic.version = 11 : i64} {
  func.func @_encoder_kernel(%arg0: i32, %arg1: memref<2048x32xf32, #tpu.memory_space<vmem>>, %arg2: memref<32x64xf32, #tpu.memory_space<vmem>>, %arg3: memref<1x64xf32, #tpu.memory_space<vmem>>, %arg4: memref<64x32xf32, #tpu.memory_space<vmem>>, %arg5: memref<1x32xf32, #tpu.memory_space<vmem>>, %arg6: memref<8x32xf32, #tpu.memory_space<vmem>>) attributes {dimension_semantics = [#tpu.dimension_semantics<parallel>], iteration_bounds = array<i64: 1>, scalar_prefetch = 0 : i64, scratch_operands = 0 : i64, tpu.core_type = #tpu.core_type<tc>, window_params = [{transform_indices = @transform_0, window_bounds = array<i64: 2048, 32>}, {pipeline_mode = #tpu.pipeline_mode<synchronous>, transform_indices = @transform_1, window_bounds = array<i64: 32, 64>}, {pipeline_mode = #tpu.pipeline_mode<synchronous>, transform_indices = @transform_2, window_bounds = array<i64: 1, 64>}, {pipeline_mode = #tpu.pipeline_mode<synchronous>, transform_indices = @transform_3, window_bounds = array<i64: 64, 32>}, {pipeline_mode = #tpu.pipeline_mode<synchronous>, transform_indices = @transform_4, window_bounds = array<i64: 1, 32>}, {transform_indices = @transform_5, window_bounds = array<i64: 8, 32>}]} {
    %c0 = arith.constant 0 : index
    %c0_0 = arith.constant 0 : index
    %0 = vector.load %arg1[%c0, %c0_0] : memref<2048x32xf32, #tpu.memory_space<vmem>>, vector<2048x32xf32>
    %c0_1 = arith.constant 0 : index
    %c0_2 = arith.constant 0 : index
    %1 = vector.load %arg2[%c0_1, %c0_2] : memref<32x64xf32, #tpu.memory_space<vmem>>, vector<32x64xf32>
    %cst = arith.constant dense<0.000000e+00> : vector<2048x64xf32>
    %2 = tpu.matmul %0, %1, %cst {dimension_numbers = #tpu.dot_dimension_numbers<[1], [0], [0], [1], [0, 0, 1, 1], [], []>} : vector<2048x32xf32>, vector<32x64xf32>, vector<2048x64xf32> -> vector<2048x64xf32>
    %c0_3 = arith.constant 0 : index
    %c0_4 = arith.constant 0 : index
    %3 = vector.load %arg3[%c0_3, %c0_4] : memref<1x64xf32, #tpu.memory_space<vmem>>, vector<1x64xf32>
    %4 = vector.broadcast %3 : vector<1x64xf32> to vector<2048x64xf32>
    %5 = arith.addf %2, %4 : vector<2048x64xf32>
    %cst_5 = arith.constant 0.000000e+00 : f32
    %6 = vector.broadcast %cst_5 : f32 to vector<2048x64xf32>
    %7 = arith.maximumf %5, %6 : vector<2048x64xf32>
    %8 = vector.shape_cast %7 : vector<2048x64xf32> to vector<8x256x64xf32>
    %cst_6 = arith.constant dense<0.000000e+00> : vector<8x64xf32>
    %9 = vector.multi_reduction <add>, %8, %cst_6 [1] : vector<8x256x64xf32> to vector<8x64xf32>
    %cst_7 = arith.constant 2.560000e+02 : f32
    %10 = vector.broadcast %cst_7 : f32 to vector<8x64xf32>
    %11 = arith.divf %9, %10 : vector<8x64xf32>
    %c0_8 = arith.constant 0 : index
    %c0_9 = arith.constant 0 : index
    %12 = vector.load %arg4[%c0_8, %c0_9] : memref<64x32xf32, #tpu.memory_space<vmem>>, vector<64x32xf32>
    %cst_10 = arith.constant dense<0.000000e+00> : vector<8x32xf32>
    %13 = tpu.matmul %11, %12, %cst_10 {dimension_numbers = #tpu.dot_dimension_numbers<[1], [0], [0], [1], [0, 0, 1, 1], [], []>} : vector<8x64xf32>, vector<64x32xf32>, vector<8x32xf32> -> vector<8x32xf32>
    %c0_11 = arith.constant 0 : index
    %c0_12 = arith.constant 0 : index
    %14 = vector.load %arg5[%c0_11, %c0_12] : memref<1x32xf32, #tpu.memory_space<vmem>>, vector<1x32xf32>
    %15 = vector.broadcast %14 : vector<1x32xf32> to vector<8x32xf32>
    %16 = arith.addf %13, %15 : vector<8x32xf32>
    %cst_13 = arith.constant 0.000000e+00 : f32
    %17 = vector.broadcast %cst_13 : f32 to vector<8x32xf32>
    %18 = arith.maximumf %16, %17 : vector<8x32xf32>
    %c0_14 = arith.constant 0 : index
    %c0_15 = arith.constant 0 : index
    %19 = vector.load %arg6[%c0_14, %c0_15] : memref<8x32xf32, #tpu.memory_space<vmem>>, vector<8x32xf32>
    tpu.vector_store %arg6[%c0_14, %c0_15], %18 {strides = array<i32>} : memref<8x32xf32, #tpu.memory_space<vmem>>, vector<8x32xf32>,
    return
  }
  func.func @transform_0(%arg0: i32) -> (i32, i32) {
    %c0_i32 = arith.constant 0 : i32
    %c0_i32_0 = arith.constant 0 : i32
    return %arg0, %c0_i32 : i32, i32
  }
  func.func @transform_1(%arg0: i32) -> (i32, i32) {
    %c0_i32 = arith.constant 0 : i32
    %c0_i32_0 = arith.constant 0 : i32
    %c0_i32_1 = arith.constant 0 : i32
    return %c0_i32, %c0_i32_0 : i32, i32
  }
  func.func @transform_2(%arg0: i32) -> (i32, i32) {
    %c0_i32 = arith.constant 0 : i32
    %c0_i32_0 = arith.constant 0 : i32
    %c0_i32_1 = arith.constant 0 : i32
    return %c0_i32, %c0_i32_0 : i32, i32
  }
  func.func @transform_3(%arg0: i32) -> (i32, i32) {
    %c0_i32 = arith.constant 0 : i32
    %c0_i32_0 = arith.constant 0 : i32
    %c0_i32_1 = arith.constant 0 : i32
    return %c0_i32, %c0_i32_0 : i32, i32
  }
  func.func @transform_4(%arg0: i32) -> (i32, i32) {
    %c0_i32 = arith.constant 0 : i32
    %c0_i32_0 = arith.constant 0 : i32
    %c0_i32_1 = arith.constant 0 : i32
    return %c0_i32, %c0_i32_0 : i32, i32
  }
  func.func @transform_5(%arg0: i32) -> (i32, i32) {
    %c0_i32 = arith.constant 0 : i32
    %c0_i32_0 = arith.constant 0 : i32
    return %arg0, %c0_i32 : i32, i32
  }
}

module attributes {stable_mosaic.version = 11 : i64} {
  func.func @_decoder_kernel(%arg0: memref<8x32xf32, #tpu.memory_space<vmem>>, %arg1: memref<64x1xi32, #tpu.memory_space<vmem>>, %arg2: memref<32x128xf32, #tpu.memory_space<vmem>>, %arg3: memref<1x128xf32, #tpu.memory_space<vmem>>, %arg4: memref<128x128xf32, #tpu.memory_space<vmem>>, %arg5: memref<1x128xf32, #tpu.memory_space<vmem>>, %arg6: memref<64x256xf32, #tpu.memory_space<vmem>>, %arg7: memref<32x128xf32, #tpu.memory_space<vmem>>, %arg8: memref<1x128xf32, #tpu.memory_space<vmem>>, %arg9: memref<72x128xf32, #tpu.memory_space<vmem>>, %arg10: memref<72x32xf32, #tpu.memory_space<vmem>>) attributes {dimension_semantics = [], scalar_prefetch = 0 : i64, scratch_operands = 1 : i64, tpu.core_type = #tpu.core_type<tc>} {
    %c0 = arith.constant 0 : index
    %c0_0 = arith.constant 0 : index
    %0 = vector.load %arg1[%c0, %c0_0] : memref<64x1xi32, #tpu.memory_space<vmem>>, vector<64x1xi32>
    %1 = tpu.iota {dimensions = array<i32: 1>} : vector<64x128xi32>
    %2 = vector.broadcast %0 : vector<64x1xi32> to vector<64x128xi32>
    %3 = arith.cmpi eq, %2, %1 : vector<64x128xi32>
    %4 = arith.extui %3 : vector<64x128xi1> to vector<64x128xi32>
    %5 = arith.sitofp %4 : vector<64x128xi32> to vector<64x128xf32>
    %c0_1 = arith.constant 0 : index
    %c0_2 = arith.constant 0 : index
    %6 = vector.load %arg4[%c0_1, %c0_2] : memref<128x128xf32, #tpu.memory_space<vmem>>, vector<128x128xf32>
    %cst = arith.constant dense<0.000000e+00> : vector<64x128xf32>
    %7 = tpu.matmul %5, %6, %cst {dimension_numbers = #tpu.dot_dimension_numbers<[1], [0], [0], [1], [0, 0, 1, 1], [], []>} : vector<64x128xf32>, vector<128x128xf32>, vector<64x128xf32> -> vector<64x128xf32>
    %c0_3 = arith.constant 0 : index
    %c0_4 = arith.constant 0 : index
    %8 = vector.load %arg0[%c0_3, %c0_4] : memref<8x32xf32, #tpu.memory_space<vmem>>, vector<8x32xf32>
    %c0_5 = arith.constant 0 : index
    %c0_6 = arith.constant 0 : index
    %9 = vector.load %arg2[%c0_5, %c0_6] : memref<32x128xf32, #tpu.memory_space<vmem>>, vector<32x128xf32>
    %cst_7 = arith.constant dense<0.000000e+00> : vector<8x128xf32>
    %10 = tpu.matmul %8, %9, %cst_7 {dimension_numbers = #tpu.dot_dimension_numbers<[1], [0], [0], [1], [0, 0, 1, 1], [], []>} : vector<8x32xf32>, vector<32x128xf32>, vector<8x128xf32> -> vector<8x128xf32>
    %c0_8 = arith.constant 0 : index
    %c0_9 = arith.constant 0 : index
    %11 = vector.load %arg3[%c0_8, %c0_9] : memref<1x128xf32, #tpu.memory_space<vmem>>, vector<1x128xf32>
    %12 = vector.broadcast %11 : vector<1x128xf32> to vector<8x128xf32>
    %13 = arith.addf %10, %12 : vector<8x128xf32>
    %c0_10 = arith.constant 0 : index
    %c0_11 = arith.constant 0 : index
    %14 = vector.load %arg6[%c0_10, %c0_11] : memref<64x256xf32, #tpu.memory_space<vmem>>, vector<64x256xf32>
    %c0_12 = arith.constant 0 : index
    %c0_13 = arith.constant 0 : index
    %15 = vector.load %arg5[%c0_12, %c0_13] : memref<1x128xf32, #tpu.memory_space<vmem>>, vector<1x128xf32>
    %16 = vector.shape_cast %15 : vector<1x128xf32> to vector<1x128xf32>
    %17 = vector.broadcast %16 : vector<1x128xf32> to vector<8x128xf32>
    %cst_14 = arith.constant 0.000000e+00 : f32
    %18 = vector.broadcast %cst_14 : f32 to vector<8x32xf32>
    %cst_15 = arith.constant 0.000000e+00 : f32
    %19 = vector.broadcast %cst_15 : f32 to vector<8x32xf32>
    %cst_16 = arith.constant 0.000000e+00 : f32
    %20 = vector.broadcast %cst_16 : f32 to vector<8x32xf32>
    %21 = arith.negf %13 : vector<8x128xf32>
    %22 = math.exp %21 : vector<8x128xf32>
    %cst_17 = arith.constant 1.000000e+00 : f32
    %23 = vector.broadcast %cst_17 : f32 to vector<8x128xf32>
    %24 = arith.addf %23, %22 : vector<8x128xf32>
    %25 = arith.divf %23, %24 : vector<8x128xf32>
    %26 = vector.extract_strided_slice %13 {offsets = [0, 64], sizes = [8, 32], strides = [1, 1]} : vector<8x128xf32> to vector<8x32xf32>
    %27 = math.tanh %26 : vector<8x32xf32>
    %28 = vector.extract_strided_slice %25 {offsets = [0, 32], sizes = [8, 32], strides = [1, 1]} : vector<8x128xf32> to vector<8x32xf32>
    %29 = arith.mulf %28, %18 : vector<8x32xf32>
    %30 = vector.extract_strided_slice %25 {offsets = [0, 0], sizes = [8, 32], strides = [1, 1]} : vector<8x128xf32> to vector<8x32xf32>
    %31 = arith.mulf %30, %27 : vector<8x32xf32>
    %32 = arith.addf %29, %31 : vector<8x32xf32>
    %33 = vector.extract_strided_slice %25 {offsets = [0, 96], sizes = [8, 32], strides = [1, 1]} : vector<8x128xf32> to vector<8x32xf32>
    %34 = math.tanh %32 : vector<8x32xf32>
    %35 = arith.mulf %33, %34 : vector<8x32xf32>
    %36 = tpu.concatenate %35, %19 in 1 : vector<8x32xf32>, vector<8x32xf32> -> vector<8x64xf32>
    %cst_18 = arith.constant dense<0.000000e+00> : vector<8x256xf32>
    %37 = tpu.matmul %36, %14, %cst_18 {dimension_numbers = #tpu.dot_dimension_numbers<[1], [0], [0], [1], [0, 0, 1, 1], [], []>} : vector<8x64xf32>, vector<64x256xf32>, vector<8x256xf32> -> vector<8x256xf32>
    %38 = vector.extract_strided_slice %37 {offsets = [0, 128], sizes = [8, 128], strides = [1, 1]} : vector<8x256xf32> to vector<8x128xf32>
    %39 = arith.addf %38, %17 : vector<8x128xf32>
    %40 = arith.negf %39 : vector<8x128xf32>
    %41 = math.exp %40 : vector<8x128xf32>
    %cst_19 = arith.constant 1.000000e+00 : f32
    %42 = vector.broadcast %cst_19 : f32 to vector<8x128xf32>
    %43 = arith.addf %42, %41 : vector<8x128xf32>
    %44 = arith.divf %42, %43 : vector<8x128xf32>
    %45 = vector.extract_strided_slice %39 {offsets = [0, 64], sizes = [8, 32], strides = [1, 1]} : vector<8x128xf32> to vector<8x32xf32>
    %46 = math.tanh %45 : vector<8x32xf32>
    %47 = vector.extract_strided_slice %44 {offsets = [0, 32], sizes = [8, 32], strides = [1, 1]} : vector<8x128xf32> to vector<8x32xf32>
    %48 = arith.mulf %47, %20 : vector<8x32xf32>
    %49 = vector.extract_strided_slice %44 {offsets = [0, 0], sizes = [8, 32], strides = [1, 1]} : vector<8x128xf32> to vector<8x32xf32>
    %50 = arith.mulf %49, %46 : vector<8x32xf32>
    %51 = arith.addf %48, %50 : vector<8x32xf32>
    %52 = vector.extract_strided_slice %44 {offsets = [0, 96], sizes = [8, 32], strides = [1, 1]} : vector<8x128xf32> to vector<8x32xf32>
    %53 = math.tanh %51 : vector<8x32xf32>
    %54 = arith.mulf %52, %53 : vector<8x32xf32>
    %c0_20 = arith.constant 0 : index
    %c0_21 = arith.constant 0 : index
    %55 = vector.load %arg10[%c0_20, %c0_21] : memref<72x32xf32, #tpu.memory_space<vmem>>, vector<8x32xf32>
    tpu.vector_store %arg10[%c0_20, %c0_21], %54 {strides = array<i32>} : memref<72x32xf32, #tpu.memory_space<vmem>>, vector<8x32xf32>,
    %56 = vector.extract_strided_slice %37 {offsets = [0, 0], sizes = [8, 128], strides = [1, 1]} : vector<8x256xf32> to vector<8x128xf32>
    %57 = vector.extract_strided_slice %7 {offsets = [0, 0], sizes = [8, 128], strides = [1, 1]} : vector<64x128xf32> to vector<8x128xf32>
    %58 = arith.addf %56, %57 : vector<8x128xf32>
    %59 = arith.negf %58 : vector<8x128xf32>
    %60 = math.exp %59 : vector<8x128xf32>
    %cst_22 = arith.constant 1.000000e+00 : f32
    %61 = vector.broadcast %cst_22 : f32 to vector<8x128xf32>
    %62 = arith.addf %61, %60 : vector<8x128xf32>
    %63 = arith.divf %61, %62 : vector<8x128xf32>
    %64 = vector.extract_strided_slice %58 {offsets = [0, 64], sizes = [8, 32], strides = [1, 1]} : vector<8x128xf32> to vector<8x32xf32>
    %65 = math.tanh %64 : vector<8x32xf32>
    %66 = vector.extract_strided_slice %63 {offsets = [0, 32], sizes = [8, 32], strides = [1, 1]} : vector<8x128xf32> to vector<8x32xf32>
    %67 = arith.mulf %66, %32 : vector<8x32xf32>
    %68 = vector.extract_strided_slice %63 {offsets = [0, 0], sizes = [8, 32], strides = [1, 1]} : vector<8x128xf32> to vector<8x32xf32>
    %69 = arith.mulf %68, %65 : vector<8x32xf32>
    %70 = arith.addf %67, %69 : vector<8x32xf32>
    %71 = vector.extract_strided_slice %63 {offsets = [0, 96], sizes = [8, 32], strides = [1, 1]} : vector<8x128xf32> to vector<8x32xf32>
    %72 = math.tanh %70 : vector<8x32xf32>
    %73 = arith.mulf %71, %72 : vector<8x32xf32>
    %74 = tpu.concatenate %73, %54 in 1 : vector<8x32xf32>, vector<8x32xf32> -> vector<8x64xf32>
    %cst_23 = arith.constant dense<0.000000e+00> : vector<8x256xf32>
    %75 = tpu.matmul %74, %14, %cst_23 {dimension_numbers = #tpu.dot_dimension_numbers<[1], [0], [0], [1], [0, 0, 1, 1], [], []>} : vector<8x64xf32>, vector<64x256xf32>, vector<8x256xf32> -> vector<8x256xf32>
    %76 = vector.extract_strided_slice %75 {offsets = [0, 128], sizes = [8, 128], strides = [1, 1]} : vector<8x256xf32> to vector<8x128xf32>
    %77 = arith.addf %76, %17 : vector<8x128xf32>
    %78 = arith.negf %77 : vector<8x128xf32>
    %79 = math.exp %78 : vector<8x128xf32>
    %cst_24 = arith.constant 1.000000e+00 : f32
    %80 = vector.broadcast %cst_24 : f32 to vector<8x128xf32>
    %81 = arith.addf %80, %79 : vector<8x128xf32>
    %82 = arith.divf %80, %81 : vector<8x128xf32>
    %83 = vector.extract_strided_slice %77 {offsets = [0, 64], sizes = [8, 32], strides = [1, 1]} : vector<8x128xf32> to vector<8x32xf32>
    %84 = math.tanh %83 : vector<8x32xf32>
    %85 = vector.extract_strided_slice %82 {offsets = [0, 32], sizes = [8, 32], strides = [1, 1]} : vector<8x128xf32> to vector<8x32xf32>
    %86 = arith.mulf %85, %51 : vector<8x32xf32>
    %87 = vector.extract_strided_slice %82 {offsets = [0, 0], sizes = [8, 32], strides = [1, 1]} : vector<8x128xf32> to vector<8x32xf32>
    %88 = arith.mulf %87, %84 : vector<8x32xf32>
    %89 = arith.addf %86, %88 : vector<8x32xf32>
    %90 = vector.extract_strided_slice %82 {offsets = [0, 96], sizes = [8, 32], strides = [1, 1]} : vector<8x128xf32> to vector<8x32xf32>
    %91 = math.tanh %89 : vector<8x32xf32>
    %92 = arith.mulf %90, %91 : vector<8x32xf32>
    %c8 = arith.constant 8 : index
    %c0_25 = arith.constant 0 : index
    %93 = vector.load %arg10[%c8, %c0_25] : memref<72x32xf32, #tpu.memory_space<vmem>>, vector<8x32xf32>
    tpu.vector_store %arg10[%c8, %c0_25], %92 {strides = array<i32>} : memref<72x32xf32, #tpu.memory_space<vmem>>, vector<8x32xf32>,
    %94 = vector.extract_strided_slice %75 {offsets = [0, 0], sizes = [8, 128], strides = [1, 1]} : vector<8x256xf32> to vector<8x128xf32>
    %95 = vector.extract_strided_slice %7 {offsets = [8, 0], sizes = [8, 128], strides = [1, 1]} : vector<64x128xf32> to vector<8x128xf32>
    %96 = arith.addf %94, %95 : vector<8x128xf32>
    %97 = arith.negf %96 : vector<8x128xf32>
    %98 = math.exp %97 : vector<8x128xf32>
    %cst_26 = arith.constant 1.000000e+00 : f32
    %99 = vector.broadcast %cst_26 : f32 to vector<8x128xf32>
    %100 = arith.addf %99, %98 : vector<8x128xf32>
    %101 = arith.divf %99, %100 : vector<8x128xf32>
    %102 = vector.extract_strided_slice %96 {offsets = [0, 64], sizes = [8, 32], strides = [1, 1]} : vector<8x128xf32> to vector<8x32xf32>
    %103 = math.tanh %102 : vector<8x32xf32>
    %104 = vector.extract_strided_slice %101 {offsets = [0, 32], sizes = [8, 32], strides = [1, 1]} : vector<8x128xf32> to vector<8x32xf32>
    %105 = arith.mulf %104, %70 : vector<8x32xf32>
    %106 = vector.extract_strided_slice %101 {offsets = [0, 0], sizes = [8, 32], strides = [1, 1]} : vector<8x128xf32> to vector<8x32xf32>
    %107 = arith.mulf %106, %103 : vector<8x32xf32>
    %108 = arith.addf %105, %107 : vector<8x32xf32>
    %109 = vector.extract_strided_slice %101 {offsets = [0, 96], sizes = [8, 32], strides = [1, 1]} : vector<8x128xf32> to vector<8x32xf32>
    %110 = math.tanh %108 : vector<8x32xf32>
    %111 = arith.mulf %109, %110 : vector<8x32xf32>
    %112 = tpu.concatenate %111, %92 in 1 : vector<8x32xf32>, vector<8x32xf32> -> vector<8x64xf32>
    %cst_27 = arith.constant dense<0.000000e+00> : vector<8x256xf32>
    %113 = tpu.matmul %112, %14, %cst_27 {dimension_numbers = #tpu.dot_dimension_numbers<[1], [0], [0], [1], [0, 0, 1, 1], [], []>} : vector<8x64xf32>, vector<64x256xf32>, vector<8x256xf32> -> vector<8x256xf32>
    %114 = vector.extract_strided_slice %113 {offsets = [0, 128], sizes = [8, 128], strides = [1, 1]} : vector<8x256xf32> to vector<8x128xf32>
    %115 = arith.addf %114, %17 : vector<8x128xf32>
    %116 = arith.negf %115 : vector<8x128xf32>
    %117 = math.exp %116 : vector<8x128xf32>
    %cst_28 = arith.constant 1.000000e+00 : f32
    %118 = vector.broadcast %cst_28 : f32 to vector<8x128xf32>
    %119 = arith.addf %118, %117 : vector<8x128xf32>
    %120 = arith.divf %118, %119 : vector<8x128xf32>
    %121 = vector.extract_strided_slice %115 {offsets = [0, 64], sizes = [8, 32], strides = [1, 1]} : vector<8x128xf32> to vector<8x32xf32>
    %122 = math.tanh %121 : vector<8x32xf32>
    %123 = vector.extract_strided_slice %120 {offsets = [0, 32], sizes = [8, 32], strides = [1, 1]} : vector<8x128xf32> to vector<8x32xf32>
    %124 = arith.mulf %123, %89 : vector<8x32xf32>
    %125 = vector.extract_strided_slice %120 {offsets = [0, 0], sizes = [8, 32], strides = [1, 1]} : vector<8x128xf32> to vector<8x32xf32>
    %126 = arith.mulf %125, %122 : vector<8x32xf32>
    %127 = arith.addf %124, %126 : vector<8x32xf32>
    %128 = vector.extract_strided_slice %120 {offsets = [0, 96], sizes = [8, 32], strides = [1, 1]} : vector<8x128xf32> to vector<8x32xf32>
    %129 = math.tanh %127 : vector<8x32xf32>
    %130 = arith.mulf %128, %129 : vector<8x32xf32>
    %c16 = arith.constant 16 : index
    %c0_29 = arith.constant 0 : index
    %131 = vector.load %arg10[%c16, %c0_29] : memref<72x32xf32, #tpu.memory_space<vmem>>, vector<8x32xf32>
    tpu.vector_store %arg10[%c16, %c0_29], %130 {strides = array<i32>} : memref<72x32xf32, #tpu.memory_space<vmem>>, vector<8x32xf32>,
    %132 = vector.extract_strided_slice %113 {offsets = [0, 0], sizes = [8, 128], strides = [1, 1]} : vector<8x256xf32> to vector<8x128xf32>
    %133 = vector.extract_strided_slice %7 {offsets = [16, 0], sizes = [8, 128], strides = [1, 1]} : vector<64x128xf32> to vector<8x128xf32>
    %134 = arith.addf %132, %133 : vector<8x128xf32>
    %135 = arith.negf %134 : vector<8x128xf32>
    %136 = math.exp %135 : vector<8x128xf32>
    %cst_30 = arith.constant 1.000000e+00 : f32
    %137 = vector.broadcast %cst_30 : f32 to vector<8x128xf32>
    %138 = arith.addf %137, %136 : vector<8x128xf32>
    %139 = arith.divf %137, %138 : vector<8x128xf32>
    %140 = vector.extract_strided_slice %134 {offsets = [0, 64], sizes = [8, 32], strides = [1, 1]} : vector<8x128xf32> to vector<8x32xf32>
    %141 = math.tanh %140 : vector<8x32xf32>
    %142 = vector.extract_strided_slice %139 {offsets = [0, 32], sizes = [8, 32], strides = [1, 1]} : vector<8x128xf32> to vector<8x32xf32>
    %143 = arith.mulf %142, %108 : vector<8x32xf32>
    %144 = vector.extract_strided_slice %139 {offsets = [0, 0], sizes = [8, 32], strides = [1, 1]} : vector<8x128xf32> to vector<8x32xf32>
    %145 = arith.mulf %144, %141 : vector<8x32xf32>
    %146 = arith.addf %143, %145 : vector<8x32xf32>
    %147 = vector.extract_strided_slice %139 {offsets = [0, 96], sizes = [8, 32], strides = [1, 1]} : vector<8x128xf32> to vector<8x32xf32>
    %148 = math.tanh %146 : vector<8x32xf32>
    %149 = arith.mulf %147, %148 : vector<8x32xf32>
    %150 = tpu.concatenate %149, %130 in 1 : vector<8x32xf32>, vector<8x32xf32> -> vector<8x64xf32>
    %cst_31 = arith.constant dense<0.000000e+00> : vector<8x256xf32>
    %151 = tpu.matmul %150, %14, %cst_31 {dimension_numbers = #tpu.dot_dimension_numbers<[1], [0], [0], [1], [0, 0, 1, 1], [], []>} : vector<8x64xf32>, vector<64x256xf32>, vector<8x256xf32> -> vector<8x256xf32>
    %152 = vector.extract_strided_slice %151 {offsets = [0, 128], sizes = [8, 128], strides = [1, 1]} : vector<8x256xf32> to vector<8x128xf32>
    %153 = arith.addf %152, %17 : vector<8x128xf32>
    %154 = arith.negf %153 : vector<8x128xf32>
    %155 = math.exp %154 : vector<8x128xf32>
    %cst_32 = arith.constant 1.000000e+00 : f32
    %156 = vector.broadcast %cst_32 : f32 to vector<8x128xf32>
    %157 = arith.addf %156, %155 : vector<8x128xf32>
    %158 = arith.divf %156, %157 : vector<8x128xf32>
    %159 = vector.extract_strided_slice %153 {offsets = [0, 64], sizes = [8, 32], strides = [1, 1]} : vector<8x128xf32> to vector<8x32xf32>
    %160 = math.tanh %159 : vector<8x32xf32>
    %161 = vector.extract_strided_slice %158 {offsets = [0, 32], sizes = [8, 32], strides = [1, 1]} : vector<8x128xf32> to vector<8x32xf32>
    %162 = arith.mulf %161, %127 : vector<8x32xf32>
    %163 = vector.extract_strided_slice %158 {offsets = [0, 0], sizes = [8, 32], strides = [1, 1]} : vector<8x128xf32> to vector<8x32xf32>
    %164 = arith.mulf %163, %160 : vector<8x32xf32>
    %165 = arith.addf %162, %164 : vector<8x32xf32>
    %166 = vector.extract_strided_slice %158 {offsets = [0, 96], sizes = [8, 32], strides = [1, 1]} : vector<8x128xf32> to vector<8x32xf32>
    %167 = math.tanh %165 : vector<8x32xf32>
    %168 = arith.mulf %166, %167 : vector<8x32xf32>
    %c24 = arith.constant 24 : index
    %c0_33 = arith.constant 0 : index
    %169 = vector.load %arg10[%c24, %c0_33] : memref<72x32xf32, #tpu.memory_space<vmem>>, vector<8x32xf32>
    tpu.vector_store %arg10[%c24, %c0_33], %168 {strides = array<i32>} : memref<72x32xf32, #tpu.memory_space<vmem>>, vector<8x32xf32>,
    %170 = vector.extract_strided_slice %151 {offsets = [0, 0], sizes = [8, 128], strides = [1, 1]} : vector<8x256xf32> to vector<8x128xf32>
    %171 = vector.extract_strided_slice %7 {offsets = [24, 0], sizes = [8, 128], strides = [1, 1]} : vector<64x128xf32> to vector<8x128xf32>
    %172 = arith.addf %170, %171 : vector<8x128xf32>
    %173 = arith.negf %172 : vector<8x128xf32>
    %174 = math.exp %173 : vector<8x128xf32>
    %cst_34 = arith.constant 1.000000e+00 : f32
    %175 = vector.broadcast %cst_34 : f32 to vector<8x128xf32>
    %176 = arith.addf %175, %174 : vector<8x128xf32>
    %177 = arith.divf %175, %176 : vector<8x128xf32>
    %178 = vector.extract_strided_slice %172 {offsets = [0, 64], sizes = [8, 32], strides = [1, 1]} : vector<8x128xf32> to vector<8x32xf32>
    %179 = math.tanh %178 : vector<8x32xf32>
    %180 = vector.extract_strided_slice %177 {offsets = [0, 32], sizes = [8, 32], strides = [1, 1]} : vector<8x128xf32> to vector<8x32xf32>
    %181 = arith.mulf %180, %146 : vector<8x32xf32>
    %182 = vector.extract_strided_slice %177 {offsets = [0, 0], sizes = [8, 32], strides = [1, 1]} : vector<8x128xf32> to vector<8x32xf32>
    %183 = arith.mulf %182, %179 : vector<8x32xf32>
    %184 = arith.addf %181, %183 : vector<8x32xf32>
    %185 = vector.extract_strided_slice %177 {offsets = [0, 96], sizes = [8, 32], strides = [1, 1]} : vector<8x128xf32> to vector<8x32xf32>
    %186 = math.tanh %184 : vector<8x32xf32>
    %187 = arith.mulf %185, %186 : vector<8x32xf32>
    %188 = tpu.concatenate %187, %168 in 1 : vector<8x32xf32>, vector<8x32xf32> -> vector<8x64xf32>
    %cst_35 = arith.constant dense<0.000000e+00> : vector<8x256xf32>
    %189 = tpu.matmul %188, %14, %cst_35 {dimension_numbers = #tpu.dot_dimension_numbers<[1], [0], [0], [1], [0, 0, 1, 1], [], []>} : vector<8x64xf32>, vector<64x256xf32>, vector<8x256xf32> -> vector<8x256xf32>
    %190 = vector.extract_strided_slice %189 {offsets = [0, 128], sizes = [8, 128], strides = [1, 1]} : vector<8x256xf32> to vector<8x128xf32>
    %191 = arith.addf %190, %17 : vector<8x128xf32>
    %192 = arith.negf %191 : vector<8x128xf32>
    %193 = math.exp %192 : vector<8x128xf32>
    %cst_36 = arith.constant 1.000000e+00 : f32
    %194 = vector.broadcast %cst_36 : f32 to vector<8x128xf32>
    %195 = arith.addf %194, %193 : vector<8x128xf32>
    %196 = arith.divf %194, %195 : vector<8x128xf32>
    %197 = vector.extract_strided_slice %191 {offsets = [0, 64], sizes = [8, 32], strides = [1, 1]} : vector<8x128xf32> to vector<8x32xf32>
    %198 = math.tanh %197 : vector<8x32xf32>
    %199 = vector.extract_strided_slice %196 {offsets = [0, 32], sizes = [8, 32], strides = [1, 1]} : vector<8x128xf32> to vector<8x32xf32>
    %200 = arith.mulf %199, %165 : vector<8x32xf32>
    %201 = vector.extract_strided_slice %196 {offsets = [0, 0], sizes = [8, 32], strides = [1, 1]} : vector<8x128xf32> to vector<8x32xf32>
    %202 = arith.mulf %201, %198 : vector<8x32xf32>
    %203 = arith.addf %200, %202 : vector<8x32xf32>
    %204 = vector.extract_strided_slice %196 {offsets = [0, 96], sizes = [8, 32], strides = [1, 1]} : vector<8x128xf32> to vector<8x32xf32>
    %205 = math.tanh %203 : vector<8x32xf32>
    %206 = arith.mulf %204, %205 : vector<8x32xf32>
    %c32 = arith.constant 32 : index
    %c0_37 = arith.constant 0 : index
    %207 = vector.load %arg10[%c32, %c0_37] : memref<72x32xf32, #tpu.memory_space<vmem>>, vector<8x32xf32>
    tpu.vector_store %arg10[%c32, %c0_37], %206 {strides = array<i32>} : memref<72x32xf32, #tpu.memory_space<vmem>>, vector<8x32xf32>,
    %208 = vector.extract_strided_slice %189 {offsets = [0, 0], sizes = [8, 128], strides = [1, 1]} : vector<8x256xf32> to vector<8x128xf32>
    %209 = vector.extract_strided_slice %7 {offsets = [32, 0], sizes = [8, 128], strides = [1, 1]} : vector<64x128xf32> to vector<8x128xf32>
    %210 = arith.addf %208, %209 : vector<8x128xf32>
    %211 = arith.negf %210 : vector<8x128xf32>
    %212 = math.exp %211 : vector<8x128xf32>
    %cst_38 = arith.constant 1.000000e+00 : f32
    %213 = vector.broadcast %cst_38 : f32 to vector<8x128xf32>
    %214 = arith.addf %213, %212 : vector<8x128xf32>
    %215 = arith.divf %213, %214 : vector<8x128xf32>
    %216 = vector.extract_strided_slice %210 {offsets = [0, 64], sizes = [8, 32], strides = [1, 1]} : vector<8x128xf32> to vector<8x32xf32>
    %217 = math.tanh %216 : vector<8x32xf32>
    %218 = vector.extract_strided_slice %215 {offsets = [0, 32], sizes = [8, 32], strides = [1, 1]} : vector<8x128xf32> to vector<8x32xf32>
    %219 = arith.mulf %218, %184 : vector<8x32xf32>
    %220 = vector.extract_strided_slice %215 {offsets = [0, 0], sizes = [8, 32], strides = [1, 1]} : vector<8x128xf32> to vector<8x32xf32>
    %221 = arith.mulf %220, %217 : vector<8x32xf32>
    %222 = arith.addf %219, %221 : vector<8x32xf32>
    %223 = vector.extract_strided_slice %215 {offsets = [0, 96], sizes = [8, 32], strides = [1, 1]} : vector<8x128xf32> to vector<8x32xf32>
    %224 = math.tanh %222 : vector<8x32xf32>
    %225 = arith.mulf %223, %224 : vector<8x32xf32>
    %226 = tpu.concatenate %225, %206 in 1 : vector<8x32xf32>, vector<8x32xf32> -> vector<8x64xf32>
    %cst_39 = arith.constant dense<0.000000e+00> : vector<8x256xf32>
    %227 = tpu.matmul %226, %14, %cst_39 {dimension_numbers = #tpu.dot_dimension_numbers<[1], [0], [0], [1], [0, 0, 1, 1], [], []>} : vector<8x64xf32>, vector<64x256xf32>, vector<8x256xf32> -> vector<8x256xf32>
    %228 = vector.extract_strided_slice %227 {offsets = [0, 128], sizes = [8, 128], strides = [1, 1]} : vector<8x256xf32> to vector<8x128xf32>
    %229 = arith.addf %228, %17 : vector<8x128xf32>
    %230 = arith.negf %229 : vector<8x128xf32>
    %231 = math.exp %230 : vector<8x128xf32>
    %cst_40 = arith.constant 1.000000e+00 : f32
    %232 = vector.broadcast %cst_40 : f32 to vector<8x128xf32>
    %233 = arith.addf %232, %231 : vector<8x128xf32>
    %234 = arith.divf %232, %233 : vector<8x128xf32>
    %235 = vector.extract_strided_slice %229 {offsets = [0, 64], sizes = [8, 32], strides = [1, 1]} : vector<8x128xf32> to vector<8x32xf32>
    %236 = math.tanh %235 : vector<8x32xf32>
    %237 = vector.extract_strided_slice %234 {offsets = [0, 32], sizes = [8, 32], strides = [1, 1]} : vector<8x128xf32> to vector<8x32xf32>
    %238 = arith.mulf %237, %203 : vector<8x32xf32>
    %239 = vector.extract_strided_slice %234 {offsets = [0, 0], sizes = [8, 32], strides = [1, 1]} : vector<8x128xf32> to vector<8x32xf32>
    %240 = arith.mulf %239, %236 : vector<8x32xf32>
    %241 = arith.addf %238, %240 : vector<8x32xf32>
    %242 = vector.extract_strided_slice %234 {offsets = [0, 96], sizes = [8, 32], strides = [1, 1]} : vector<8x128xf32> to vector<8x32xf32>
    %243 = math.tanh %241 : vector<8x32xf32>
    %244 = arith.mulf %242, %243 : vector<8x32xf32>
    %c40 = arith.constant 40 : index
    %c0_41 = arith.constant 0 : index
    %245 = vector.load %arg10[%c40, %c0_41] : memref<72x32xf32, #tpu.memory_space<vmem>>, vector<8x32xf32>
    tpu.vector_store %arg10[%c40, %c0_41], %244 {strides = array<i32>} : memref<72x32xf32, #tpu.memory_space<vmem>>, vector<8x32xf32>,
    %246 = vector.extract_strided_slice %227 {offsets = [0, 0], sizes = [8, 128], strides = [1, 1]} : vector<8x256xf32> to vector<8x128xf32>
    %247 = vector.extract_strided_slice %7 {offsets = [40, 0], sizes = [8, 128], strides = [1, 1]} : vector<64x128xf32> to vector<8x128xf32>
    %248 = arith.addf %246, %247 : vector<8x128xf32>
    %249 = arith.negf %248 : vector<8x128xf32>
    %250 = math.exp %249 : vector<8x128xf32>
    %cst_42 = arith.constant 1.000000e+00 : f32
    %251 = vector.broadcast %cst_42 : f32 to vector<8x128xf32>
    %252 = arith.addf %251, %250 : vector<8x128xf32>
    %253 = arith.divf %251, %252 : vector<8x128xf32>
    %254 = vector.extract_strided_slice %248 {offsets = [0, 64], sizes = [8, 32], strides = [1, 1]} : vector<8x128xf32> to vector<8x32xf32>
    %255 = math.tanh %254 : vector<8x32xf32>
    %256 = vector.extract_strided_slice %253 {offsets = [0, 32], sizes = [8, 32], strides = [1, 1]} : vector<8x128xf32> to vector<8x32xf32>
    %257 = arith.mulf %256, %222 : vector<8x32xf32>
    %258 = vector.extract_strided_slice %253 {offsets = [0, 0], sizes = [8, 32], strides = [1, 1]} : vector<8x128xf32> to vector<8x32xf32>
    %259 = arith.mulf %258, %255 : vector<8x32xf32>
    %260 = arith.addf %257, %259 : vector<8x32xf32>
    %261 = vector.extract_strided_slice %253 {offsets = [0, 96], sizes = [8, 32], strides = [1, 1]} : vector<8x128xf32> to vector<8x32xf32>
    %262 = math.tanh %260 : vector<8x32xf32>
    %263 = arith.mulf %261, %262 : vector<8x32xf32>
    %264 = tpu.concatenate %263, %244 in 1 : vector<8x32xf32>, vector<8x32xf32> -> vector<8x64xf32>
    %cst_43 = arith.constant dense<0.000000e+00> : vector<8x256xf32>
    %265 = tpu.matmul %264, %14, %cst_43 {dimension_numbers = #tpu.dot_dimension_numbers<[1], [0], [0], [1], [0, 0, 1, 1], [], []>} : vector<8x64xf32>, vector<64x256xf32>, vector<8x256xf32> -> vector<8x256xf32>
    %266 = vector.extract_strided_slice %265 {offsets = [0, 128], sizes = [8, 128], strides = [1, 1]} : vector<8x256xf32> to vector<8x128xf32>
    %267 = arith.addf %266, %17 : vector<8x128xf32>
    %268 = arith.negf %267 : vector<8x128xf32>
    %269 = math.exp %268 : vector<8x128xf32>
    %cst_44 = arith.constant 1.000000e+00 : f32
    %270 = vector.broadcast %cst_44 : f32 to vector<8x128xf32>
    %271 = arith.addf %270, %269 : vector<8x128xf32>
    %272 = arith.divf %270, %271 : vector<8x128xf32>
    %273 = vector.extract_strided_slice %267 {offsets = [0, 64], sizes = [8, 32], strides = [1, 1]} : vector<8x128xf32> to vector<8x32xf32>
    %274 = math.tanh %273 : vector<8x32xf32>
    %275 = vector.extract_strided_slice %272 {offsets = [0, 32], sizes = [8, 32], strides = [1, 1]} : vector<8x128xf32> to vector<8x32xf32>
    %276 = arith.mulf %275, %241 : vector<8x32xf32>
    %277 = vector.extract_strided_slice %272 {offsets = [0, 0], sizes = [8, 32], strides = [1, 1]} : vector<8x128xf32> to vector<8x32xf32>
    %278 = arith.mulf %277, %274 : vector<8x32xf32>
    %279 = arith.addf %276, %278 : vector<8x32xf32>
    %280 = vector.extract_strided_slice %272 {offsets = [0, 96], sizes = [8, 32], strides = [1, 1]} : vector<8x128xf32> to vector<8x32xf32>
    %281 = math.tanh %279 : vector<8x32xf32>
    %282 = arith.mulf %280, %281 : vector<8x32xf32>
    %c48 = arith.constant 48 : index
    %c0_45 = arith.constant 0 : index
    %283 = vector.load %arg10[%c48, %c0_45] : memref<72x32xf32, #tpu.memory_space<vmem>>, vector<8x32xf32>
    tpu.vector_store %arg10[%c48, %c0_45], %282 {strides = array<i32>} : memref<72x32xf32, #tpu.memory_space<vmem>>, vector<8x32xf32>,
    %284 = vector.extract_strided_slice %265 {offsets = [0, 0], sizes = [8, 128], strides = [1, 1]} : vector<8x256xf32> to vector<8x128xf32>
    %285 = vector.extract_strided_slice %7 {offsets = [48, 0], sizes = [8, 128], strides = [1, 1]} : vector<64x128xf32> to vector<8x128xf32>
    %286 = arith.addf %284, %285 : vector<8x128xf32>
    %287 = arith.negf %286 : vector<8x128xf32>
    %288 = math.exp %287 : vector<8x128xf32>
    %cst_46 = arith.constant 1.000000e+00 : f32
    %289 = vector.broadcast %cst_46 : f32 to vector<8x128xf32>
    %290 = arith.addf %289, %288 : vector<8x128xf32>
    %291 = arith.divf %289, %290 : vector<8x128xf32>
    %292 = vector.extract_strided_slice %286 {offsets = [0, 64], sizes = [8, 32], strides = [1, 1]} : vector<8x128xf32> to vector<8x32xf32>
    %293 = math.tanh %292 : vector<8x32xf32>
    %294 = vector.extract_strided_slice %291 {offsets = [0, 32], sizes = [8, 32], strides = [1, 1]} : vector<8x128xf32> to vector<8x32xf32>
    %295 = arith.mulf %294, %260 : vector<8x32xf32>
    %296 = vector.extract_strided_slice %291 {offsets = [0, 0], sizes = [8, 32], strides = [1, 1]} : vector<8x128xf32> to vector<8x32xf32>
    %297 = arith.mulf %296, %293 : vector<8x32xf32>
    %298 = arith.addf %295, %297 : vector<8x32xf32>
    %299 = vector.extract_strided_slice %291 {offsets = [0, 96], sizes = [8, 32], strides = [1, 1]} : vector<8x128xf32> to vector<8x32xf32>
    %300 = math.tanh %298 : vector<8x32xf32>
    %301 = arith.mulf %299, %300 : vector<8x32xf32>
    %302 = tpu.concatenate %301, %282 in 1 : vector<8x32xf32>, vector<8x32xf32> -> vector<8x64xf32>
    %cst_47 = arith.constant dense<0.000000e+00> : vector<8x256xf32>
    %303 = tpu.matmul %302, %14, %cst_47 {dimension_numbers = #tpu.dot_dimension_numbers<[1], [0], [0], [1], [0, 0, 1, 1], [], []>} : vector<8x64xf32>, vector<64x256xf32>, vector<8x256xf32> -> vector<8x256xf32>
    %304 = vector.extract_strided_slice %303 {offsets = [0, 128], sizes = [8, 128], strides = [1, 1]} : vector<8x256xf32> to vector<8x128xf32>
    %305 = arith.addf %304, %17 : vector<8x128xf32>
    %306 = arith.negf %305 : vector<8x128xf32>
    %307 = math.exp %306 : vector<8x128xf32>
    %cst_48 = arith.constant 1.000000e+00 : f32
    %308 = vector.broadcast %cst_48 : f32 to vector<8x128xf32>
    %309 = arith.addf %308, %307 : vector<8x128xf32>
    %310 = arith.divf %308, %309 : vector<8x128xf32>
    %311 = vector.extract_strided_slice %305 {offsets = [0, 64], sizes = [8, 32], strides = [1, 1]} : vector<8x128xf32> to vector<8x32xf32>
    %312 = math.tanh %311 : vector<8x32xf32>
    %313 = vector.extract_strided_slice %310 {offsets = [0, 32], sizes = [8, 32], strides = [1, 1]} : vector<8x128xf32> to vector<8x32xf32>
    %314 = arith.mulf %313, %279 : vector<8x32xf32>
    %315 = vector.extract_strided_slice %310 {offsets = [0, 0], sizes = [8, 32], strides = [1, 1]} : vector<8x128xf32> to vector<8x32xf32>
    %316 = arith.mulf %315, %312 : vector<8x32xf32>
    %317 = arith.addf %314, %316 : vector<8x32xf32>
    %318 = vector.extract_strided_slice %310 {offsets = [0, 96], sizes = [8, 32], strides = [1, 1]} : vector<8x128xf32> to vector<8x32xf32>
    %319 = math.tanh %317 : vector<8x32xf32>
    %320 = arith.mulf %318, %319 : vector<8x32xf32>
    %c56 = arith.constant 56 : index
    %c0_49 = arith.constant 0 : index
    %321 = vector.load %arg10[%c56, %c0_49] : memref<72x32xf32, #tpu.memory_space<vmem>>, vector<8x32xf32>
    tpu.vector_store %arg10[%c56, %c0_49], %320 {strides = array<i32>} : memref<72x32xf32, #tpu.memory_space<vmem>>, vector<8x32xf32>,
    %322 = vector.extract_strided_slice %303 {offsets = [0, 0], sizes = [8, 128], strides = [1, 1]} : vector<8x256xf32> to vector<8x128xf32>
    %323 = vector.extract_strided_slice %7 {offsets = [56, 0], sizes = [8, 128], strides = [1, 1]} : vector<64x128xf32> to vector<8x128xf32>
    %324 = arith.addf %322, %323 : vector<8x128xf32>
    %325 = arith.negf %324 : vector<8x128xf32>
    %326 = math.exp %325 : vector<8x128xf32>
    %cst_50 = arith.constant 1.000000e+00 : f32
    %327 = vector.broadcast %cst_50 : f32 to vector<8x128xf32>
    %328 = arith.addf %327, %326 : vector<8x128xf32>
    %329 = arith.divf %327, %328 : vector<8x128xf32>
    %330 = vector.extract_strided_slice %324 {offsets = [0, 64], sizes = [8, 32], strides = [1, 1]} : vector<8x128xf32> to vector<8x32xf32>
    %331 = math.tanh %330 : vector<8x32xf32>
    %332 = vector.extract_strided_slice %329 {offsets = [0, 32], sizes = [8, 32], strides = [1, 1]} : vector<8x128xf32> to vector<8x32xf32>
    %333 = arith.mulf %332, %298 : vector<8x32xf32>
    %334 = vector.extract_strided_slice %329 {offsets = [0, 0], sizes = [8, 32], strides = [1, 1]} : vector<8x128xf32> to vector<8x32xf32>
    %335 = arith.mulf %334, %331 : vector<8x32xf32>
    %336 = arith.addf %333, %335 : vector<8x32xf32>
    %337 = vector.extract_strided_slice %329 {offsets = [0, 96], sizes = [8, 32], strides = [1, 1]} : vector<8x128xf32> to vector<8x32xf32>
    %338 = math.tanh %336 : vector<8x32xf32>
    %339 = arith.mulf %337, %338 : vector<8x32xf32>
    %340 = tpu.concatenate %339, %320 in 1 : vector<8x32xf32>, vector<8x32xf32> -> vector<8x64xf32>
    %cst_51 = arith.constant dense<0.000000e+00> : vector<8x256xf32>
    %341 = tpu.matmul %340, %14, %cst_51 {dimension_numbers = #tpu.dot_dimension_numbers<[1], [0], [0], [1], [0, 0, 1, 1], [], []>} : vector<8x64xf32>, vector<64x256xf32>, vector<8x256xf32> -> vector<8x256xf32>
    %342 = vector.extract_strided_slice %341 {offsets = [0, 128], sizes = [8, 128], strides = [1, 1]} : vector<8x256xf32> to vector<8x128xf32>
    %343 = arith.addf %342, %17 : vector<8x128xf32>
    %344 = arith.negf %343 : vector<8x128xf32>
    %345 = math.exp %344 : vector<8x128xf32>
    %cst_52 = arith.constant 1.000000e+00 : f32
    %346 = vector.broadcast %cst_52 : f32 to vector<8x128xf32>
    %347 = arith.addf %346, %345 : vector<8x128xf32>
    %348 = arith.divf %346, %347 : vector<8x128xf32>
    %349 = vector.extract_strided_slice %343 {offsets = [0, 64], sizes = [8, 32], strides = [1, 1]} : vector<8x128xf32> to vector<8x32xf32>
    %350 = math.tanh %349 : vector<8x32xf32>
    %351 = vector.extract_strided_slice %348 {offsets = [0, 32], sizes = [8, 32], strides = [1, 1]} : vector<8x128xf32> to vector<8x32xf32>
    %352 = arith.mulf %351, %317 : vector<8x32xf32>
    %353 = vector.extract_strided_slice %348 {offsets = [0, 0], sizes = [8, 32], strides = [1, 1]} : vector<8x128xf32> to vector<8x32xf32>
    %354 = arith.mulf %353, %350 : vector<8x32xf32>
    %355 = arith.addf %352, %354 : vector<8x32xf32>
    %356 = vector.extract_strided_slice %348 {offsets = [0, 96], sizes = [8, 32], strides = [1, 1]} : vector<8x128xf32> to vector<8x32xf32>
    %357 = math.tanh %355 : vector<8x32xf32>
    %358 = arith.mulf %356, %357 : vector<8x32xf32>
    %c64 = arith.constant 64 : index
    %c0_53 = arith.constant 0 : index
    %359 = vector.load %arg10[%c64, %c0_53] : memref<72x32xf32, #tpu.memory_space<vmem>>, vector<8x32xf32>
    tpu.vector_store %arg10[%c64, %c0_53], %358 {strides = array<i32>} : memref<72x32xf32, #tpu.memory_space<vmem>>, vector<8x32xf32>,
    %c0_54 = arith.constant 0 : index
    %c0_55 = arith.constant 0 : index
    %360 = vector.load %arg10[%c0_54, %c0_55] : memref<72x32xf32, #tpu.memory_space<vmem>>, vector<72x32xf32>
    %c0_56 = arith.constant 0 : index
    %c0_57 = arith.constant 0 : index
    %361 = vector.load %arg7[%c0_56, %c0_57] : memref<32x128xf32, #tpu.memory_space<vmem>>, vector<32x128xf32>
    %cst_58 = arith.constant dense<0.000000e+00> : vector<72x128xf32>
    %362 = tpu.matmul %360, %361, %cst_58 {dimension_numbers = #tpu.dot_dimension_numbers<[1], [0], [0], [1], [0, 0, 1, 1], [], []>} : vector<72x32xf32>, vector<32x128xf32>, vector<72x128xf32> -> vector<72x128xf32>
    %c0_59 = arith.constant 0 : index
    %c0_60 = arith.constant 0 : index
    %363 = vector.load %arg8[%c0_59, %c0_60] : memref<1x128xf32, #tpu.memory_space<vmem>>, vector<1x128xf32>
    %364 = vector.broadcast %363 : vector<1x128xf32> to vector<72x128xf32>
    %365 = arith.addf %362, %364 : vector<72x128xf32>
    %c0_61 = arith.constant 0 : index
    %c0_62 = arith.constant 0 : index
    %366 = vector.load %arg9[%c0_61, %c0_62] : memref<72x128xf32, #tpu.memory_space<vmem>>, vector<72x128xf32>
    tpu.vector_store %arg9[%c0_61, %c0_62], %365 {strides = array<i32>} : memref<72x128xf32, #tpu.memory_space<vmem>>, vector<72x128xf32>,
    return
  }
}

</mosaic_0001>

<llo_original>
// kernel: cnn_to_rnn_forward.3
$region0: #{cnn_to_rnn_forward.3}
  #allocation0 [shape = 'u32[]', space=smem, size = 0x4, offset = 0x4, fixed_abs, tag = 'smem constant byte address 0x4 - core index']
  #allocation1 [shape = 'u32[144,128]{1,0:T(1,128)}', space=vmem, size = 0x12000, scoped, tag = 'internal scratch']
  #allocation2 [shape = 'f32[72,32]{1,0:T(8,128)}', space=vmem, size = 0x9000, scoped, tag = 'scratch operand']
  %s0 = inlined_call_operand.vmem [shape: f32[8,32], index: 0, kind: input, shape index: {}]
  %s1 = inlined_call_operand.vmem [shape: s32[64,1], index: 1, kind: input, shape index: {}]
  %s2 = inlined_call_operand.vmem [shape: f32[32,128], index: 2, kind: input, shape index: {}]
  %s3 = inlined_call_operand.vmem [shape: f32[1,128], index: 3, kind: input, shape index: {}]
  %s4 = inlined_call_operand.vmem [shape: f32[128,128], index: 4, kind: input, shape index: {}]
  %s5 = inlined_call_operand.vmem [shape: f32[1,128], index: 5, kind: input, shape index: {}]
  %s6 = inlined_call_operand.vmem [shape: f32[64,256], index: 6, kind: input, shape index: {}]
  %s7 = inlined_call_operand.vmem [shape: f32[32,128], index: 7, kind: input, shape index: {}]
  %s8 = inlined_call_operand.vmem [shape: f32[1,128], index: 8, kind: input, shape index: {}]
  %s9 = inlined_call_operand.vmem [shape: f32[72,128], index: 9, kind: output, shape index: {}]
  %s10 = sld [smem:[#allocation0]]
  $region46: #{cnn_to_rnn_forward.3} parent=0
    _
  %s12 = ssub.s32 1, %s10
  %s13 = scalar_select 0, %s12, %s10
  // Predicated region
  $region2: #{cnn_to_rnn_forward.3} parent=0 // pred_check
    _
  $region3: #{cnn_to_rnn_forward.3} parent=0 // pred_check_branch
    %15 = sbr.rel (0) target = $region5
  $region4: #{cnn_to_rnn_forward.3} parent=0 // pred_region
    _
  $region5: #{cnn_to_rnn_forward.3} parent=0 // pred_fallthru
    _
  // Predicated region
  $region6: #{cnn_to_rnn_forward.3} parent=0 // pred_check
    _
  $region7: #{cnn_to_rnn_forward.3} parent=0 // pred_check_branch
    %17 = sbr.rel (0) target = $region9
  $region8: #{cnn_to_rnn_forward.3} parent=0 // pred_region
    _
  $region9: #{cnn_to_rnn_forward.3} parent=0 // pred_fallthru
    _
  // Predicated region
  $region10: #{cnn_to_rnn_forward.3} parent=0 // pred_check
    _
  $region11: #{cnn_to_rnn_forward.3} parent=0 // pred_check_branch
    %19 = sbr.rel (0) target = $region13
  $region12: #{cnn_to_rnn_forward.3} parent=0 // pred_region
    _
  $region13: #{cnn_to_rnn_forward.3} parent=0 // pred_fallthru
    _
  // Predicated region
  $region14: #{cnn_to_rnn_forward.3} parent=0 // pred_check
    _
  $region15: #{cnn_to_rnn_forward.3} parent=0 // pred_check_branch
    %21 = sbr.rel (0) target = $region17
  $region16: #{cnn_to_rnn_forward.3} parent=0 // pred_region
    _
  $region17: #{cnn_to_rnn_forward.3} parent=0 // pred_fallthru
    _
  // Predicated region
  $region18: #{cnn_to_rnn_forward.3} parent=0 // pred_check
    _
  $region19: #{cnn_to_rnn_forward.3} parent=0 // pred_check_branch
    %23 = sbr.rel (0) target = $region21
  $region20: #{cnn_to_rnn_forward.3} parent=0 // pred_region
    _
  $region21: #{cnn_to_rnn_forward.3} parent=0 // pred_fallthru
    _
  // Predicated region
  $region22: #{cnn_to_rnn_forward.3} parent=0 // pred_check
    _
  $region23: #{cnn_to_rnn_forward.3} parent=0 // pred_check_branch
    %25 = sbr.rel (0) target = $region25
  $region24: #{cnn_to_rnn_forward.3} parent=0 // pred_region
    _
  $region25: #{cnn_to_rnn_forward.3} parent=0 // pred_fallthru
    _
  // Predicated region
  $region26: #{cnn_to_rnn_forward.3} parent=0 // pred_check
    _
  $region27: #{cnn_to_rnn_forward.3} parent=0 // pred_check_branch
    %27 = sbr.rel (0) target = $region29
  $region28: #{cnn_to_rnn_forward.3} parent=0 // pred_region
    _
  $region29: #{cnn_to_rnn_forward.3} parent=0 // pred_fallthru
    _
  // Predicated region
  $region30: #{cnn_to_rnn_forward.3} parent=0 // pred_check
    _
  $region31: #{cnn_to_rnn_forward.3} parent=0 // pred_check_branch
    %29 = sbr.rel (0) target = $region33
  $region32: #{cnn_to_rnn_forward.3} parent=0 // pred_region
    _
  $region33: #{cnn_to_rnn_forward.3} parent=0 // pred_fallthru
    _
  // Predicated region
  $region34: #{cnn_to_rnn_forward.3} parent=0 // pred_check
    _
  $region35: #{cnn_to_rnn_forward.3} parent=0 // pred_check_branch
    %31 = sbr.rel (0) target = $region37
  $region36: #{cnn_to_rnn_forward.3} parent=0 // pred_region
    _
  $region37: #{cnn_to_rnn_forward.3} parent=0 // pred_fallthru
    _
  %v32 = vld [vmem:[%s1] sm:$0xff]
  %v33 = vld [vmem:[%s1 + $0x8] sm:$0xff]
  %v34 = vld [vmem:[%s1 + $0x10] sm:$0xff]
  %v35 = vld [vmem:[%s1 + $0x18] sm:$0xff]
  %v36 = vld [vmem:[%s1 + $0x20] sm:$0xff]
  %v37 = vld [vmem:[%s1 + $0x28] sm:$0xff]
  %v38 = vld [vmem:[%s1 + $0x30] sm:$0xff]
  %v39 = vld [vmem:[%s1 + $0x38] sm:$0xff]
  %v40 = vlaneseq
  %v41 = vand.u32 %v40, 127
  %42 = vset.pattern.permute.xlu0 0
  %43 = vperm.xlu0 %42, %v32
  %v44 = vpop.permute.xlu0 %43
  %45 = vset.pattern.permute.xlu0 0
  %46 = vperm.xlu0 %45, %v33
  %v47 = vpop.permute.xlu0 %46
  %48 = vset.pattern.permute.xlu0 0
  %49 = vperm.xlu0 %48, %v34
  %v50 = vpop.permute.xlu0 %49
  %51 = vset.pattern.permute.xlu0 0
  %52 = vperm.xlu0 %51, %v35
  %v53 = vpop.permute.xlu0 %52
  %54 = vset.pattern.permute.xlu0 0
  %55 = vperm.xlu0 %54, %v36
  %v56 = vpop.permute.xlu0 %55
  %57 = vset.pattern.permute.xlu0 0
  %58 = vperm.xlu0 %57, %v37
  %v59 = vpop.permute.xlu0 %58
  %60 = vset.pattern.permute.xlu0 0
  %61 = vperm.xlu0 %60, %v38
  %v62 = vpop.permute.xlu0 %61
  %63 = vset.pattern.permute.xlu0 0
  %64 = vperm.xlu0 %63, %v39
  %v65 = vpop.permute.xlu0 %64
  %vm66 = vcmp.eq.s32.totalorder %v44, %v41
  %vm67 = vcmp.eq.s32.totalorder %v47, %v41
  %vm68 = vcmp.eq.s32.totalorder %v50, %v41
  %vm69 = vcmp.eq.s32.totalorder %v53, %v41
  %vm70 = vcmp.eq.s32.totalorder %v56, %v41
  %vm71 = vcmp.eq.s32.totalorder %v59, %v41
  %vm72 = vcmp.eq.s32.totalorder %v62, %v41
  %vm73 = vcmp.eq.s32.totalorder %v65, %v41
  %v74 = vsel %vm66, 1, 0
  %v75 = vsel %vm67, 1, 0
  %v76 = vsel %vm68, 1, 0
  %v77 = vsel %vm69, 1, 0
  %v78 = vsel %vm70, 1, 0
  %v79 = vsel %vm71, 1, 0
  %v80 = vsel %vm72, 1, 0
  %v81 = vsel %vm73, 1, 0
  %v82 = vcvt.s32.f32 %v74
  %v83 = vcvt.s32.f32 %v75
  %v84 = vcvt.s32.f32 %v76
  %v85 = vcvt.s32.f32 %v77
  %v86 = vcvt.s32.f32 %v78
  %v87 = vcvt.s32.f32 %v79
  %v88 = vcvt.s32.f32 %v80
  %v89 = vcvt.s32.f32 %v81
  %v90 = vld [vmem:[%s4] sm:$0xff]
  %v91 = vld [vmem:[%s4 + $0x8] sm:$0xff]
  %v92 = vld [vmem:[%s4 + $0x10] sm:$0xff]
  %v93 = vld [vmem:[%s4 + $0x18] sm:$0xff]
  %v94 = vld [vmem:[%s4 + $0x20] sm:$0xff]
  %v95 = vld [vmem:[%s4 + $0x28] sm:$0xff]
  %v96 = vld [vmem:[%s4 + $0x30] sm:$0xff]
  %v97 = vld [vmem:[%s4 + $0x38] sm:$0xff]
  %v98 = vld [vmem:[%s4 + $0x40] sm:$0xff]
  %v99 = vld [vmem:[%s4 + $0x48] sm:$0xff]
  %v100 = vld [vmem:[%s4 + $0x50] sm:$0xff]
  %v101 = vld [vmem:[%s4 + $0x58] sm:$0xff]
  %v102 = vld [vmem:[%s4 + $0x60] sm:$0xff]
  %v103 = vld [vmem:[%s4 + $0x68] sm:$0xff]
  %v104 = vld [vmem:[%s4 + $0x70] sm:$0xff]
  %v105 = vld [vmem:[%s4 + $0x78] sm:$0xff]
  %106 = vmatprep.subr.mxu0 0.0
  %107 = vmatpush1.msra.mxu0 %v90
  %108 = vmatprep.subr.mxu0 0.0
  %109 = vmatpush1.msra.mxu0 %v91
  %110 = vmatprep.subr.mxu0 0.0
  %111 = vmatpush1.msra.mxu0 %v92
  %112 = vmatprep.subr.mxu0 0.0
  %113 = vmatpush1.msra.mxu0 %v93
  %114 = vmatprep.subr.mxu0 0.0
  %115 = vmatpush1.msra.mxu0 %v94
  %116 = vmatprep.subr.mxu0 0.0
  %117 = vmatpush1.msra.mxu0 %v95
  %118 = vmatprep.subr.mxu0 0.0
  %119 = vmatpush1.msra.mxu0 %v96
  %120 = vmatprep.subr.mxu0 0.0
  %121 = vmatpush1.msra.mxu0 %v97
  %122 = vmatprep.subr.mxu0 0.0
  %123 = vmatpush1.msra.mxu0 %v98
  %124 = vmatprep.subr.mxu0 0.0
  %125 = vmatpush1.msra.mxu0 %v99
  %126 = vmatprep.subr.mxu0 0.0
  %127 = vmatpush1.msra.mxu0 %v100
  %128 = vmatprep.subr.mxu0 0.0
  %129 = vmatpush1.msra.mxu0 %v101
  %130 = vmatprep.subr.mxu0 0.0
  %131 = vmatpush1.msra.mxu0 %v102
  %132 = vmatprep.subr.mxu0 0.0
  %133 = vmatpush1.msra.mxu0 %v103
  %134 = vmatprep.subr.mxu0 0.0
  %135 = vmatpush1.msra.mxu0 %v104
  %136 = vmatprep.subr.mxu0 0.0
  %137 = vmatpush1.msra.mxu0 %v105
  %138 = vmatprep.subr.mxu0 0.0
  %139 = vmatpush1.msra.mxu0 0.0
  %140 = vmatprep.subr.mxu0 0.0
  %141 = vmatpush1.msra.mxu0 0.0
  %142 = vmatprep.subr.mxu0 0.0
  %143 = vmatpush1.msra.mxu0 0.0
  %144 = vmatprep.subr.mxu0 0.0
  %145 = vmatpush1.msra.mxu0 0.0
  %146 = vmatprep.subr.mxu0 0.0
  %147 = vmatpush1.msra.mxu0 0.0
  %148 = vmatprep.subr.mxu0 0.0
  %149 = vmatpush1.msra.mxu0 0.0
  %150 = vmatprep.subr.mxu0 0.0
  %151 = vmatpush1.msra.mxu0 0.0
  %152 = vmatprep.subr.mxu0 0.0
  %153 = vmatpush1.msra.mxu0 0.0
  %154 = vmatprep.subr.mxu0 0.0
  %155 = vmatpush1.msra.mxu0 0.0
  %156 = vmatprep.subr.mxu0 0.0
  %157 = vmatpush1.msra.mxu0 0.0
  %158 = vmatprep.subr.mxu0 0.0
  %159 = vmatpush1.msra.mxu0 0.0
  %160 = vmatprep.subr.mxu0 0.0
  %161 = vmatpush1.msra.mxu0 0.0
  %162 = vmatprep.subr.mxu0 0.0
  %163 = vmatpush1.msra.mxu0 0.0
  %164 = vmatprep.subr.mxu0 0.0
  %165 = vmatpush1.msra.mxu0 0.0
  %166 = vmatprep.subr.mxu0 0.0
  %167 = vmatpush1.msra.mxu0 0.0
  %168 = vmatprep.subr.mxu0 0.0
  %169 = vmatpush1.msra.mxu0 0.0
  %170 = vmatprep.mubr.f32.mxu0 0.0
  %171 = vmatmul.mubr.f32.gmra.mrb[0].mxu0 %v82
  %v172 = vpop.f32.mrb[0].mxu0
  %v173 = vadd.f32 0.0, %v172
  %v174 = vpop.f32.mrb[0].mxu0
  %175 = vmatprep.mubr.f32.mxu0 0.0
  %176 = vmatmul.mubr.f32.gmra.mrb[0].mxu0 %v83
  %v177 = vpop.f32.mrb[0].mxu0
  %v178 = vadd.f32 0.0, %v177
  %v179 = vpop.f32.mrb[0].mxu0
  %180 = vmatprep.mubr.f32.mxu0 0.0
  %181 = vmatmul.mubr.f32.gmra.mrb[0].mxu0 %v84
  %v182 = vpop.f32.mrb[0].mxu0
  %v183 = vadd.f32 0.0, %v182
  %v184 = vpop.f32.mrb[0].mxu0
  %185 = vmatprep.mubr.f32.mxu0 0.0
  %186 = vmatmul.mubr.f32.gmra.mrb[0].mxu0 %v85
  %v187 = vpop.f32.mrb[0].mxu0
  %v188 = vadd.f32 0.0, %v187
  %v189 = vpop.f32.mrb[0].mxu0
  %190 = vmatprep.mubr.f32.mxu0 0.0
  %191 = vmatmul.mubr.f32.gmra.mrb[0].mxu0 %v86
  %v192 = vpop.f32.mrb[0].mxu0
  %v193 = vadd.f32 0.0, %v192
  %v194 = vpop.f32.mrb[0].mxu0
  %195 = vmatprep.mubr.f32.mxu0 0.0
  %196 = vmatmul.mubr.f32.gmra.mrb[0].mxu0 %v87
  %v197 = vpop.f32.mrb[0].mxu0
  %v198 = vadd.f32 0.0, %v197
  %v199 = vpop.f32.mrb[0].mxu0
  %200 = vmatprep.mubr.f32.mxu0 0.0
  %201 = vmatmul.mubr.f32.gmra.mrb[0].mxu0 %v88
  %v202 = vpop.f32.mrb[0].mxu0
  %v203 = vadd.f32 0.0, %v202
  %v204 = vpop.f32.mrb[0].mxu0
  %205 = vmatprep.mubr.f32.mxu0 0.0
  %206 = vmatmul.mubr.f32.gmra.mrb[0].mxu0 %v89
  %v207 = vpop.f32.mrb[0].mxu0
  %v208 = vadd.f32 0.0, %v207
  %v209 = vpop.f32.mrb[0].mxu0
  %210 = vdwg.mxu0
  %v211 = vld [vmem:[%s0] sm:$0xff]
  %v212 = vld [vmem:[%s2] sm:$0xff]
  %v213 = vld [vmem:[%s2 + $0x8] sm:$0xff]
  %v214 = vld [vmem:[%s2 + $0x10] sm:$0xff]
  %v215 = vld [vmem:[%s2 + $0x18] sm:$0xff]
  %v216 = vld [vmem:[%s3] sm:$0x1]
  %v218 = vlaneseq
  %v219 = vshrl.u32 %v218, 7
  %v220 = vsub.s32 0, %v219
  %v221 = vrot.slane %v216, %v220
  %vm223 = vcmask 261120
  %v225 = vsel %vm223, %v211, 0
  %227 = vmatprep.subr.mxu0 0.0
  %228 = vmatpush1.msra.mxu0 %v212
  %229 = vmatprep.subr.mxu0 0.0
  %230 = vmatpush1.msra.mxu0 %v213
  %231 = vmatprep.subr.mxu0 0.0
  %232 = vmatpush1.msra.mxu0 %v214
  %233 = vmatprep.subr.mxu0 0.0
  %234 = vmatpush1.msra.mxu0 %v215
  %235 = vmatprep.subr.mxu0 0.0
  %236 = vmatpush1.msra.mxu0 0.0
  %237 = vmatprep.subr.mxu0 0.0
  %238 = vmatpush1.msra.mxu0 0.0
  %239 = vmatprep.subr.mxu0 0.0
  %240 = vmatpush1.msra.mxu0 0.0
  %241 = vmatprep.subr.mxu0 0.0
  %242 = vmatpush1.msra.mxu0 0.0
  %243 = vmatprep.subr.mxu0 0.0
  %244 = vmatpush1.msra.mxu0 0.0
  %245 = vmatprep.subr.mxu0 0.0
  %246 = vmatpush1.msra.mxu0 0.0
  %247 = vmatprep.subr.mxu0 0.0
  %248 = vmatpush1.msra.mxu0 0.0
  %249 = vmatprep.subr.mxu0 0.0
  %250 = vmatpush1.msra.mxu0 0.0
  %251 = vmatprep.subr.mxu0 0.0
  %252 = vmatpush1.msra.mxu0 0.0
  %253 = vmatprep.subr.mxu0 0.0
  %254 = vmatpush1.msra.mxu0 0.0
  %255 = vmatprep.subr.mxu0 0.0
  %256 = vmatpush1.msra.mxu0 0.0
  %257 = vmatprep.subr.mxu0 0.0
  %258 = vmatpush1.msra.mxu0 0.0
  %259 = vmatprep.subr.mxu0 0.0
  %260 = vmatpush1.msra.mxu0 0.0
  %261 = vmatprep.subr.mxu0 0.0
  %262 = vmatpush1.msra.mxu0 0.0
  %263 = vmatprep.subr.mxu0 0.0
  %264 = vmatpush1.msra.mxu0 0.0
  %265 = vmatprep.subr.mxu0 0.0
  %266 = vmatpush1.msra.mxu0 0.0
  %267 = vmatprep.subr.mxu0 0.0
  %268 = vmatpush1.msra.mxu0 0.0
  %269 = vmatprep.subr.mxu0 0.0
  %270 = vmatpush1.msra.mxu0 0.0
  %271 = vmatprep.subr.mxu0 0.0
  %272 = vmatpush1.msra.mxu0 0.0
  %273 = vmatprep.subr.mxu0 0.0
  %274 = vmatpush1.msra.mxu0 0.0
  %275 = vmatprep.subr.mxu0 0.0
  %276 = vmatpush1.msra.mxu0 0.0
  %277 = vmatprep.subr.mxu0 0.0
  %278 = vmatpush1.msra.mxu0 0.0
  %279 = vmatprep.subr.mxu0 0.0
  %280 = vmatpush1.msra.mxu0 0.0
  %281 = vmatprep.subr.mxu0 0.0
  %282 = vmatpush1.msra.mxu0 0.0
  %283 = vmatprep.subr.mxu0 0.0
  %284 = vmatpush1.msra.mxu0 0.0
  %285 = vmatprep.subr.mxu0 0.0
  %286 = vmatpush1.msra.mxu0 0.0
  %287 = vmatprep.subr.mxu0 0.0
  %288 = vmatpush1.msra.mxu0 0.0
  %289 = vmatprep.subr.mxu0 0.0
  %290 = vmatpush1.msra.mxu0 0.0
  %291 = vmatprep.mubr.f32.mxu0 0.0
  %292 = vmatmul.mubr.f32.gmra.mrb[0].mxu0 %v225
  %v293 = vpop.f32.mrb[0].mxu0
  %v294 = vadd.f32 %v221, %v293
  %v295 = vpop.f32.mrb[0].mxu0
  %296 = vdwg.mxu0
  %v297 = vld [vmem:[%s6] sm:$0xff]
  %v298 = vld [vmem:[%s6 + $0x8] sm:$0xff]
  %v299 = vld [vmem:[%s6 + $0x10] sm:$0xff]
  %v300 = vld [vmem:[%s6 + $0x18] sm:$0xff]
  %v301 = vld [vmem:[%s6 + $0x20] sm:$0xff]
  %v302 = vld [vmem:[%s6 + $0x28] sm:$0xff]
  %v303 = vld [vmem:[%s6 + $0x30] sm:$0xff]
  %v304 = vld [vmem:[%s6 + $0x38] sm:$0xff]
  %v305 = vld [vmem:[%s6 + $0x40] sm:$0xff]
  %v306 = vld [vmem:[%s6 + $0x48] sm:$0xff]
  %v307 = vld [vmem:[%s6 + $0x50] sm:$0xff]
  %v308 = vld [vmem:[%s6 + $0x58] sm:$0xff]
  %v309 = vld [vmem:[%s6 + $0x60] sm:$0xff]
  %v310 = vld [vmem:[%s6 + $0x68] sm:$0xff]
  %v311 = vld [vmem:[%s6 + $0x70] sm:$0xff]
  %v312 = vld [vmem:[%s6 + $0x78] sm:$0xff]
  %v313 = vld [vmem:[%s5] sm:$0x1]
  %v315 = vlaneseq
  %v316 = vshrl.u32 %v315, 7
  %v317 = vsub.s32 0, %v316
  %v318 = vrot.slane %v313, %v317
  %v320 = vxor.u32 %v294, 2147483648
  %v321 = vmul.f32 %v320, 1.442695
  %v322 = vpow.pop %v321
  %v323 = vadd.f32 %v322, 1.0
  %v324 = vrcp.pop %v323
  %v325 = vmul.f32 1.0, %v324
  %v326 = vtanh.pop %v294
  %v327 = vmul.f32 %v325, 0.0
  %329 = vrot.lane.b32.xlu0 %v326, 64
  %v330 = vpop.permute.xlu0 %329
  %v332 = vmul.f32 %v325, %v330
  %334 = vrot.lane.b32.xlu0 %v332, 32
  %v335 = vpop.permute.xlu0 %334
  %v337 = vadd.f32 %v327, %v335
  %v338 = vtanh.pop %v337
  %340 = vrot.lane.b32.xlu0 %v338, 64
  %v341 = vpop.permute.xlu0 %340
  %v343 = vmul.f32 %v325, %v341
  %345 = vrot.lane.b32.xlu0 %v343, 32
  %v346 = vpop.permute.xlu0 %345
  %v348 = vsel %vm223, %v346, 0.0
  %vm349 = vcmask 523264
  %v351 = vsel %vm349, %v348, 0
  %353 = vmatprep.subr.mxu0 %v298
  %354 = vmatpush1.msra.mxu0 %v297
  %355 = vmatprep.subr.mxu0 %v300
  %356 = vmatpush1.msra.mxu0 %v299
  %357 = vmatprep.subr.mxu0 %v302
  %358 = vmatpush1.msra.mxu0 %v301
  %359 = vmatprep.subr.mxu0 %v304
  %360 = vmatpush1.msra.mxu0 %v303
  %361 = vmatprep.subr.mxu0 %v306
  %362 = vmatpush1.msra.mxu0 %v305
  %363 = vmatprep.subr.mxu0 %v308
  %364 = vmatpush1.msra.mxu0 %v307
  %365 = vmatprep.subr.mxu0 %v310
  %366 = vmatpush1.msra.mxu0 %v309
  %367 = vmatprep.subr.mxu0 %v312
  %368 = vmatpush1.msra.mxu0 %v311
  %369 = vmatprep.subr.mxu0 0.0
  %370 = vmatpush1.msra.mxu0 0.0
  %371 = vmatprep.subr.mxu0 0.0
  %372 = vmatpush1.msra.mxu0 0.0
  %373 = vmatprep.subr.mxu0 0.0
  %374 = vmatpush1.msra.mxu0 0.0
  %375 = vmatprep.subr.mxu0 0.0
  %376 = vmatpush1.msra.mxu0 0.0
  %377 = vmatprep.subr.mxu0 0.0
  %378 = vmatpush1.msra.mxu0 0.0
  %379 = vmatprep.subr.mxu0 0.0
  %380 = vmatpush1.msra.mxu0 0.0
  %381 = vmatprep.subr.mxu0 0.0
  %382 = vmatpush1.msra.mxu0 0.0
  %383 = vmatprep.subr.mxu0 0.0
  %384 = vmatpush1.msra.mxu0 0.0
  %385 = vmatprep.subr.mxu0 0.0
  %386 = vmatpush1.msra.mxu0 0.0
  %387 = vmatprep.subr.mxu0 0.0
  %388 = vmatpush1.msra.mxu0 0.0
  %389 = vmatprep.subr.mxu0 0.0
  %390 = vmatpush1.msra.mxu0 0.0
  %391 = vmatprep.subr.mxu0 0.0
  %392 = vmatpush1.msra.mxu0 0.0
  %393 = vmatprep.subr.mxu0 0.0
  %394 = vmatpush1.msra.mxu0 0.0
  %395 = vmatprep.subr.mxu0 0.0
  %396 = vmatpush1.msra.mxu0 0.0
  %397 = vmatprep.subr.mxu0 0.0
  %398 = vmatpush1.msra.mxu0 0.0
  %399 = vmatprep.subr.mxu0 0.0
  %400 = vmatpush1.msra.mxu0 0.0
  %401 = vmatprep.subr.mxu0 0.0
  %402 = vmatpush1.msra.mxu0 0.0
  %403 = vmatprep.subr.mxu0 0.0
  %404 = vmatpush1.msra.mxu0 0.0
  %405 = vmatprep.subr.mxu0 0.0
  %406 = vmatpush1.msra.mxu0 0.0
  %407 = vmatprep.subr.mxu0 0.0
  %408 = vmatpush1.msra.mxu0 0.0
  %409 = vmatprep.subr.mxu0 0.0
  %410 = vmatpush1.msra.mxu0 0.0
  %411 = vmatprep.subr.mxu0 0.0
  %412 = vmatpush1.msra.mxu0 0.0
  %413 = vmatprep.subr.mxu0 0.0
  %414 = vmatpush1.msra.mxu0 0.0
  %415 = vmatprep.subr.mxu0 0.0
  %416 = vmatpush1.msra.mxu0 0.0
  %417 = vmatprep.mubr.f32.mxu0 0.0
  %418 = vmatmul.mubr.f32.gmra.mrb[0].mxu0 %v351
  %v419 = vpop.f32.mrb[0].mxu0
  %v420 = vadd.f32 0.0, %v419
  %v421 = vpop.f32.mrb[0].mxu0
  %v422 = vadd.f32 0.0, %v421
  %423 = vdwg.mxu0
  %v424 = vadd.f32 %v422, %v318
  %v425 = vxor.u32 %v424, 2147483648
  %v426 = vmul.f32 %v425, 1.442695
  %v427 = vpow.pop %v426
  %v428 = vadd.f32 %v427, 1.0
  %v429 = vrcp.pop %v428
  %v430 = vmul.f32 1.0, %v429
  %v431 = vtanh.pop %v424
  %v432 = vmul.f32 %v430, 0.0
  %434 = vrot.lane.b32.xlu0 %v431, 64
  %v435 = vpop.permute.xlu0 %434
  %v437 = vmul.f32 %v430, %v435
  %439 = vrot.lane.b32.xlu0 %v437, 32
  %v440 = vpop.permute.xlu0 %439
  %v442 = vadd.f32 %v432, %v440
  %v443 = vtanh.pop %v442
  %445 = vrot.lane.b32.xlu0 %v443, 64
  %v446 = vpop.permute.xlu0 %445
  %v448 = vmul.f32 %v430, %v446
  %450 = vrot.lane.b32.xlu0 %v448, 32
  %v451 = vpop.permute.xlu0 %450
  %453 = vst.msk [vmem:[#allocation2] sm:$0xff] %vm223, %v451
  %v454 = vadd.f32 %v420, %v173
  %v455 = vxor.u32 %v454, 2147483648
  %v456 = vmul.f32 %v455, 1.442695
  %v457 = vpow.pop %v456
  %v458 = vadd.f32 %v457, 1.0
  %v459 = vrcp.pop %v458
  %v460 = vmul.f32 1.0, %v459
  %v461 = vtanh.pop %v454
  %v462 = vmul.f32 %v460, %v337
  %464 = vrot.lane.b32.xlu0 %v461, 64
  %v465 = vpop.permute.xlu0 %464
  %v467 = vmul.f32 %v460, %v465
  %469 = vrot.lane.b32.xlu0 %v467, 32
  %v470 = vpop.permute.xlu0 %469
  %v472 = vadd.f32 %v462, %v470
  %v473 = vtanh.pop %v472
  %475 = vrot.lane.b32.xlu0 %v473, 64
  %v476 = vpop.permute.xlu0 %475
  %v478 = vmul.f32 %v460, %v476
  %480 = vrot.lane.b32.xlu0 %v478, 32
  %v481 = vpop.permute.xlu0 %480
  %483 = vrot.lane.b32.xlu0 %v448, 64
  %v484 = vpop.permute.xlu0 %483
  %v486 = vsel %vm223, %v481, %v484
  %v488 = vsel %vm349, %v486, 0
  %490 = vmatprep.subr.mxu0 %v298
  %491 = vmatpush1.msra.mxu0 %v297
  %492 = vmatprep.subr.mxu0 %v300
  %493 = vmatpush1.msra.mxu0 %v299
  %494 = vmatprep.subr.mxu0 %v302
  %495 = vmatpush1.msra.mxu0 %v301
  %496 = vmatprep.subr.mxu0 %v304
  %497 = vmatpush1.msra.mxu0 %v303
  %498 = vmatprep.subr.mxu0 %v306
  %499 = vmatpush1.msra.mxu0 %v305
  %500 = vmatprep.subr.mxu0 %v308
  %501 = vmatpush1.msra.mxu0 %v307
  %502 = vmatprep.subr.mxu0 %v310
  %503 = vmatpush1.msra.mxu0 %v309
  %504 = vmatprep.subr.mxu0 %v312
  %505 = vmatpush1.msra.mxu0 %v311
  %506 = vmatprep.subr.mxu0 0.0
  %507 = vmatpush1.msra.mxu0 0.0
  %508 = vmatprep.subr.mxu0 0.0
  %509 = vmatpush1.msra.mxu0 0.0
  %510 = vmatprep.subr.mxu0 0.0
  %511 = vmatpush1.msra.mxu0 0.0
  %512 = vmatprep.subr.mxu0 0.0
  %513 = vmatpush1.msra.mxu0 0.0
  %514 = vmatprep.subr.mxu0 0.0
  %515 = vmatpush1.msra.mxu0 0.0
  %516 = vmatprep.subr.mxu0 0.0
  %517 = vmatpush1.msra.mxu0 0.0
  %518 = vmatprep.subr.mxu0 0.0
  %519 = vmatpush1.msra.mxu0 0.0
  %520 = vmatprep.subr.mxu0 0.0
  %521 = vmatpush1.msra.mxu0 0.0
  %522 = vmatprep.subr.mxu0 0.0
  %523 = vmatpush1.msra.mxu0 0.0
  %524 = vmatprep.subr.mxu0 0.0
  %525 = vmatpush1.msra.mxu0 0.0
  %526 = vmatprep.subr.mxu0 0.0
  %527 = vmatpush1.msra.mxu0 0.0
  %528 = vmatprep.subr.mxu0 0.0
  %529 = vmatpush1.msra.mxu0 0.0
  %530 = vmatprep.subr.mxu0 0.0
  %531 = vmatpush1.msra.mxu0 0.0
  %532 = vmatprep.subr.mxu0 0.0
  %533 = vmatpush1.msra.mxu0 0.0
  %534 = vmatprep.subr.mxu0 0.0
  %535 = vmatpush1.msra.mxu0 0.0
  %536 = vmatprep.subr.mxu0 0.0
  %537 = vmatpush1.msra.mxu0 0.0
  %538 = vmatprep.subr.mxu0 0.0
  %539 = vmatpush1.msra.mxu0 0.0
  %540 = vmatprep.subr.mxu0 0.0
  %541 = vmatpush1.msra.mxu0 0.0
  %542 = vmatprep.subr.mxu0 0.0
  %543 = vmatpush1.msra.mxu0 0.0
  %544 = vmatprep.subr.mxu0 0.0
  %545 = vmatpush1.msra.mxu0 0.0
  %546 = vmatprep.subr.mxu0 0.0
  %547 = vmatpush1.msra.mxu0 0.0
  %548 = vmatprep.subr.mxu0 0.0
  %549 = vmatpush1.msra.mxu0 0.0
  %550 = vmatprep.subr.mxu0 0.0
  %551 = vmatpush1.msra.mxu0 0.0
  %552 = vmatprep.subr.mxu0 0.0
  %553 = vmatpush1.msra.mxu0 0.0
  %554 = vmatprep.mubr.f32.mxu0 0.0
  %555 = vmatmul.mubr.f32.gmra.mrb[0].mxu0 %v488
  %v556 = vpop.f32.mrb[0].mxu0
  %v557 = vadd.f32 0.0, %v556
  %v558 = vpop.f32.mrb[0].mxu0
  %v559 = vadd.f32 0.0, %v558
  %560 = vdwg.mxu0
  %v561 = vadd.f32 %v559, %v318
  %v562 = vxor.u32 %v561, 2147483648
  %v563 = vmul.f32 %v562, 1.442695
  %v564 = vpow.pop %v563
  %v565 = vadd.f32 %v564, 1.0
  %v566 = vrcp.pop %v565
  %v567 = vmul.f32 1.0, %v566
  %v568 = vtanh.pop %v561
  %v569 = vmul.f32 %v567, %v442
  %571 = vrot.lane.b32.xlu0 %v568, 64
  %v572 = vpop.permute.xlu0 %571
  %v574 = vmul.f32 %v567, %v572
  %576 = vrot.lane.b32.xlu0 %v574, 32
  %v577 = vpop.permute.xlu0 %576
  %v579 = vadd.f32 %v569, %v577
  %v580 = vtanh.pop %v579
  %582 = vrot.lane.b32.xlu0 %v580, 64
  %v583 = vpop.permute.xlu0 %582
  %v585 = vmul.f32 %v567, %v583
  %587 = vrot.lane.b32.xlu0 %v585, 32
  %v588 = vpop.permute.xlu0 %587
  %590 = vst.msk [vmem:[#allocation2 + $0x8] sm:$0xff] %vm223, %v588
  %v591 = vadd.f32 %v557, %v178
  %v592 = vxor.u32 %v591, 2147483648
  %v593 = vmul.f32 %v592, 1.442695
  %v594 = vpow.pop %v593
  %v595 = vadd.f32 %v594, 1.0
  %v596 = vrcp.pop %v595
  %v597 = vmul.f32 1.0, %v596
  %v598 = vtanh.pop %v591
  %v599 = vmul.f32 %v597, %v472
  %601 = vrot.lane.b32.xlu0 %v598, 64
  %v602 = vpop.permute.xlu0 %601
  %v604 = vmul.f32 %v597, %v602
  %606 = vrot.lane.b32.xlu0 %v604, 32
  %v607 = vpop.permute.xlu0 %606
  %v609 = vadd.f32 %v599, %v607
  %v610 = vtanh.pop %v609
  %612 = vrot.lane.b32.xlu0 %v610, 64
  %v613 = vpop.permute.xlu0 %612
  %v615 = vmul.f32 %v597, %v613
  %617 = vrot.lane.b32.xlu0 %v615, 32
  %v618 = vpop.permute.xlu0 %617
  %620 = vrot.lane.b32.xlu0 %v585, 64
  %v621 = vpop.permute.xlu0 %620
  %v623 = vsel %vm223, %v618, %v621
  %v625 = vsel %vm349, %v623, 0
  %627 = vmatprep.subr.mxu0 %v298
  %628 = vmatpush1.msra.mxu0 %v297
  %629 = vmatprep.subr.mxu0 %v300
  %630 = vmatpush1.msra.mxu0 %v299
  %631 = vmatprep.subr.mxu0 %v302
  %632 = vmatpush1.msra.mxu0 %v301
  %633 = vmatprep.subr.mxu0 %v304
  %634 = vmatpush1.msra.mxu0 %v303
  %635 = vmatprep.subr.mxu0 %v306
  %636 = vmatpush1.msra.mxu0 %v305
  %637 = vmatprep.subr.mxu0 %v308
  %638 = vmatpush1.msra.mxu0 %v307
  %639 = vmatprep.subr.mxu0 %v310
  %640 = vmatpush1.msra.mxu0 %v309
  %641 = vmatprep.subr.mxu0 %v312
  %642 = vmatpush1.msra.mxu0 %v311
  %643 = vmatprep.subr.mxu0 0.0
  %644 = vmatpush1.msra.mxu0 0.0
  %645 = vmatprep.subr.mxu0 0.0
  %646 = vmatpush1.msra.mxu0 0.0
  %647 = vmatprep.subr.mxu0 0.0
  %648 = vmatpush1.msra.mxu0 0.0
  %649 = vmatprep.subr.mxu0 0.0
  %650 = vmatpush1.msra.mxu0 0.0
  %651 = vmatprep.subr.mxu0 0.0
  %652 = vmatpush1.msra.mxu0 0.0
  %653 = vmatprep.subr.mxu0 0.0
  %654 = vmatpush1.msra.mxu0 0.0
  %655 = vmatprep.subr.mxu0 0.0
  %656 = vmatpush1.msra.mxu0 0.0
  %657 = vmatprep.subr.mxu0 0.0
  %658 = vmatpush1.msra.mxu0 0.0
  %659 = vmatprep.subr.mxu0 0.0
  %660 = vmatpush1.msra.mxu0 0.0
  %661 = vmatprep.subr.mxu0 0.0
  %662 = vmatpush1.msra.mxu0 0.0
  %663 = vmatprep.subr.mxu0 0.0
  %664 = vmatpush1.msra.mxu0 0.0
  %665 = vmatprep.subr.mxu0 0.0
  %666 = vmatpush1.msra.mxu0 0.0
  %667 = vmatprep.subr.mxu0 0.0
  %668 = vmatpush1.msra.mxu0 0.0
  %669 = vmatprep.subr.mxu0 0.0
  %670 = vmatpush1.msra.mxu0 0.0
  %671 = vmatprep.subr.mxu0 0.0
  %672 = vmatpush1.msra.mxu0 0.0
  %673 = vmatprep.subr.mxu0 0.0
  %674 = vmatpush1.msra.mxu0 0.0
  %675 = vmatprep.subr.mxu0 0.0
  %676 = vmatpush1.msra.mxu0 0.0
  %677 = vmatprep.subr.mxu0 0.0
  %678 = vmatpush1.msra.mxu0 0.0
  %679 = vmatprep.subr.mxu0 0.0
  %680 = vmatpush1.msra.mxu0 0.0
  %681 = vmatprep.subr.mxu0 0.0
  %682 = vmatpush1.msra.mxu0 0.0
  %683 = vmatprep.subr.mxu0 0.0
  %684 = vmatpush1.msra.mxu0 0.0
  %685 = vmatprep.subr.mxu0 0.0
  %686 = vmatpush1.msra.mxu0 0.0
  %687 = vmatprep.subr.mxu0 0.0
  %688 = vmatpush1.msra.mxu0 0.0
  %689 = vmatprep.subr.mxu0 0.0
  %690 = vmatpush1.msra.mxu0 0.0
  %691 = vmatprep.mubr.f32.mxu0 0.0
  %692 = vmatmul.mubr.f32.gmra.mrb[0].mxu0 %v625
  %v693 = vpop.f32.mrb[0].mxu0
  %v694 = vadd.f32 0.0, %v693
  %v695 = vpop.f32.mrb[0].mxu0
  %v696 = vadd.f32 0.0, %v695
  %697 = vdwg.mxu0
  %v698 = vadd.f32 %v696, %v318
  %v699 = vxor.u32 %v698, 2147483648
  %v700 = vmul.f32 %v699, 1.442695
  %v701 = vpow.pop %v700
  %v702 = vadd.f32 %v701, 1.0
  %v703 = vrcp.pop %v702
  %v704 = vmul.f32 1.0, %v703
  %v705 = vtanh.pop %v698
  %v706 = vmul.f32 %v704, %v579
  %708 = vrot.lane.b32.xlu0 %v705, 64
  %v709 = vpop.permute.xlu0 %708
  %v711 = vmul.f32 %v704, %v709
  %713 = vrot.lane.b32.xlu0 %v711, 32
  %v714 = vpop.permute.xlu0 %713
  %v716 = vadd.f32 %v706, %v714
  %v717 = vtanh.pop %v716
  %719 = vrot.lane.b32.xlu0 %v717, 64
  %v720 = vpop.permute.xlu0 %719
  %v722 = vmul.f32 %v704, %v720
  %724 = vrot.lane.b32.xlu0 %v722, 32
  %v725 = vpop.permute.xlu0 %724
  %727 = vst.msk [vmem:[#allocation2 + $0x10] sm:$0xff] %vm223, %v725
  %v728 = vadd.f32 %v694, %v183
  %v729 = vxor.u32 %v728, 2147483648
  %v730 = vmul.f32 %v729, 1.442695
  %v731 = vpow.pop %v730
  %v732 = vadd.f32 %v731, 1.0
  %v733 = vrcp.pop %v732
  %v734 = vmul.f32 1.0, %v733
  %v735 = vtanh.pop %v728
  %v736 = vmul.f32 %v734, %v609
  %738 = vrot.lane.b32.xlu0 %v735, 64
  %v739 = vpop.permute.xlu0 %738
  %v741 = vmul.f32 %v734, %v739
  %743 = vrot.lane.b32.xlu0 %v741, 32
  %v744 = vpop.permute.xlu0 %743
  %v746 = vadd.f32 %v736, %v744
  %v747 = vtanh.pop %v746
  %749 = vrot.lane.b32.xlu0 %v747, 64
  %v750 = vpop.permute.xlu0 %749
  %v752 = vmul.f32 %v734, %v750
  %754 = vrot.lane.b32.xlu0 %v752, 32
  %v755 = vpop.permute.xlu0 %754
  %757 = vrot.lane.b32.xlu0 %v722, 64
  %v758 = vpop.permute.xlu0 %757
  %v760 = vsel %vm223, %v755, %v758
  %v762 = vsel %vm349, %v760, 0
  %764 = vmatprep.subr.mxu0 %v298
  %765 = vmatpush1.msra.mxu0 %v297
  %766 = vmatprep.subr.mxu0 %v300
  %767 = vmatpush1.msra.mxu0 %v299
  %768 = vmatprep.subr.mxu0 %v302
  %769 = vmatpush1.msra.mxu0 %v301
  %770 = vmatprep.subr.mxu0 %v304
  %771 = vmatpush1.msra.mxu0 %v303
  %772 = vmatprep.subr.mxu0 %v306
  %773 = vmatpush1.msra.mxu0 %v305
  %774 = vmatprep.subr.mxu0 %v308
  %775 = vmatpush1.msra.mxu0 %v307
  %776 = vmatprep.subr.mxu0 %v310
  %777 = vmatpush1.msra.mxu0 %v309
  %778 = vmatprep.subr.mxu0 %v312
  %779 = vmatpush1.msra.mxu0 %v311
  %780 = vmatprep.subr.mxu0 0.0
  %781 = vmatpush1.msra.mxu0 0.0
  %782 = vmatprep.subr.mxu0 0.0
  %783 = vmatpush1.msra.mxu0 0.0
  %784 = vmatprep.subr.mxu0 0.0
  %785 = vmatpush1.msra.mxu0 0.0
  %786 = vmatprep.subr.mxu0 0.0
  %787 = vmatpush1.msra.mxu0 0.0
  %788 = vmatprep.subr.mxu0 0.0
  %789 = vmatpush1.msra.mxu0 0.0
  %790 = vmatprep.subr.mxu0 0.0
  %791 = vmatpush1.msra.mxu0 0.0
  %792 = vmatprep.subr.mxu0 0.0
  %793 = vmatpush1.msra.mxu0 0.0
  %794 = vmatprep.subr.mxu0 0.0
  %795 = vmatpush1.msra.mxu0 0.0
  %796 = vmatprep.subr.mxu0 0.0
  %797 = vmatpush1.msra.mxu0 0.0
  %798 = vmatprep.subr.mxu0 0.0
  %799 = vmatpush1.msra.mxu0 0.0
  %800 = vmatprep.subr.mxu0 0.0
  %801 = vmatpush1.msra.mxu0 0.0
  %802 = vmatprep.subr.mxu0 0.0
  %803 = vmatpush1.msra.mxu0 0.0
  %804 = vmatprep.subr.mxu0 0.0
  %805 = vmatpush1.msra.mxu0 0.0
  %806 = vmatprep.subr.mxu0 0.0
  %807 = vmatpush1.msra.mxu0 0.0
  %808 = vmatprep.subr.mxu0 0.0
  %809 = vmatpush1.msra.mxu0 0.0
  %810 = vmatprep.subr.mxu0 0.0
  %811 = vmatpush1.msra.mxu0 0.0
  %812 = vmatprep.subr.mxu0 0.0
  %813 = vmatpush1.msra.mxu0 0.0
  %814 = vmatprep.subr.mxu0 0.0
  %815 = vmatpush1.msra.mxu0 0.0
  %816 = vmatprep.subr.mxu0 0.0
  %817 = vmatpush1.msra.mxu0 0.0
  %818 = vmatprep.subr.mxu0 0.0
  %819 = vmatpush1.msra.mxu0 0.0
  %820 = vmatprep.subr.mxu0 0.0
  %821 = vmatpush1.msra.mxu0 0.0
  %822 = vmatprep.subr.mxu0 0.0
  %823 = vmatpush1.msra.mxu0 0.0
  %824 = vmatprep.subr.mxu0 0.0
  %825 = vmatpush1.msra.mxu0 0.0
  %826 = vmatprep.subr.mxu0 0.0
  %827 = vmatpush1.msra.mxu0 0.0
  %828 = vmatprep.mubr.f32.mxu0 0.0
  %829 = vmatmul.mubr.f32.gmra.mrb[0].mxu0 %v762
  %v830 = vpop.f32.mrb[0].mxu0
  %v831 = vadd.f32 0.0, %v830
  %v832 = vpop.f32.mrb[0].mxu0
  %v833 = vadd.f32 0.0, %v832
  %834 = vdwg.mxu0
  %v835 = vadd.f32 %v833, %v318
  %v836 = vxor.u32 %v835, 2147483648
  %v837 = vmul.f32 %v836, 1.442695
  %v838 = vpow.pop %v837
  %v839 = vadd.f32 %v838, 1.0
  %v840 = vrcp.pop %v839
  %v841 = vmul.f32 1.0, %v840
  %v842 = vtanh.pop %v835
  %v843 = vmul.f32 %v841, %v716
  %845 = vrot.lane.b32.xlu0 %v842, 64
  %v846 = vpop.permute.xlu0 %845
  %v848 = vmul.f32 %v841, %v846
  %850 = vrot.lane.b32.xlu0 %v848, 32
  %v851 = vpop.permute.xlu0 %850
  %v853 = vadd.f32 %v843, %v851
  %v854 = vtanh.pop %v853
  %856 = vrot.lane.b32.xlu0 %v854, 64
  %v857 = vpop.permute.xlu0 %856
  %v859 = vmul.f32 %v841, %v857
  %861 = vrot.lane.b32.xlu0 %v859, 32
  %v862 = vpop.permute.xlu0 %861
  %864 = vst.msk [vmem:[#allocation2 + $0x18] sm:$0xff] %vm223, %v862
  %v865 = vadd.f32 %v831, %v188
  %v866 = vxor.u32 %v865, 2147483648
  %v867 = vmul.f32 %v866, 1.442695
  %v868 = vpow.pop %v867
  %v869 = vadd.f32 %v868, 1.0
  %v870 = vrcp.pop %v869
  %v871 = vmul.f32 1.0, %v870
  %v872 = vtanh.pop %v865
  %v873 = vmul.f32 %v871, %v746
  %875 = vrot.lane.b32.xlu0 %v872, 64
  %v876 = vpop.permute.xlu0 %875
  %v878 = vmul.f32 %v871, %v876
  %880 = vrot.lane.b32.xlu0 %v878, 32
  %v881 = vpop.permute.xlu0 %880
  %v883 = vadd.f32 %v873, %v881
  %v884 = vtanh.pop %v883
  %886 = vrot.lane.b32.xlu0 %v884, 64
  %v887 = vpop.permute.xlu0 %886
  %v889 = vmul.f32 %v871, %v887
  %891 = vrot.lane.b32.xlu0 %v889, 32
  %v892 = vpop.permute.xlu0 %891
  %894 = vrot.lane.b32.xlu0 %v859, 64
  %v895 = vpop.permute.xlu0 %894
  %v897 = vsel %vm223, %v892, %v895
  %v899 = vsel %vm349, %v897, 0
  %901 = vmatprep.subr.mxu0 %v298
  %902 = vmatpush1.msra.mxu0 %v297
  %903 = vmatprep.subr.mxu0 %v300
  %904 = vmatpush1.msra.mxu0 %v299
  %905 = vmatprep.subr.mxu0 %v302
  %906 = vmatpush1.msra.mxu0 %v301
  %907 = vmatprep.subr.mxu0 %v304
  %908 = vmatpush1.msra.mxu0 %v303
  %909 = vmatprep.subr.mxu0 %v306
  %910 = vmatpush1.msra.mxu0 %v305
  %911 = vmatprep.subr.mxu0 %v308
  %912 = vmatpush1.msra.mxu0 %v307
  %913 = vmatprep.subr.mxu0 %v310
  %914 = vmatpush1.msra.mxu0 %v309
  %915 = vmatprep.subr.mxu0 %v312
  %916 = vmatpush1.msra.mxu0 %v311
  %917 = vmatprep.subr.mxu0 0.0
  %918 = vmatpush1.msra.mxu0 0.0
  %919 = vmatprep.subr.mxu0 0.0
  %920 = vmatpush1.msra.mxu0 0.0
  %921 = vmatprep.subr.mxu0 0.0
  %922 = vmatpush1.msra.mxu0 0.0
  %923 = vmatprep.subr.mxu0 0.0
  %924 = vmatpush1.msra.mxu0 0.0
  %925 = vmatprep.subr.mxu0 0.0
  %926 = vmatpush1.msra.mxu0 0.0
  %927 = vmatprep.subr.mxu0 0.0
  %928 = vmatpush1.msra.mxu0 0.0
  %929 = vmatprep.subr.mxu0 0.0
  %930 = vmatpush1.msra.mxu0 0.0
  %931 = vmatprep.subr.mxu0 0.0
  %932 = vmatpush1.msra.mxu0 0.0
  %933 = vmatprep.subr.mxu0 0.0
  %934 = vmatpush1.msra.mxu0 0.0
  %935 = vmatprep.subr.mxu0 0.0
  %936 = vmatpush1.msra.mxu0 0.0
  %937 = vmatprep.subr.mxu0 0.0
  %938 = vmatpush1.msra.mxu0 0.0
  %939 = vmatprep.subr.mxu0 0.0
  %940 = vmatpush1.msra.mxu0 0.0
  %941 = vmatprep.subr.mxu0 0.0
  %942 = vmatpush1.msra.mxu0 0.0
  %943 = vmatprep.subr.mxu0 0.0
  %944 = vmatpush1.msra.mxu0 0.0
  %945 = vmatprep.subr.mxu0 0.0
  %946 = vmatpush1.msra.mxu0 0.0
  %947 = vmatprep.subr.mxu0 0.0
  %948 = vmatpush1.msra.mxu0 0.0
  %949 = vmatprep.subr.mxu0 0.0
  %950 = vmatpush1.msra.mxu0 0.0
  %951 = vmatprep.subr.mxu0 0.0
  %952 = vmatpush1.msra.mxu0 0.0
  %953 = vmatprep.subr.mxu0 0.0
  %954 = vmatpush1.msra.mxu0 0.0
  %955 = vmatprep.subr.mxu0 0.0
  %956 = vmatpush1.msra.mxu0 0.0
  %957 = vmatprep.subr.mxu0 0.0
  %958 = vmatpush1.msra.mxu0 0.0
  %959 = vmatprep.subr.mxu0 0.0
  %960 = vmatpush1.msra.mxu0 0.0
  %961 = vmatprep.subr.mxu0 0.0
  %962 = vmatpush1.msra.mxu0 0.0
  %963 = vmatprep.subr.mxu0 0.0
  %964 = vmatpush1.msra.mxu0 0.0
  %965 = vmatprep.mubr.f32.mxu0 0.0
  %966 = vmatmul.mubr.f32.gmra.mrb[0].mxu0 %v899
  %v967 = vpop.f32.mrb[0].mxu0
  %v968 = vadd.f32 0.0, %v967
  %v969 = vpop.f32.mrb[0].mxu0
  %v970 = vadd.f32 0.0, %v969
  %971 = vdwg.mxu0
  %v972 = vadd.f32 %v970, %v318
  %v973 = vxor.u32 %v972, 2147483648
  %v974 = vmul.f32 %v973, 1.442695
  %v975 = vpow.pop %v974
  %v976 = vadd.f32 %v975, 1.0
  %v977 = vrcp.pop %v976
  %v978 = vmul.f32 1.0, %v977
  %v979 = vtanh.pop %v972
  %v980 = vmul.f32 %v978, %v853
  %982 = vrot.lane.b32.xlu0 %v979, 64
  %v983 = vpop.permute.xlu0 %982
  %v985 = vmul.f32 %v978, %v983
  %987 = vrot.lane.b32.xlu0 %v985, 32
  %v988 = vpop.permute.xlu0 %987
  %v990 = vadd.f32 %v980, %v988
  %v991 = vtanh.pop %v990
  %993 = vrot.lane.b32.xlu0 %v991, 64
  %v994 = vpop.permute.xlu0 %993
  %v996 = vmul.f32 %v978, %v994
  %998 = vrot.lane.b32.xlu0 %v996, 32
  %v999 = vpop.permute.xlu0 %998
  %1001 = vst.msk [vmem:[#allocation2 + $0x20] sm:$0xff] %vm223, %v999
  %v1002 = vadd.f32 %v968, %v193
  %v1003 = vxor.u32 %v1002, 2147483648
  %v1004 = vmul.f32 %v1003, 1.442695
  %v1005 = vpow.pop %v1004
  %v1006 = vadd.f32 %v1005, 1.0
  %v1007 = vrcp.pop %v1006
  %v1008 = vmul.f32 1.0, %v1007
  %v1009 = vtanh.pop %v1002
  %v1010 = vmul.f32 %v1008, %v883
  %1012 = vrot.lane.b32.xlu0 %v1009, 64
  %v1013 = vpop.permute.xlu0 %1012
  %v1015 = vmul.f32 %v1008, %v1013
  %1017 = vrot.lane.b32.xlu0 %v1015, 32
  %v1018 = vpop.permute.xlu0 %1017
  %v1020 = vadd.f32 %v1010, %v1018
  %v1021 = vtanh.pop %v1020
  %1023 = vrot.lane.b32.xlu0 %v1021, 64
  %v1024 = vpop.permute.xlu0 %1023
  %v1026 = vmul.f32 %v1008, %v1024
  %1028 = vrot.lane.b32.xlu0 %v1026, 32
  %v1029 = vpop.permute.xlu0 %1028
  %1031 = vrot.lane.b32.xlu0 %v996, 64
  %v1032 = vpop.permute.xlu0 %1031
  %v1034 = vsel %vm223, %v1029, %v1032
  %v1036 = vsel %vm349, %v1034, 0
  %1038 = vmatprep.subr.mxu0 %v298
  %1039 = vmatpush1.msra.mxu0 %v297
  %1040 = vmatprep.subr.mxu0 %v300
  %1041 = vmatpush1.msra.mxu0 %v299
  %1042 = vmatprep.subr.mxu0 %v302
  %1043 = vmatpush1.msra.mxu0 %v301
  %1044 = vmatprep.subr.mxu0 %v304
  %1045 = vmatpush1.msra.mxu0 %v303
  %1046 = vmatprep.subr.mxu0 %v306
  %1047 = vmatpush1.msra.mxu0 %v305
  %1048 = vmatprep.subr.mxu0 %v308
  %1049 = vmatpush1.msra.mxu0 %v307
  %1050 = vmatprep.subr.mxu0 %v310
  %1051 = vmatpush1.msra.mxu0 %v309
  %1052 = vmatprep.subr.mxu0 %v312
  %1053 = vmatpush1.msra.mxu0 %v311
  %1054 = vmatprep.subr.mxu0 0.0
  %1055 = vmatpush1.msra.mxu0 0.0
  %1056 = vmatprep.subr.mxu0 0.0
  %1057 = vmatpush1.msra.mxu0 0.0
  %1058 = vmatprep.subr.mxu0 0.0
  %1059 = vmatpush1.msra.mxu0 0.0
  %1060 = vmatprep.subr.mxu0 0.0
  %1061 = vmatpush1.msra.mxu0 0.0
  %1062 = vmatprep.subr.mxu0 0.0
  %1063 = vmatpush1.msra.mxu0 0.0
  %1064 = vmatprep.subr.mxu0 0.0
  %1065 = vmatpush1.msra.mxu0 0.0
  %1066 = vmatprep.subr.mxu0 0.0
  %1067 = vmatpush1.msra.mxu0 0.0
  %1068 = vmatprep.subr.mxu0 0.0
  %1069 = vmatpush1.msra.mxu0 0.0
  %1070 = vmatprep.subr.mxu0 0.0
  %1071 = vmatpush1.msra.mxu0 0.0
  %1072 = vmatprep.subr.mxu0 0.0
  %1073 = vmatpush1.msra.mxu0 0.0
  %1074 = vmatprep.subr.mxu0 0.0
  %1075 = vmatpush1.msra.mxu0 0.0
  %1076 = vmatprep.subr.mxu0 0.0
  %1077 = vmatpush1.msra.mxu0 0.0
  %1078 = vmatprep.subr.mxu0 0.0
  %1079 = vmatpush1.msra.mxu0 0.0
  %1080 = vmatprep.subr.mxu0 0.0
  %1081 = vmatpush1.msra.mxu0 0.0
  %1082 = vmatprep.subr.mxu0 0.0
  %1083 = vmatpush1.msra.mxu0 0.0
  %1084 = vmatprep.subr.mxu0 0.0
  %1085 = vmatpush1.msra.mxu0 0.0
  %1086 = vmatprep.subr.mxu0 0.0
  %1087 = vmatpush1.msra.mxu0 0.0
  %1088 = vmatprep.subr.mxu0 0.0
  %1089 = vmatpush1.msra.mxu0 0.0
  %1090 = vmatprep.subr.mxu0 0.0
  %1091 = vmatpush1.msra.mxu0 0.0
  %1092 = vmatprep.subr.mxu0 0.0
  %1093 = vmatpush1.msra.mxu0 0.0
  %1094 = vmatprep.subr.mxu0 0.0
  %1095 = vmatpush1.msra.mxu0 0.0
  %1096 = vmatprep.subr.mxu0 0.0
  %1097 = vmatpush1.msra.mxu0 0.0
  %1098 = vmatprep.subr.mxu0 0.0
  %1099 = vmatpush1.msra.mxu0 0.0
  %1100 = vmatprep.subr.mxu0 0.0
  %1101 = vmatpush1.msra.mxu0 0.0
  %1102 = vmatprep.mubr.f32.mxu0 0.0
  %1103 = vmatmul.mubr.f32.gmra.mrb[0].mxu0 %v1036
  %v1104 = vpop.f32.mrb[0].mxu0
  %v1105 = vadd.f32 0.0, %v1104
  %v1106 = vpop.f32.mrb[0].mxu0
  %v1107 = vadd.f32 0.0, %v1106
  %1108 = vdwg.mxu0
  %v1109 = vadd.f32 %v1107, %v318
  %v1110 = vxor.u32 %v1109, 2147483648
  %v1111 = vmul.f32 %v1110, 1.442695
  %v1112 = vpow.pop %v1111
  %v1113 = vadd.f32 %v1112, 1.0
  %v1114 = vrcp.pop %v1113
  %v1115 = vmul.f32 1.0, %v1114
  %v1116 = vtanh.pop %v1109
  %v1117 = vmul.f32 %v1115, %v990
  %1119 = vrot.lane.b32.xlu0 %v1116, 64
  %v1120 = vpop.permute.xlu0 %1119
  %v1122 = vmul.f32 %v1115, %v1120
  %1124 = vrot.lane.b32.xlu0 %v1122, 32
  %v1125 = vpop.permute.xlu0 %1124
  %v1127 = vadd.f32 %v1117, %v1125
  %v1128 = vtanh.pop %v1127
  %1130 = vrot.lane.b32.xlu0 %v1128, 64
  %v1131 = vpop.permute.xlu0 %1130
  %v1133 = vmul.f32 %v1115, %v1131
  %1135 = vrot.lane.b32.xlu0 %v1133, 32
  %v1136 = vpop.permute.xlu0 %1135
  %1138 = vst.msk [vmem:[#allocation2 + $0x28] sm:$0xff] %vm223, %v1136
  %v1139 = vadd.f32 %v1105, %v198
  %v1140 = vxor.u32 %v1139, 2147483648
  %v1141 = vmul.f32 %v1140, 1.442695
  %v1142 = vpow.pop %v1141
  %v1143 = vadd.f32 %v1142, 1.0
  %v1144 = vrcp.pop %v1143
  %v1145 = vmul.f32 1.0, %v1144
  %v1146 = vtanh.pop %v1139
  %v1147 = vmul.f32 %v1145, %v1020
  %1149 = vrot.lane.b32.xlu0 %v1146, 64
  %v1150 = vpop.permute.xlu0 %1149
  %v1152 = vmul.f32 %v1145, %v1150
  %1154 = vrot.lane.b32.xlu0 %v1152, 32
  %v1155 = vpop.permute.xlu0 %1154
  %v1157 = vadd.f32 %v1147, %v1155
  %v1158 = vtanh.pop %v1157
  %1160 = vrot.lane.b32.xlu0 %v1158, 64
  %v1161 = vpop.permute.xlu0 %1160
  %v1163 = vmul.f32 %v1145, %v1161
  %1165 = vrot.lane.b32.xlu0 %v1163, 32
  %v1166 = vpop.permute.xlu0 %1165
  %1168 = vrot.lane.b32.xlu0 %v1133, 64
  %v1169 = vpop.permute.xlu0 %1168
  %v1171 = vsel %vm223, %v1166, %v1169
  %v1173 = vsel %vm349, %v1171, 0
  %1175 = vmatprep.subr.mxu0 %v298
  %1176 = vmatpush1.msra.mxu0 %v297
  %1177 = vmatprep.subr.mxu0 %v300
  %1178 = vmatpush1.msra.mxu0 %v299
  %1179 = vmatprep.subr.mxu0 %v302
  %1180 = vmatpush1.msra.mxu0 %v301
  %1181 = vmatprep.subr.mxu0 %v304
  %1182 = vmatpush1.msra.mxu0 %v303
  %1183 = vmatprep.subr.mxu0 %v306
  %1184 = vmatpush1.msra.mxu0 %v305
  %1185 = vmatprep.subr.mxu0 %v308
  %1186 = vmatpush1.msra.mxu0 %v307
  %1187 = vmatprep.subr.mxu0 %v310
  %1188 = vmatpush1.msra.mxu0 %v309
  %1189 = vmatprep.subr.mxu0 %v312
  %1190 = vmatpush1.msra.mxu0 %v311
  %1191 = vmatprep.subr.mxu0 0.0
  %1192 = vmatpush1.msra.mxu0 0.0
  %1193 = vmatprep.subr.mxu0 0.0
  %1194 = vmatpush1.msra.mxu0 0.0
  %1195 = vmatprep.subr.mxu0 0.0
  %1196 = vmatpush1.msra.mxu0 0.0
  %1197 = vmatprep.subr.mxu0 0.0
  %1198 = vmatpush1.msra.mxu0 0.0
  %1199 = vmatprep.subr.mxu0 0.0
  %1200 = vmatpush1.msra.mxu0 0.0
  %1201 = vmatprep.subr.mxu0 0.0
  %1202 = vmatpush1.msra.mxu0 0.0
  %1203 = vmatprep.subr.mxu0 0.0
  %1204 = vmatpush1.msra.mxu0 0.0
  %1205 = vmatprep.subr.mxu0 0.0
  %1206 = vmatpush1.msra.mxu0 0.0
  %1207 = vmatprep.subr.mxu0 0.0
  %1208 = vmatpush1.msra.mxu0 0.0
  %1209 = vmatprep.subr.mxu0 0.0
  %1210 = vmatpush1.msra.mxu0 0.0
  %1211 = vmatprep.subr.mxu0 0.0
  %1212 = vmatpush1.msra.mxu0 0.0
  %1213 = vmatprep.subr.mxu0 0.0
  %1214 = vmatpush1.msra.mxu0 0.0
  %1215 = vmatprep.subr.mxu0 0.0
  %1216 = vmatpush1.msra.mxu0 0.0
  %1217 = vmatprep.subr.mxu0 0.0
  %1218 = vmatpush1.msra.mxu0 0.0
  %1219 = vmatprep.subr.mxu0 0.0
  %1220 = vmatpush1.msra.mxu0 0.0
  %1221 = vmatprep.subr.mxu0 0.0
  %1222 = vmatpush1.msra.mxu0 0.0
  %1223 = vmatprep.subr.mxu0 0.0
  %1224 = vmatpush1.msra.mxu0 0.0
  %1225 = vmatprep.subr.mxu0 0.0
  %1226 = vmatpush1.msra.mxu0 0.0
  %1227 = vmatprep.subr.mxu0 0.0
  %1228 = vmatpush1.msra.mxu0 0.0
  %1229 = vmatprep.subr.mxu0 0.0
  %1230 = vmatpush1.msra.mxu0 0.0
  %1231 = vmatprep.subr.mxu0 0.0
  %1232 = vmatpush1.msra.mxu0 0.0
  %1233 = vmatprep.subr.mxu0 0.0
  %1234 = vmatpush1.msra.mxu0 0.0
  %1235 = vmatprep.subr.mxu0 0.0
  %1236 = vmatpush1.msra.mxu0 0.0
  %1237 = vmatprep.subr.mxu0 0.0
  %1238 = vmatpush1.msra.mxu0 0.0
  %1239 = vmatprep.mubr.f32.mxu0 0.0
  %1240 = vmatmul.mubr.f32.gmra.mrb[0].mxu0 %v1173
  %v1241 = vpop.f32.mrb[0].mxu0
  %v1242 = vadd.f32 0.0, %v1241
  %v1243 = vpop.f32.mrb[0].mxu0
  %v1244 = vadd.f32 0.0, %v1243
  %1245 = vdwg.mxu0
  %v1246 = vadd.f32 %v1244, %v318
  %v1247 = vxor.u32 %v1246, 2147483648
  %v1248 = vmul.f32 %v1247, 1.442695
  %v1249 = vpow.pop %v1248
  %v1250 = vadd.f32 %v1249, 1.0
  %v1251 = vrcp.pop %v1250
  %v1252 = vmul.f32 1.0, %v1251
  %v1253 = vtanh.pop %v1246
  %v1254 = vmul.f32 %v1252, %v1127
  %1256 = vrot.lane.b32.xlu0 %v1253, 64
  %v1257 = vpop.permute.xlu0 %1256
  %v1259 = vmul.f32 %v1252, %v1257
  %1261 = vrot.lane.b32.xlu0 %v1259, 32
  %v1262 = vpop.permute.xlu0 %1261
  %v1264 = vadd.f32 %v1254, %v1262
  %v1265 = vtanh.pop %v1264
  %1267 = vrot.lane.b32.xlu0 %v1265, 64
  %v1268 = vpop.permute.xlu0 %1267
  %v1270 = vmul.f32 %v1252, %v1268
  %1272 = vrot.lane.b32.xlu0 %v1270, 32
  %v1273 = vpop.permute.xlu0 %1272
  %1275 = vst.msk [vmem:[#allocation2 + $0x30] sm:$0xff] %vm223, %v1273
  %v1276 = vadd.f32 %v1242, %v203
  %v1277 = vxor.u32 %v1276, 2147483648
  %v1278 = vmul.f32 %v1277, 1.442695
  %v1279 = vpow.pop %v1278
  %v1280 = vadd.f32 %v1279, 1.0
  %v1281 = vrcp.pop %v1280
  %v1282 = vmul.f32 1.0, %v1281
  %v1283 = vtanh.pop %v1276
  %v1284 = vmul.f32 %v1282, %v1157
  %1286 = vrot.lane.b32.xlu0 %v1283, 64
  %v1287 = vpop.permute.xlu0 %1286
  %v1289 = vmul.f32 %v1282, %v1287
  %1291 = vrot.lane.b32.xlu0 %v1289, 32
  %v1292 = vpop.permute.xlu0 %1291
  %v1294 = vadd.f32 %v1284, %v1292
  %v1295 = vtanh.pop %v1294
  %1297 = vrot.lane.b32.xlu0 %v1295, 64
  %v1298 = vpop.permute.xlu0 %1297
  %v1300 = vmul.f32 %v1282, %v1298
  %1302 = vrot.lane.b32.xlu0 %v1300, 32
  %v1303 = vpop.permute.xlu0 %1302
  %1305 = vrot.lane.b32.xlu0 %v1270, 64
  %v1306 = vpop.permute.xlu0 %1305
  %v1308 = vsel %vm223, %v1303, %v1306
  %v1310 = vsel %vm349, %v1308, 0
  %1312 = vmatprep.subr.mxu0 %v298
  %1313 = vmatpush1.msra.mxu0 %v297
  %1314 = vmatprep.subr.mxu0 %v300
  %1315 = vmatpush1.msra.mxu0 %v299
  %1316 = vmatprep.subr.mxu0 %v302
  %1317 = vmatpush1.msra.mxu0 %v301
  %1318 = vmatprep.subr.mxu0 %v304
  %1319 = vmatpush1.msra.mxu0 %v303
  %1320 = vmatprep.subr.mxu0 %v306
  %1321 = vmatpush1.msra.mxu0 %v305
  %1322 = vmatprep.subr.mxu0 %v308
  %1323 = vmatpush1.msra.mxu0 %v307
  %1324 = vmatprep.subr.mxu0 %v310
  %1325 = vmatpush1.msra.mxu0 %v309
  %1326 = vmatprep.subr.mxu0 %v312
  %1327 = vmatpush1.msra.mxu0 %v311
  %1328 = vmatprep.subr.mxu0 0.0
  %1329 = vmatpush1.msra.mxu0 0.0
  %1330 = vmatprep.subr.mxu0 0.0
  %1331 = vmatpush1.msra.mxu0 0.0
  %1332 = vmatprep.subr.mxu0 0.0
  %1333 = vmatpush1.msra.mxu0 0.0
  %1334 = vmatprep.subr.mxu0 0.0
  %1335 = vmatpush1.msra.mxu0 0.0
  %1336 = vmatprep.subr.mxu0 0.0
  %1337 = vmatpush1.msra.mxu0 0.0
  %1338 = vmatprep.subr.mxu0 0.0
  %1339 = vmatpush1.msra.mxu0 0.0
  %1340 = vmatprep.subr.mxu0 0.0
  %1341 = vmatpush1.msra.mxu0 0.0
  %1342 = vmatprep.subr.mxu0 0.0
  %1343 = vmatpush1.msra.mxu0 0.0
  %1344 = vmatprep.subr.mxu0 0.0
  %1345 = vmatpush1.msra.mxu0 0.0
  %1346 = vmatprep.subr.mxu0 0.0
  %1347 = vmatpush1.msra.mxu0 0.0
  %1348 = vmatprep.subr.mxu0 0.0
  %1349 = vmatpush1.msra.mxu0 0.0
  %1350 = vmatprep.subr.mxu0 0.0
  %1351 = vmatpush1.msra.mxu0 0.0
  %1352 = vmatprep.subr.mxu0 0.0
  %1353 = vmatpush1.msra.mxu0 0.0
  %1354 = vmatprep.subr.mxu0 0.0
  %1355 = vmatpush1.msra.mxu0 0.0
  %1356 = vmatprep.subr.mxu0 0.0
  %1357 = vmatpush1.msra.mxu0 0.0
  %1358 = vmatprep.subr.mxu0 0.0
  %1359 = vmatpush1.msra.mxu0 0.0
  %1360 = vmatprep.subr.mxu0 0.0
  %1361 = vmatpush1.msra.mxu0 0.0
  %1362 = vmatprep.subr.mxu0 0.0
  %1363 = vmatpush1.msra.mxu0 0.0
  %1364 = vmatprep.subr.mxu0 0.0
  %1365 = vmatpush1.msra.mxu0 0.0
  %1366 = vmatprep.subr.mxu0 0.0
  %1367 = vmatpush1.msra.mxu0 0.0
  %1368 = vmatprep.subr.mxu0 0.0
  %1369 = vmatpush1.msra.mxu0 0.0
  %1370 = vmatprep.subr.mxu0 0.0
  %1371 = vmatpush1.msra.mxu0 0.0
  %1372 = vmatprep.subr.mxu0 0.0
  %1373 = vmatpush1.msra.mxu0 0.0
  %1374 = vmatprep.subr.mxu0 0.0
  %1375 = vmatpush1.msra.mxu0 0.0
  %1376 = vmatprep.mubr.f32.mxu0 0.0
  %1377 = vmatmul.mubr.f32.gmra.mrb[0].mxu0 %v1310
  %v1378 = vpop.f32.mrb[0].mxu0
  %v1379 = vadd.f32 0.0, %v1378
  %v1380 = vpop.f32.mrb[0].mxu0
  %v1381 = vadd.f32 0.0, %v1380
  %1382 = vdwg.mxu0
  %v1383 = vadd.f32 %v1381, %v318
  %v1384 = vxor.u32 %v1383, 2147483648
  %v1385 = vmul.f32 %v1384, 1.442695
  %v1386 = vpow.pop %v1385
  %v1387 = vadd.f32 %v1386, 1.0
  %v1388 = vrcp.pop %v1387
  %v1389 = vmul.f32 1.0, %v1388
  %v1390 = vtanh.pop %v1383
  %v1391 = vmul.f32 %v1389, %v1264
  %1393 = vrot.lane.b32.xlu0 %v1390, 64
  %v1394 = vpop.permute.xlu0 %1393
  %v1396 = vmul.f32 %v1389, %v1394
  %1398 = vrot.lane.b32.xlu0 %v1396, 32
  %v1399 = vpop.permute.xlu0 %1398
  %v1401 = vadd.f32 %v1391, %v1399
  %v1402 = vtanh.pop %v1401
  %1404 = vrot.lane.b32.xlu0 %v1402, 64
  %v1405 = vpop.permute.xlu0 %1404
  %v1407 = vmul.f32 %v1389, %v1405
  %1409 = vrot.lane.b32.xlu0 %v1407, 32
  %v1410 = vpop.permute.xlu0 %1409
  %1412 = vst.msk [vmem:[#allocation2 + $0x38] sm:$0xff] %vm223, %v1410
  %v1413 = vadd.f32 %v1379, %v208
  %v1414 = vxor.u32 %v1413, 2147483648
  %v1415 = vmul.f32 %v1414, 1.442695
  %v1416 = vpow.pop %v1415
  %v1417 = vadd.f32 %v1416, 1.0
  %v1418 = vrcp.pop %v1417
  %v1419 = vmul.f32 1.0, %v1418
  %v1420 = vtanh.pop %v1413
  %v1421 = vmul.f32 %v1419, %v1294
  %1423 = vrot.lane.b32.xlu0 %v1420, 64
  %v1424 = vpop.permute.xlu0 %1423
  %v1426 = vmul.f32 %v1419, %v1424
  %1428 = vrot.lane.b32.xlu0 %v1426, 32
  %v1429 = vpop.permute.xlu0 %1428
  %v1431 = vadd.f32 %v1421, %v1429
  %v1432 = vtanh.pop %v1431
  %1434 = vrot.lane.b32.xlu0 %v1432, 64
  %v1435 = vpop.permute.xlu0 %1434
  %v1437 = vmul.f32 %v1419, %v1435
  %1439 = vrot.lane.b32.xlu0 %v1437, 32
  %v1440 = vpop.permute.xlu0 %1439
  %1442 = vrot.lane.b32.xlu0 %v1407, 64
  %v1443 = vpop.permute.xlu0 %1442
  %v1445 = vsel %vm223, %v1440, %v1443
  %v1447 = vsel %vm349, %v1445, 0
  %1449 = vmatprep.subr.mxu0 %v298
  %1450 = vmatpush1.msra.mxu0 %v297
  %1451 = vmatprep.subr.mxu0 %v300
  %1452 = vmatpush1.msra.mxu0 %v299
  %1453 = vmatprep.subr.mxu0 %v302
  %1454 = vmatpush1.msra.mxu0 %v301
  %1455 = vmatprep.subr.mxu0 %v304
  %1456 = vmatpush1.msra.mxu0 %v303
  %1457 = vmatprep.subr.mxu0 %v306
  %1458 = vmatpush1.msra.mxu0 %v305
  %1459 = vmatprep.subr.mxu0 %v308
  %1460 = vmatpush1.msra.mxu0 %v307
  %1461 = vmatprep.subr.mxu0 %v310
  %1462 = vmatpush1.msra.mxu0 %v309
  %1463 = vmatprep.subr.mxu0 %v312
  %1464 = vmatpush1.msra.mxu0 %v311
  %1465 = vmatprep.subr.mxu0 0.0
  %1466 = vmatpush1.msra.mxu0 0.0
  %1467 = vmatprep.subr.mxu0 0.0
  %1468 = vmatpush1.msra.mxu0 0.0
  %1469 = vmatprep.subr.mxu0 0.0
  %1470 = vmatpush1.msra.mxu0 0.0
  %1471 = vmatprep.subr.mxu0 0.0
  %1472 = vmatpush1.msra.mxu0 0.0
  %1473 = vmatprep.subr.mxu0 0.0
  %1474 = vmatpush1.msra.mxu0 0.0
  %1475 = vmatprep.subr.mxu0 0.0
  %1476 = vmatpush1.msra.mxu0 0.0
  %1477 = vmatprep.subr.mxu0 0.0
  %1478 = vmatpush1.msra.mxu0 0.0
  %1479 = vmatprep.subr.mxu0 0.0
  %1480 = vmatpush1.msra.mxu0 0.0
  %1481 = vmatprep.subr.mxu0 0.0
  %1482 = vmatpush1.msra.mxu0 0.0
  %1483 = vmatprep.subr.mxu0 0.0
  %1484 = vmatpush1.msra.mxu0 0.0
  %1485 = vmatprep.subr.mxu0 0.0
  %1486 = vmatpush1.msra.mxu0 0.0
  %1487 = vmatprep.subr.mxu0 0.0
  %1488 = vmatpush1.msra.mxu0 0.0
  %1489 = vmatprep.subr.mxu0 0.0
  %1490 = vmatpush1.msra.mxu0 0.0
  %1491 = vmatprep.subr.mxu0 0.0
  %1492 = vmatpush1.msra.mxu0 0.0
  %1493 = vmatprep.subr.mxu0 0.0
  %1494 = vmatpush1.msra.mxu0 0.0
  %1495 = vmatprep.subr.mxu0 0.0
  %1496 = vmatpush1.msra.mxu0 0.0
  %1497 = vmatprep.subr.mxu0 0.0
  %1498 = vmatpush1.msra.mxu0 0.0
  %1499 = vmatprep.subr.mxu0 0.0
  %1500 = vmatpush1.msra.mxu0 0.0
  %1501 = vmatprep.subr.mxu0 0.0
  %1502 = vmatpush1.msra.mxu0 0.0
  %1503 = vmatprep.subr.mxu0 0.0
  %1504 = vmatpush1.msra.mxu0 0.0
  %1505 = vmatprep.subr.mxu0 0.0
  %1506 = vmatpush1.msra.mxu0 0.0
  %1507 = vmatprep.subr.mxu0 0.0
  %1508 = vmatpush1.msra.mxu0 0.0
  %1509 = vmatprep.subr.mxu0 0.0
  %1510 = vmatpush1.msra.mxu0 0.0
  %1511 = vmatprep.subr.mxu0 0.0
  %1512 = vmatpush1.msra.mxu0 0.0
  %1513 = vmatprep.mubr.f32.mxu0 0.0
  %1514 = vmatmul.mubr.f32.gmra.mrb[0].mxu0 %v1447
  %v1515 = vpop.f32.mrb[0].mxu0
  %v1516 = vpop.f32.mrb[0].mxu0
  %v1517 = vadd.f32 0.0, %v1516
  %1518 = vdwg.mxu0
  %v1519 = vadd.f32 %v1517, %v318
  %v1520 = vxor.u32 %v1519, 2147483648
  %v1521 = vmul.f32 %v1520, 1.442695
  %v1522 = vpow.pop %v1521
  %v1523 = vadd.f32 %v1522, 1.0
  %v1524 = vrcp.pop %v1523
  %v1525 = vmul.f32 1.0, %v1524
  %v1526 = vtanh.pop %v1519
  %v1527 = vmul.f32 %v1525, %v1401
  %1529 = vrot.lane.b32.xlu0 %v1526, 64
  %v1530 = vpop.permute.xlu0 %1529
  %v1532 = vmul.f32 %v1525, %v1530
  %1534 = vrot.lane.b32.xlu0 %v1532, 32
  %v1535 = vpop.permute.xlu0 %1534
  %v1537 = vadd.f32 %v1527, %v1535
  %v1538 = vtanh.pop %v1537
  %1540 = vrot.lane.b32.xlu0 %v1538, 64
  %v1541 = vpop.permute.xlu0 %1540
  %v1543 = vmul.f32 %v1525, %v1541
  %1545 = vrot.lane.b32.xlu0 %v1543, 32
  %v1546 = vpop.permute.xlu0 %1545
  %1548 = vst.msk [vmem:[#allocation2 + $0x40] sm:$0xff] %vm223, %v1546
  %v1549 = vld [vmem:[#allocation2] sm:$0xff]
  %v1550 = vld [vmem:[#allocation2 + $0x8] sm:$0xff]
  %v1551 = vld [vmem:[#allocation2 + $0x10] sm:$0xff]
  %v1552 = vld [vmem:[#allocation2 + $0x18] sm:$0xff]
  %v1553 = vld [vmem:[#allocation2 + $0x20] sm:$0xff]
  %v1554 = vld [vmem:[#allocation2 + $0x28] sm:$0xff]
  %v1555 = vld [vmem:[#allocation2 + $0x30] sm:$0xff]
  %v1556 = vld [vmem:[#allocation2 + $0x38] sm:$0xff]
  %v1557 = vld [vmem:[#allocation2 + $0x40] sm:$0xff]
  %v1558 = vld [vmem:[%s7] sm:$0xff]
  %v1559 = vld [vmem:[%s7 + $0x8] sm:$0xff]
  %v1560 = vld [vmem:[%s7 + $0x10] sm:$0xff]
  %v1561 = vld [vmem:[%s7 + $0x18] sm:$0xff]
  %v1562 = vld [vmem:[%s8] sm:$0x1]
  %v1564 = vlaneseq
  %v1565 = vshrl.u32 %v1564, 7
  %v1566 = vsub.s32 0, %v1565
  %v1567 = vrot.slane %v1562, %v1566
  %v1570 = vsel %vm223, %v1549, 0
  %v1573 = vsel %vm223, %v1550, 0
  %v1576 = vsel %vm223, %v1551, 0
  %v1579 = vsel %vm223, %v1552, 0
  %v1582 = vsel %vm223, %v1553, 0
  %v1585 = vsel %vm223, %v1554, 0
  %v1588 = vsel %vm223, %v1555, 0
  %v1591 = vsel %vm223, %v1556, 0
  %v1594 = vsel %vm223, %v1557, 0
  %1596 = vmatprep.subr.mxu0 0.0
  %1597 = vmatpush1.msra.mxu0 %v1558
  %1598 = vmatprep.subr.mxu0 0.0
  %1599 = vmatpush1.msra.mxu0 %v1559
  %1600 = vmatprep.subr.mxu0 0.0
  %1601 = vmatpush1.msra.mxu0 %v1560
  %1602 = vmatprep.subr.mxu0 0.0
  %1603 = vmatpush1.msra.mxu0 %v1561
  %1604 = vmatprep.subr.mxu0 0.0
  %1605 = vmatpush1.msra.mxu0 0.0
  %1606 = vmatprep.subr.mxu0 0.0
  %1607 = vmatpush1.msra.mxu0 0.0
  %1608 = vmatprep.subr.mxu0 0.0
  %1609 = vmatpush1.msra.mxu0 0.0
  %1610 = vmatprep.subr.mxu0 0.0
  %1611 = vmatpush1.msra.mxu0 0.0
  %1612 = vmatprep.subr.mxu0 0.0
  %1613 = vmatpush1.msra.mxu0 0.0
  %1614 = vmatprep.subr.mxu0 0.0
  %1615 = vmatpush1.msra.mxu0 0.0
  %1616 = vmatprep.subr.mxu0 0.0
  %1617 = vmatpush1.msra.mxu0 0.0
  %1618 = vmatprep.subr.mxu0 0.0
  %1619 = vmatpush1.msra.mxu0 0.0
  %1620 = vmatprep.subr.mxu0 0.0
  %1621 = vmatpush1.msra.mxu0 0.0
  %1622 = vmatprep.subr.mxu0 0.0
  %1623 = vmatpush1.msra.mxu0 0.0
  %1624 = vmatprep.subr.mxu0 0.0
  %1625 = vmatpush1.msra.mxu0 0.0
  %1626 = vmatprep.subr.mxu0 0.0
  %1627 = vmatpush1.msra.mxu0 0.0
  %1628 = vmatprep.subr.mxu0 0.0
  %1629 = vmatpush1.msra.mxu0 0.0
  %1630 = vmatprep.subr.mxu0 0.0
  %1631 = vmatpush1.msra.mxu0 0.0
  %1632 = vmatprep.subr.mxu0 0.0
  %1633 = vmatpush1.msra.mxu0 0.0
  %1634 = vmatprep.subr.mxu0 0.0
  %1635 = vmatpush1.msra.mxu0 0.0
  %1636 = vmatprep.subr.mxu0 0.0
  %1637 = vmatpush1.msra.mxu0 0.0
  %1638 = vmatprep.subr.mxu0 0.0
  %1639 = vmatpush1.msra.mxu0 0.0
  %1640 = vmatprep.subr.mxu0 0.0
  %1641 = vmatpush1.msra.mxu0 0.0
  %1642 = vmatprep.subr.mxu0 0.0
  %1643 = vmatpush1.msra.mxu0 0.0
  %1644 = vmatprep.subr.mxu0 0.0
  %1645 = vmatpush1.msra.mxu0 0.0
  %1646 = vmatprep.subr.mxu0 0.0
  %1647 = vmatpush1.msra.mxu0 0.0
  %1648 = vmatprep.subr.mxu0 0.0
  %1649 = vmatpush1.msra.mxu0 0.0
  %1650 = vmatprep.subr.mxu0 0.0
  %1651 = vmatpush1.msra.mxu0 0.0
  %1652 = vmatprep.subr.mxu0 0.0
  %1653 = vmatpush1.msra.mxu0 0.0
  %1654 = vmatprep.subr.mxu0 0.0
  %1655 = vmatpush1.msra.mxu0 0.0
  %1656 = vmatprep.subr.mxu0 0.0
  %1657 = vmatpush1.msra.mxu0 0.0
  %1658 = vmatprep.subr.mxu0 0.0
  %1659 = vmatpush1.msra.mxu0 0.0
  %1660 = vmatprep.mubr.f32.mxu0 0.0
  %1661 = vmatmul.mubr.f32.gmra.mrb[0].mxu0 %v1570
  %v1662 = vpop.f32.mrb[0].mxu0
  %v1663 = vadd.f32 %v1567, %v1662
  %v1664 = vpop.f32.mrb[0].mxu0
  %1665 = vmatprep.mubr.f32.mxu0 0.0
  %1666 = vmatmul.mubr.f32.gmra.mrb[0].mxu0 %v1573
  %v1667 = vpop.f32.mrb[0].mxu0
  %v1668 = vadd.f32 %v1567, %v1667
  %v1669 = vpop.f32.mrb[0].mxu0
  %1670 = vmatprep.mubr.f32.mxu0 0.0
  %1671 = vmatmul.mubr.f32.gmra.mrb[0].mxu0 %v1576
  %v1672 = vpop.f32.mrb[0].mxu0
  %v1673 = vadd.f32 %v1567, %v1672
  %v1674 = vpop.f32.mrb[0].mxu0
  %1675 = vmatprep.mubr.f32.mxu0 0.0
  %1676 = vmatmul.mubr.f32.gmra.mrb[0].mxu0 %v1579
  %v1677 = vpop.f32.mrb[0].mxu0
  %v1678 = vadd.f32 %v1567, %v1677
  %v1679 = vpop.f32.mrb[0].mxu0
  %1680 = vmatprep.mubr.f32.mxu0 0.0
  %1681 = vmatmul.mubr.f32.gmra.mrb[0].mxu0 %v1582
  %v1682 = vpop.f32.mrb[0].mxu0
  %v1683 = vadd.f32 %v1567, %v1682
  %v1684 = vpop.f32.mrb[0].mxu0
  %1685 = vmatprep.mubr.f32.mxu0 0.0
  %1686 = vmatmul.mubr.f32.gmra.mrb[0].mxu0 %v1585
  %v1687 = vpop.f32.mrb[0].mxu0
  %v1688 = vadd.f32 %v1567, %v1687
  %v1689 = vpop.f32.mrb[0].mxu0
  %1690 = vmatprep.mubr.f32.mxu0 0.0
  %1691 = vmatmul.mubr.f32.gmra.mrb[0].mxu0 %v1588
  %v1692 = vpop.f32.mrb[0].mxu0
  %v1693 = vadd.f32 %v1567, %v1692
  %v1694 = vpop.f32.mrb[0].mxu0
  %1695 = vmatprep.mubr.f32.mxu0 0.0
  %1696 = vmatmul.mubr.f32.gmra.mrb[0].mxu0 %v1591
  %v1697 = vpop.f32.mrb[0].mxu0
  %v1698 = vadd.f32 %v1567, %v1697
  %v1699 = vpop.f32.mrb[0].mxu0
  %1700 = vmatprep.mubr.f32.mxu0 0.0
  %1701 = vmatmul.mubr.f32.gmra.mrb[0].mxu0 %v1594
  %v1702 = vpop.f32.mrb[0].mxu0
  %v1703 = vadd.f32 %v1567, %v1702
  %v1704 = vpop.f32.mrb[0].mxu0
  %1705 = vdwg.mxu0
  %1706 = vst [vmem:[%s9] sm:$0xff] %v1663
  %1707 = vst [vmem:[%s9 + $0x8] sm:$0xff] %v1668
  %1708 = vst [vmem:[%s9 + $0x10] sm:$0xff] %v1673
  %1709 = vst [vmem:[%s9 + $0x18] sm:$0xff] %v1678
  %1710 = vst [vmem:[%s9 + $0x20] sm:$0xff] %v1683
  %1711 = vst [vmem:[%s9 + $0x28] sm:$0xff] %v1688
  %1712 = vst [vmem:[%s9 + $0x30] sm:$0xff] %v1693
  %1713 = vst [vmem:[%s9 + $0x38] sm:$0xff] %v1698
  %1714 = vst [vmem:[%s9 + $0x40] sm:$0xff] %v1703
  // Predicated region
  $region38: #{cnn_to_rnn_forward.3} parent=0 // pred_check
    _
  $region39: #{cnn_to_rnn_forward.3} parent=0 // pred_check_branch
    %1716 = sbr.rel (0) target = $region41
  $region40: #{cnn_to_rnn_forward.3} parent=0 // pred_region
    _
  $region41: #{cnn_to_rnn_forward.3} parent=0 // pred_fallthru
    _
  // Predicated region
  $region42: #{cnn_to_rnn_forward.3} parent=0 // pred_check
    _
  $region43: #{cnn_to_rnn_forward.3} parent=0 // pred_check_branch
    %1718 = sbr.rel (0) target = $region45
  $region44: #{cnn_to_rnn_forward.3} parent=0 // pred_region
    _
  $region45: #{cnn_to_rnn_forward.3} parent=0 // pred_fallthru
    _

// kernel: cnn_to_rnn_forward.2
$region0: #{cnn_to_rnn_forward.2}
  #allocation0 [shape = 'u32[]', space=smem, size = 0x4, offset = 0x4, fixed_abs, tag = 'smem constant byte address 0x4 - core index']
  #allocation1 [shape = 'u32[144,128]{1,0:T(1,128)}', space=vmem, size = 0x12000, scoped, tag = 'internal scratch']
  %s0 = inlined_call_operand.vmem [shape: f32[2048,32], index: 0, kind: input, shape index: {}]
  %s1 = inlined_call_operand.vmem [shape: f32[32,64], index: 1, kind: input, shape index: {}]
  %s2 = inlined_call_operand.vmem [shape: f32[1,64], index: 2, kind: input, shape index: {}]
  %s3 = inlined_call_operand.vmem [shape: f32[64,32], index: 3, kind: input, shape index: {}]
  %s4 = inlined_call_operand.vmem [shape: f32[1,32], index: 4, kind: input, shape index: {}]
  %s5 = inlined_call_operand.vmem [shape: f32[8,32], index: 5, kind: output, shape index: {}]
  %s6 = sld [smem:[#allocation0]]
  $region30: #{cnn_to_rnn_forward.2} parent=0
    _
  %s8 = ssub.s32 1, %s6
  %s9 = scalar_select 0, %s8, %s6
  // Predicated region
  $region2: #{cnn_to_rnn_forward.2} parent=0 // pred_check
    _
  $region3: #{cnn_to_rnn_forward.2} parent=0 // pred_check_branch
    %11 = sbr.rel (0) target = $region5
  $region4: #{cnn_to_rnn_forward.2} parent=0 // pred_region
    _
  $region5: #{cnn_to_rnn_forward.2} parent=0 // pred_fallthru
    _
  // Predicated region
  $region6: #{cnn_to_rnn_forward.2} parent=0 // pred_check
    _
  $region7: #{cnn_to_rnn_forward.2} parent=0 // pred_check_branch
    %13 = sbr.rel (0) target = $region9
  $region8: #{cnn_to_rnn_forward.2} parent=0 // pred_region
    _
  $region9: #{cnn_to_rnn_forward.2} parent=0 // pred_fallthru
    _
  // Predicated region
  $region10: #{cnn_to_rnn_forward.2} parent=0 // pred_check
    _
  $region11: #{cnn_to_rnn_forward.2} parent=0 // pred_check_branch
    %15 = sbr.rel (0) target = $region13
  $region12: #{cnn_to_rnn_forward.2} parent=0 // pred_region
    _
  $region13: #{cnn_to_rnn_forward.2} parent=0 // pred_fallthru
    _
  // Predicated region
  $region14: #{cnn_to_rnn_forward.2} parent=0 // pred_check
    _
  $region15: #{cnn_to_rnn_forward.2} parent=0 // pred_check_branch
    %17 = sbr.rel (0) target = $region17
  $region16: #{cnn_to_rnn_forward.2} parent=0 // pred_region
    _
  $region17: #{cnn_to_rnn_forward.2} parent=0 // pred_fallthru
    _
  // Predicated region
  $region18: #{cnn_to_rnn_forward.2} parent=0 // pred_check
    _
  $region19: #{cnn_to_rnn_forward.2} parent=0 // pred_check_branch
    %19 = sbr.rel (0) target = $region21
  $region20: #{cnn_to_rnn_forward.2} parent=0 // pred_region
    _
  $region21: #{cnn_to_rnn_forward.2} parent=0 // pred_fallthru
    _
  %v20 = vld [vmem:[%s0] sm:$0xff]
  %v21 = vld [vmem:[%s0 + $0x8] sm:$0xff]
  %v22 = vld [vmem:[%s0 + $0x10] sm:$0xff]
  %v23 = vld [vmem:[%s0 + $0x18] sm:$0xff]
  %v24 = vld [vmem:[%s0 + $0x20] sm:$0xff]
  %v25 = vld [vmem:[%s0 + $0x28] sm:$0xff]
  %v26 = vld [vmem:[%s0 + $0x30] sm:$0xff]
  %v27 = vld [vmem:[%s0 + $0x38] sm:$0xff]
  %v28 = vld [vmem:[%s0 + $0x40] sm:$0xff]
  %v29 = vld [vmem:[%s0 + $0x48] sm:$0xff]
  %v30 = vld [vmem:[%s0 + $0x50] sm:$0xff]
  %v31 = vld [vmem:[%s0 + $0x58] sm:$0xff]
  %v32 = vld [vmem:[%s0 + $0x60] sm:$0xff]
  %v33 = vld [vmem:[%s0 + $0x68] sm:$0xff]
  %v34 = vld [vmem:[%s0 + $0x70] sm:$0xff]
  %v35 = vld [vmem:[%s0 + $0x78] sm:$0xff]
  %v36 = vld [vmem:[%s0 + $0x80] sm:$0xff]
  %v37 = vld [vmem:[%s0 + $0x88] sm:$0xff]
  %v38 = vld [vmem:[%s0 + $0x90] sm:$0xff]
  %v39 = vld [vmem:[%s0 + $0x98] sm:$0xff]
  %v40 = vld [vmem:[%s0 + $0xa0] sm:$0xff]
  %v41 = vld [vmem:[%s0 + $0xa8] sm:$0xff]
  %v42 = vld [vmem:[%s0 + $0xb0] sm:$0xff]
  %v43 = vld [vmem:[%s0 + $0xb8] sm:$0xff]
  %v44 = vld [vmem:[%s0 + $0xc0] sm:$0xff]
  %v45 = vld [vmem:[%s0 + $0xc8] sm:$0xff]
  %v46 = vld [vmem:[%s0 + $0xd0] sm:$0xff]
  %v47 = vld [vmem:[%s0 + $0xd8] sm:$0xff]
  %v48 = vld [vmem:[%s0 + $0xe0] sm:$0xff]
  %v49 = vld [vmem:[%s0 + $0xe8] sm:$0xff]
  %v50 = vld [vmem:[%s0 + $0xf0] sm:$0xff]
  %v51 = vld [vmem:[%s0 + $0xf8] sm:$0xff]
  %v52 = vld [vmem:[%s0 + $0x100] sm:$0xff]
  %v53 = vld [vmem:[%s0 + $0x108] sm:$0xff]
  %v54 = vld [vmem:[%s0 + $0x110] sm:$0xff]
  %v55 = vld [vmem:[%s0 + $0x118] sm:$0xff]
  %v56 = vld [vmem:[%s0 + $0x120] sm:$0xff]
  %v57 = vld [vmem:[%s0 + $0x128] sm:$0xff]
  %v58 = vld [vmem:[%s0 + $0x130] sm:$0xff]
  %v59 = vld [vmem:[%s0 + $0x138] sm:$0xff]
  %v60 = vld [vmem:[%s0 + $0x140] sm:$0xff]
  %v61 = vld [vmem:[%s0 + $0x148] sm:$0xff]
  %v62 = vld [vmem:[%s0 + $0x150] sm:$0xff]
  %v63 = vld [vmem:[%s0 + $0x158] sm:$0xff]
  %v64 = vld [vmem:[%s0 + $0x160] sm:$0xff]
  %v65 = vld [vmem:[%s0 + $0x168] sm:$0xff]
  %v66 = vld [vmem:[%s0 + $0x170] sm:$0xff]
  %v67 = vld [vmem:[%s0 + $0x178] sm:$0xff]
  %v68 = vld [vmem:[%s0 + $0x180] sm:$0xff]
  %v69 = vld [vmem:[%s0 + $0x188] sm:$0xff]
  %v70 = vld [vmem:[%s0 + $0x190] sm:$0xff]
  %v71 = vld [vmem:[%s0 + $0x198] sm:$0xff]
  %v72 = vld [vmem:[%s0 + $0x1a0] sm:$0xff]
  %v73 = vld [vmem:[%s0 + $0x1a8] sm:$0xff]
  %v74 = vld [vmem:[%s0 + $0x1b0] sm:$0xff]
  %v75 = vld [vmem:[%s0 + $0x1b8] sm:$0xff]
  %v76 = vld [vmem:[%s0 + $0x1c0] sm:$0xff]
  %v77 = vld [vmem:[%s0 + $0x1c8] sm:$0xff]
  %v78 = vld [vmem:[%s0 + $0x1d0] sm:$0xff]
  %v79 = vld [vmem:[%s0 + $0x1d8] sm:$0xff]
  %v80 = vld [vmem:[%s0 + $0x1e0] sm:$0xff]
  %v81 = vld [vmem:[%s0 + $0x1e8] sm:$0xff]
  %v82 = vld [vmem:[%s0 + $0x1f0] sm:$0xff]
  %v83 = vld [vmem:[%s0 + $0x1f8] sm:$0xff]
  %v84 = vld [vmem:[%s0 + $0x200] sm:$0xff]
  %v85 = vld [vmem:[%s0 + $0x208] sm:$0xff]
  %v86 = vld [vmem:[%s0 + $0x210] sm:$0xff]
  %v87 = vld [vmem:[%s0 + $0x218] sm:$0xff]
  %v88 = vld [vmem:[%s0 + $0x220] sm:$0xff]
  %v89 = vld [vmem:[%s0 + $0x228] sm:$0xff]
  %v90 = vld [vmem:[%s0 + $0x230] sm:$0xff]
  %v91 = vld [vmem:[%s0 + $0x238] sm:$0xff]
  %v92 = vld [vmem:[%s0 + $0x240] sm:$0xff]
  %v93 = vld [vmem:[%s0 + $0x248] sm:$0xff]
  %v94 = vld [vmem:[%s0 + $0x250] sm:$0xff]
  %v95 = vld [vmem:[%s0 + $0x258] sm:$0xff]
  %v96 = vld [vmem:[%s0 + $0x260] sm:$0xff]
  %v97 = vld [vmem:[%s0 + $0x268] sm:$0xff]
  %v98 = vld [vmem:[%s0 + $0x270] sm:$0xff]
  %v99 = vld [vmem:[%s0 + $0x278] sm:$0xff]
  %v100 = vld [vmem:[%s0 + $0x280] sm:$0xff]
  %v101 = vld [vmem:[%s0 + $0x288] sm:$0xff]
  %v102 = vld [vmem:[%s0 + $0x290] sm:$0xff]
  %v103 = vld [vmem:[%s0 + $0x298] sm:$0xff]
  %v104 = vld [vmem:[%s0 + $0x2a0] sm:$0xff]
  %v105 = vld [vmem:[%s0 + $0x2a8] sm:$0xff]
  %v106 = vld [vmem:[%s0 + $0x2b0] sm:$0xff]
  %v107 = vld [vmem:[%s0 + $0x2b8] sm:$0xff]
  %v108 = vld [vmem:[%s0 + $0x2c0] sm:$0xff]
  %v109 = vld [vmem:[%s0 + $0x2c8] sm:$0xff]
  %v110 = vld [vmem:[%s0 + $0x2d0] sm:$0xff]
  %v111 = vld [vmem:[%s0 + $0x2d8] sm:$0xff]
  %v112 = vld [vmem:[%s0 + $0x2e0] sm:$0xff]
  %v113 = vld [vmem:[%s0 + $0x2e8] sm:$0xff]
  %v114 = vld [vmem:[%s0 + $0x2f0] sm:$0xff]
  %v115 = vld [vmem:[%s0 + $0x2f8] sm:$0xff]
  %v116 = vld [vmem:[%s0 + $0x300] sm:$0xff]
  %v117 = vld [vmem:[%s0 + $0x308] sm:$0xff]
  %v118 = vld [vmem:[%s0 + $0x310] sm:$0xff]
  %v119 = vld [vmem:[%s0 + $0x318] sm:$0xff]
  %v120 = vld [vmem:[%s0 + $0x320] sm:$0xff]
  %v121 = vld [vmem:[%s0 + $0x328] sm:$0xff]
  %v122 = vld [vmem:[%s0 + $0x330] sm:$0xff]
  %v123 = vld [vmem:[%s0 + $0x338] sm:$0xff]
  %v124 = vld [vmem:[%s0 + $0x340] sm:$0xff]
  %v125 = vld [vmem:[%s0 + $0x348] sm:$0xff]
  %v126 = vld [vmem:[%s0 + $0x350] sm:$0xff]
  %v127 = vld [vmem:[%s0 + $0x358] sm:$0xff]
  %v128 = vld [vmem:[%s0 + $0x360] sm:$0xff]
  %v129 = vld [vmem:[%s0 + $0x368] sm:$0xff]
  %v130 = vld [vmem:[%s0 + $0x370] sm:$0xff]
  %v131 = vld [vmem:[%s0 + $0x378] sm:$0xff]
  %v132 = vld [vmem:[%s0 + $0x380] sm:$0xff]
  %v133 = vld [vmem:[%s0 + $0x388] sm:$0xff]
  %v134 = vld [vmem:[%s0 + $0x390] sm:$0xff]
  %v135 = vld [vmem:[%s0 + $0x398] sm:$0xff]
  %v136 = vld [vmem:[%s0 + $0x3a0] sm:$0xff]
  %v137 = vld [vmem:[%s0 + $0x3a8] sm:$0xff]
  %v138 = vld [vmem:[%s0 + $0x3b0] sm:$0xff]
  %v139 = vld [vmem:[%s0 + $0x3b8] sm:$0xff]
  %v140 = vld [vmem:[%s0 + $0x3c0] sm:$0xff]
  %v141 = vld [vmem:[%s0 + $0x3c8] sm:$0xff]
  %v142 = vld [vmem:[%s0 + $0x3d0] sm:$0xff]
  %v143 = vld [vmem:[%s0 + $0x3d8] sm:$0xff]
  %v144 = vld [vmem:[%s0 + $0x3e0] sm:$0xff]
  %v145 = vld [vmem:[%s0 + $0x3e8] sm:$0xff]
  %v146 = vld [vmem:[%s0 + $0x3f0] sm:$0xff]
  %v147 = vld [vmem:[%s0 + $0x3f8] sm:$0xff]
  %v148 = vld [vmem:[%s0 + $0x400] sm:$0xff]
  %v149 = vld [vmem:[%s0 + $0x408] sm:$0xff]
  %v150 = vld [vmem:[%s0 + $0x410] sm:$0xff]
  %v151 = vld [vmem:[%s0 + $0x418] sm:$0xff]
  %v152 = vld [vmem:[%s0 + $0x420] sm:$0xff]
  %v153 = vld [vmem:[%s0 + $0x428] sm:$0xff]
  %v154 = vld [vmem:[%s0 + $0x430] sm:$0xff]
  %v155 = vld [vmem:[%s0 + $0x438] sm:$0xff]
  %v156 = vld [vmem:[%s0 + $0x440] sm:$0xff]
  %v157 = vld [vmem:[%s0 + $0x448] sm:$0xff]
  %v158 = vld [vmem:[%s0 + $0x450] sm:$0xff]
  %v159 = vld [vmem:[%s0 + $0x458] sm:$0xff]
  %v160 = vld [vmem:[%s0 + $0x460] sm:$0xff]
  %v161 = vld [vmem:[%s0 + $0x468] sm:$0xff]
  %v162 = vld [vmem:[%s0 + $0x470] sm:$0xff]
  %v163 = vld [vmem:[%s0 + $0x478] sm:$0xff]
  %v164 = vld [vmem:[%s0 + $0x480] sm:$0xff]
  %v165 = vld [vmem:[%s0 + $0x488] sm:$0xff]
  %v166 = vld [vmem:[%s0 + $0x490] sm:$0xff]
  %v167 = vld [vmem:[%s0 + $0x498] sm:$0xff]
  %v168 = vld [vmem:[%s0 + $0x4a0] sm:$0xff]
  %v169 = vld [vmem:[%s0 + $0x4a8] sm:$0xff]
  %v170 = vld [vmem:[%s0 + $0x4b0] sm:$0xff]
  %v171 = vld [vmem:[%s0 + $0x4b8] sm:$0xff]
  %v172 = vld [vmem:[%s0 + $0x4c0] sm:$0xff]
  %v173 = vld [vmem:[%s0 + $0x4c8] sm:$0xff]
  %v174 = vld [vmem:[%s0 + $0x4d0] sm:$0xff]
  %v175 = vld [vmem:[%s0 + $0x4d8] sm:$0xff]
  %v176 = vld [vmem:[%s0 + $0x4e0] sm:$0xff]
  %v177 = vld [vmem:[%s0 + $0x4e8] sm:$0xff]
  %v178 = vld [vmem:[%s0 + $0x4f0] sm:$0xff]
  %v179 = vld [vmem:[%s0 + $0x4f8] sm:$0xff]
  %v180 = vld [vmem:[%s0 + $0x500] sm:$0xff]
  %v181 = vld [vmem:[%s0 + $0x508] sm:$0xff]
  %v182 = vld [vmem:[%s0 + $0x510] sm:$0xff]
  %v183 = vld [vmem:[%s0 + $0x518] sm:$0xff]
  %v184 = vld [vmem:[%s0 + $0x520] sm:$0xff]
  %v185 = vld [vmem:[%s0 + $0x528] sm:$0xff]
  %v186 = vld [vmem:[%s0 + $0x530] sm:$0xff]
  %v187 = vld [vmem:[%s0 + $0x538] sm:$0xff]
  %v188 = vld [vmem:[%s0 + $0x540] sm:$0xff]
  %v189 = vld [vmem:[%s0 + $0x548] sm:$0xff]
  %v190 = vld [vmem:[%s0 + $0x550] sm:$0xff]
  %v191 = vld [vmem:[%s0 + $0x558] sm:$0xff]
  %v192 = vld [vmem:[%s0 + $0x560] sm:$0xff]
  %v193 = vld [vmem:[%s0 + $0x568] sm:$0xff]
  %v194 = vld [vmem:[%s0 + $0x570] sm:$0xff]
  %v195 = vld [vmem:[%s0 + $0x578] sm:$0xff]
  %v196 = vld [vmem:[%s0 + $0x580] sm:$0xff]
  %v197 = vld [vmem:[%s0 + $0x588] sm:$0xff]
  %v198 = vld [vmem:[%s0 + $0x590] sm:$0xff]
  %v199 = vld [vmem:[%s0 + $0x598] sm:$0xff]
  %v200 = vld [vmem:[%s0 + $0x5a0] sm:$0xff]
  %v201 = vld [vmem:[%s0 + $0x5a8] sm:$0xff]
  %v202 = vld [vmem:[%s0 + $0x5b0] sm:$0xff]
  %v203 = vld [vmem:[%s0 + $0x5b8] sm:$0xff]
  %v204 = vld [vmem:[%s0 + $0x5c0] sm:$0xff]
  %v205 = vld [vmem:[%s0 + $0x5c8] sm:$0xff]
  %v206 = vld [vmem:[%s0 + $0x5d0] sm:$0xff]
  %v207 = vld [vmem:[%s0 + $0x5d8] sm:$0xff]
  %v208 = vld [vmem:[%s0 + $0x5e0] sm:$0xff]
  %v209 = vld [vmem:[%s0 + $0x5e8] sm:$0xff]
  %v210 = vld [vmem:[%s0 + $0x5f0] sm:$0xff]
  %v211 = vld [vmem:[%s0 + $0x5f8] sm:$0xff]
  %v212 = vld [vmem:[%s0 + $0x600] sm:$0xff]
  %v213 = vld [vmem:[%s0 + $0x608] sm:$0xff]
  %v214 = vld [vmem:[%s0 + $0x610] sm:$0xff]
  %v215 = vld [vmem:[%s0 + $0x618] sm:$0xff]
  %v216 = vld [vmem:[%s0 + $0x620] sm:$0xff]
  %v217 = vld [vmem:[%s0 + $0x628] sm:$0xff]
  %v218 = vld [vmem:[%s0 + $0x630] sm:$0xff]
  %v219 = vld [vmem:[%s0 + $0x638] sm:$0xff]
  %v220 = vld [vmem:[%s0 + $0x640] sm:$0xff]
  %v221 = vld [vmem:[%s0 + $0x648] sm:$0xff]
  %v222 = vld [vmem:[%s0 + $0x650] sm:$0xff]
  %v223 = vld [vmem:[%s0 + $0x658] sm:$0xff]
  %v224 = vld [vmem:[%s0 + $0x660] sm:$0xff]
  %v225 = vld [vmem:[%s0 + $0x668] sm:$0xff]
  %v226 = vld [vmem:[%s0 + $0x670] sm:$0xff]
  %v227 = vld [vmem:[%s0 + $0x678] sm:$0xff]
  %v228 = vld [vmem:[%s0 + $0x680] sm:$0xff]
  %v229 = vld [vmem:[%s0 + $0x688] sm:$0xff]
  %v230 = vld [vmem:[%s0 + $0x690] sm:$0xff]
  %v231 = vld [vmem:[%s0 + $0x698] sm:$0xff]
  %v232 = vld [vmem:[%s0 + $0x6a0] sm:$0xff]
  %v233 = vld [vmem:[%s0 + $0x6a8] sm:$0xff]
  %v234 = vld [vmem:[%s0 + $0x6b0] sm:$0xff]
  %v235 = vld [vmem:[%s0 + $0x6b8] sm:$0xff]
  %v236 = vld [vmem:[%s0 + $0x6c0] sm:$0xff]
  %v237 = vld [vmem:[%s0 + $0x6c8] sm:$0xff]
  %v238 = vld [vmem:[%s0 + $0x6d0] sm:$0xff]
  %v239 = vld [vmem:[%s0 + $0x6d8] sm:$0xff]
  %v240 = vld [vmem:[%s0 + $0x6e0] sm:$0xff]
  %v241 = vld [vmem:[%s0 + $0x6e8] sm:$0xff]
  %v242 = vld [vmem:[%s0 + $0x6f0] sm:$0xff]
  %v243 = vld [vmem:[%s0 + $0x6f8] sm:$0xff]
  %v244 = vld [vmem:[%s0 + $0x700] sm:$0xff]
  %v245 = vld [vmem:[%s0 + $0x708] sm:$0xff]
  %v246 = vld [vmem:[%s0 + $0x710] sm:$0xff]
  %v247 = vld [vmem:[%s0 + $0x718] sm:$0xff]
  %v248 = vld [vmem:[%s0 + $0x720] sm:$0xff]
  %v249 = vld [vmem:[%s0 + $0x728] sm:$0xff]
  %v250 = vld [vmem:[%s0 + $0x730] sm:$0xff]
  %v251 = vld [vmem:[%s0 + $0x738] sm:$0xff]
  %v252 = vld [vmem:[%s0 + $0x740] sm:$0xff]
  %v253 = vld [vmem:[%s0 + $0x748] sm:$0xff]
  %v254 = vld [vmem:[%s0 + $0x750] sm:$0xff]
  %v255 = vld [vmem:[%s0 + $0x758] sm:$0xff]
  %v256 = vld [vmem:[%s0 + $0x760] sm:$0xff]
  %v257 = vld [vmem:[%s0 + $0x768] sm:$0xff]
  %v258 = vld [vmem:[%s0 + $0x770] sm:$0xff]
  %v259 = vld [vmem:[%s0 + $0x778] sm:$0xff]
  %v260 = vld [vmem:[%s0 + $0x780] sm:$0xff]
  %v261 = vld [vmem:[%s0 + $0x788] sm:$0xff]
  %v262 = vld [vmem:[%s0 + $0x790] sm:$0xff]
  %v263 = vld [vmem:[%s0 + $0x798] sm:$0xff]
  %v264 = vld [vmem:[%s0 + $0x7a0] sm:$0xff]
  %v265 = vld [vmem:[%s0 + $0x7a8] sm:$0xff]
  %v266 = vld [vmem:[%s0 + $0x7b0] sm:$0xff]
  %v267 = vld [vmem:[%s0 + $0x7b8] sm:$0xff]
  %v268 = vld [vmem:[%s0 + $0x7c0] sm:$0xff]
  %v269 = vld [vmem:[%s0 + $0x7c8] sm:$0xff]
  %v270 = vld [vmem:[%s0 + $0x7d0] sm:$0xff]
  %v271 = vld [vmem:[%s0 + $0x7d8] sm:$0xff]
  %v272 = vld [vmem:[%s0 + $0x7e0] sm:$0xff]
  %v273 = vld [vmem:[%s0 + $0x7e8] sm:$0xff]
  %v274 = vld [vmem:[%s0 + $0x7f0] sm:$0xff]
  %v275 = vld [vmem:[%s0 + $0x7f8] sm:$0xff]
  %v276 = vld [vmem:[%s1] sm:$0xff]
  %v277 = vld [vmem:[%s1 + $0x8] sm:$0xff]
  %v278 = vld [vmem:[%s1 + $0x10] sm:$0xff]
  %v279 = vld [vmem:[%s1 + $0x18] sm:$0xff]
  %v280 = vld [vmem:[%s2] sm:$0x1]
  %v282 = vlaneseq
  %v283 = vshrl.u32 %v282, 7
  %v284 = vsub.s32 0, %v283
  %v285 = vrot.slane %v280, %v284
  %vm287 = vcmask 261120
  %v289 = vsel %vm287, %v20, 0
  %v292 = vsel %vm287, %v21, 0
  %v295 = vsel %vm287, %v22, 0
  %v298 = vsel %vm287, %v23, 0
  %v301 = vsel %vm287, %v24, 0
  %v304 = vsel %vm287, %v25, 0
  %v307 = vsel %vm287, %v26, 0
  %v310 = vsel %vm287, %v27, 0
  %v313 = vsel %vm287, %v28, 0
  %v316 = vsel %vm287, %v29, 0
  %v319 = vsel %vm287, %v30, 0
  %v322 = vsel %vm287, %v31, 0
  %v325 = vsel %vm287, %v32, 0
  %v328 = vsel %vm287, %v33, 0
  %v331 = vsel %vm287, %v34, 0
  %v334 = vsel %vm287, %v35, 0
  %v337 = vsel %vm287, %v36, 0
  %v340 = vsel %vm287, %v37, 0
  %v343 = vsel %vm287, %v38, 0
  %v346 = vsel %vm287, %v39, 0
  %v349 = vsel %vm287, %v40, 0
  %v352 = vsel %vm287, %v41, 0
  %v355 = vsel %vm287, %v42, 0
  %v358 = vsel %vm287, %v43, 0
  %v361 = vsel %vm287, %v44, 0
  %v364 = vsel %vm287, %v45, 0
  %v367 = vsel %vm287, %v46, 0
  %v370 = vsel %vm287, %v47, 0
  %v373 = vsel %vm287, %v48, 0
  %v376 = vsel %vm287, %v49, 0
  %v379 = vsel %vm287, %v50, 0
  %v382 = vsel %vm287, %v51, 0
  %v385 = vsel %vm287, %v52, 0
  %v388 = vsel %vm287, %v53, 0
  %v391 = vsel %vm287, %v54, 0
  %v394 = vsel %vm287, %v55, 0
  %v397 = vsel %vm287, %v56, 0
  %v400 = vsel %vm287, %v57, 0
  %v403 = vsel %vm287, %v58, 0
  %v406 = vsel %vm287, %v59, 0
  %v409 = vsel %vm287, %v60, 0
  %v412 = vsel %vm287, %v61, 0
  %v415 = vsel %vm287, %v62, 0
  %v418 = vsel %vm287, %v63, 0
  %v421 = vsel %vm287, %v64, 0
  %v424 = vsel %vm287, %v65, 0
  %v427 = vsel %vm287, %v66, 0
  %v430 = vsel %vm287, %v67, 0
  %v433 = vsel %vm287, %v68, 0
  %v436 = vsel %vm287, %v69, 0
  %v439 = vsel %vm287, %v70, 0
  %v442 = vsel %vm287, %v71, 0
  %v445 = vsel %vm287, %v72, 0
  %v448 = vsel %vm287, %v73, 0
  %v451 = vsel %vm287, %v74, 0
  %v454 = vsel %vm287, %v75, 0
  %v457 = vsel %vm287, %v76, 0
  %v460 = vsel %vm287, %v77, 0
  %v463 = vsel %vm287, %v78, 0
  %v466 = vsel %vm287, %v79, 0
  %v469 = vsel %vm287, %v80, 0
  %v472 = vsel %vm287, %v81, 0
  %v475 = vsel %vm287, %v82, 0
  %v478 = vsel %vm287, %v83, 0
  %v481 = vsel %vm287, %v84, 0
  %v484 = vsel %vm287, %v85, 0
  %v487 = vsel %vm287, %v86, 0
  %v490 = vsel %vm287, %v87, 0
  %v493 = vsel %vm287, %v88, 0
  %v496 = vsel %vm287, %v89, 0
  %v499 = vsel %vm287, %v90, 0
  %v502 = vsel %vm287, %v91, 0
  %v505 = vsel %vm287, %v92, 0
  %v508 = vsel %vm287, %v93, 0
  %v511 = vsel %vm287, %v94, 0
  %v514 = vsel %vm287, %v95, 0
  %v517 = vsel %vm287, %v96, 0
  %v520 = vsel %vm287, %v97, 0
  %v523 = vsel %vm287, %v98, 0
  %v526 = vsel %vm287, %v99, 0
  %v529 = vsel %vm287, %v100, 0
  %v532 = vsel %vm287, %v101, 0
  %v535 = vsel %vm287, %v102, 0
  %v538 = vsel %vm287, %v103, 0
  %v541 = vsel %vm287, %v104, 0
  %v544 = vsel %vm287, %v105, 0
  %v547 = vsel %vm287, %v106, 0
  %v550 = vsel %vm287, %v107, 0
  %v553 = vsel %vm287, %v108, 0
  %v556 = vsel %vm287, %v109, 0
  %v559 = vsel %vm287, %v110, 0
  %v562 = vsel %vm287, %v111, 0
  %v565 = vsel %vm287, %v112, 0
  %v568 = vsel %vm287, %v113, 0
  %v571 = vsel %vm287, %v114, 0
  %v574 = vsel %vm287, %v115, 0
  %v577 = vsel %vm287, %v116, 0
  %v580 = vsel %vm287, %v117, 0
  %v583 = vsel %vm287, %v118, 0
  %v586 = vsel %vm287, %v119, 0
  %v589 = vsel %vm287, %v120, 0
  %v592 = vsel %vm287, %v121, 0
  %v595 = vsel %vm287, %v122, 0
  %v598 = vsel %vm287, %v123, 0
  %v601 = vsel %vm287, %v124, 0
  %v604 = vsel %vm287, %v125, 0
  %v607 = vsel %vm287, %v126, 0
  %v610 = vsel %vm287, %v127, 0
  %v613 = vsel %vm287, %v128, 0
  %v616 = vsel %vm287, %v129, 0
  %v619 = vsel %vm287, %v130, 0
  %v622 = vsel %vm287, %v131, 0
  %v625 = vsel %vm287, %v132, 0
  %v628 = vsel %vm287, %v133, 0
  %v631 = vsel %vm287, %v134, 0
  %v634 = vsel %vm287, %v135, 0
  %v637 = vsel %vm287, %v136, 0
  %v640 = vsel %vm287, %v137, 0
  %v643 = vsel %vm287, %v138, 0
  %v646 = vsel %vm287, %v139, 0
  %v649 = vsel %vm287, %v140, 0
  %v652 = vsel %vm287, %v141, 0
  %v655 = vsel %vm287, %v142, 0
  %v658 = vsel %vm287, %v143, 0
  %v661 = vsel %vm287, %v144, 0
  %v664 = vsel %vm287, %v145, 0
  %v667 = vsel %vm287, %v146, 0
  %v670 = vsel %vm287, %v147, 0
  %v673 = vsel %vm287, %v148, 0
  %v676 = vsel %vm287, %v149, 0
  %v679 = vsel %vm287, %v150, 0
  %v682 = vsel %vm287, %v151, 0
  %v685 = vsel %vm287, %v152, 0
  %v688 = vsel %vm287, %v153, 0
  %v691 = vsel %vm287, %v154, 0
  %v694 = vsel %vm287, %v155, 0
  %v697 = vsel %vm287, %v156, 0
  %v700 = vsel %vm287, %v157, 0
  %v703 = vsel %vm287, %v158, 0
  %v706 = vsel %vm287, %v159, 0
  %v709 = vsel %vm287, %v160, 0
  %v712 = vsel %vm287, %v161, 0
  %v715 = vsel %vm287, %v162, 0
  %v718 = vsel %vm287, %v163, 0
  %v721 = vsel %vm287, %v164, 0
  %v724 = vsel %vm287, %v165, 0
  %v727 = vsel %vm287, %v166, 0
  %v730 = vsel %vm287, %v167, 0
  %v733 = vsel %vm287, %v168, 0
  %v736 = vsel %vm287, %v169, 0
  %v739 = vsel %vm287, %v170, 0
  %v742 = vsel %vm287, %v171, 0
  %v745 = vsel %vm287, %v172, 0
  %v748 = vsel %vm287, %v173, 0
  %v751 = vsel %vm287, %v174, 0
  %v754 = vsel %vm287, %v175, 0
  %v757 = vsel %vm287, %v176, 0
  %v760 = vsel %vm287, %v177, 0
  %v763 = vsel %vm287, %v178, 0
  %v766 = vsel %vm287, %v179, 0
  %v769 = vsel %vm287, %v180, 0
  %v772 = vsel %vm287, %v181, 0
  %v775 = vsel %vm287, %v182, 0
  %v778 = vsel %vm287, %v183, 0
  %v781 = vsel %vm287, %v184, 0
  %v784 = vsel %vm287, %v185, 0
  %v787 = vsel %vm287, %v186, 0
  %v790 = vsel %vm287, %v187, 0
  %v793 = vsel %vm287, %v188, 0
  %v796 = vsel %vm287, %v189, 0
  %v799 = vsel %vm287, %v190, 0
  %v802 = vsel %vm287, %v191, 0
  %v805 = vsel %vm287, %v192, 0
  %v808 = vsel %vm287, %v193, 0
  %v811 = vsel %vm287, %v194, 0
  %v814 = vsel %vm287, %v195, 0
  %v817 = vsel %vm287, %v196, 0
  %v820 = vsel %vm287, %v197, 0
  %v823 = vsel %vm287, %v198, 0
  %v826 = vsel %vm287, %v199, 0
  %v829 = vsel %vm287, %v200, 0
  %v832 = vsel %vm287, %v201, 0
  %v835 = vsel %vm287, %v202, 0
  %v838 = vsel %vm287, %v203, 0
  %v841 = vsel %vm287, %v204, 0
  %v844 = vsel %vm287, %v205, 0
  %v847 = vsel %vm287, %v206, 0
  %v850 = vsel %vm287, %v207, 0
  %v853 = vsel %vm287, %v208, 0
  %v856 = vsel %vm287, %v209, 0
  %v859 = vsel %vm287, %v210, 0
  %v862 = vsel %vm287, %v211, 0
  %v865 = vsel %vm287, %v212, 0
  %v868 = vsel %vm287, %v213, 0
  %v871 = vsel %vm287, %v214, 0
  %v874 = vsel %vm287, %v215, 0
  %v877 = vsel %vm287, %v216, 0
  %v880 = vsel %vm287, %v217, 0
  %v883 = vsel %vm287, %v218, 0
  %v886 = vsel %vm287, %v219, 0
  %v889 = vsel %vm287, %v220, 0
  %v892 = vsel %vm287, %v221, 0
  %v895 = vsel %vm287, %v222, 0
  %v898 = vsel %vm287, %v223, 0
  %v901 = vsel %vm287, %v224, 0
  %v904 = vsel %vm287, %v225, 0
  %v907 = vsel %vm287, %v226, 0
  %v910 = vsel %vm287, %v227, 0
  %v913 = vsel %vm287, %v228, 0
  %v916 = vsel %vm287, %v229, 0
  %v919 = vsel %vm287, %v230, 0
  %v922 = vsel %vm287, %v231, 0
  %v925 = vsel %vm287, %v232, 0
  %v928 = vsel %vm287, %v233, 0
  %v931 = vsel %vm287, %v234, 0
  %v934 = vsel %vm287, %v235, 0
  %v937 = vsel %vm287, %v236, 0
  %v940 = vsel %vm287, %v237, 0
  %v943 = vsel %vm287, %v238, 0
  %v946 = vsel %vm287, %v239, 0
  %v949 = vsel %vm287, %v240, 0
  %v952 = vsel %vm287, %v241, 0
  %v955 = vsel %vm287, %v242, 0
  %v958 = vsel %vm287, %v243, 0
  %v961 = vsel %vm287, %v244, 0
  %v964 = vsel %vm287, %v245, 0
  %v967 = vsel %vm287, %v246, 0
  %v970 = vsel %vm287, %v247, 0
  %v973 = vsel %vm287, %v248, 0
  %v976 = vsel %vm287, %v249, 0
  %v979 = vsel %vm287, %v250, 0
  %v982 = vsel %vm287, %v251, 0
  %v985 = vsel %vm287, %v252, 0
  %v988 = vsel %vm287, %v253, 0
  %v991 = vsel %vm287, %v254, 0
  %v994 = vsel %vm287, %v255, 0
  %v997 = vsel %vm287, %v256, 0
  %v1000 = vsel %vm287, %v257, 0
  %v1003 = vsel %vm287, %v258, 0
  %v1006 = vsel %vm287, %v259, 0
  %v1009 = vsel %vm287, %v260, 0
  %v1012 = vsel %vm287, %v261, 0
  %v1015 = vsel %vm287, %v262, 0
  %v1018 = vsel %vm287, %v263, 0
  %v1021 = vsel %vm287, %v264, 0
  %v1024 = vsel %vm287, %v265, 0
  %v1027 = vsel %vm287, %v266, 0
  %v1030 = vsel %vm287, %v267, 0
  %v1033 = vsel %vm287, %v268, 0
  %v1036 = vsel %vm287, %v269, 0
  %v1039 = vsel %vm287, %v270, 0
  %v1042 = vsel %vm287, %v271, 0
  %v1045 = vsel %vm287, %v272, 0
  %v1048 = vsel %vm287, %v273, 0
  %v1051 = vsel %vm287, %v274, 0
  %v1054 = vsel %vm287, %v275, 0
  %1056 = vmatprep.subr.mxu0 0.0
  %1057 = vmatpush1.msra.mxu0 %v276
  %1058 = vmatprep.subr.mxu0 0.0
  %1059 = vmatpush1.msra.mxu0 %v277
  %1060 = vmatprep.subr.mxu0 0.0
  %1061 = vmatpush1.msra.mxu0 %v278
  %1062 = vmatprep.subr.mxu0 0.0
  %1063 = vmatpush1.msra.mxu0 %v279
  %1064 = vmatprep.subr.mxu0 0.0
  %1065 = vmatpush1.msra.mxu0 0.0
  %1066 = vmatprep.subr.mxu0 0.0
  %1067 = vmatpush1.msra.mxu0 0.0
  %1068 = vmatprep.subr.mxu0 0.0
  %1069 = vmatpush1.msra.mxu0 0.0
  %1070 = vmatprep.subr.mxu0 0.0
  %1071 = vmatpush1.msra.mxu0 0.0
  %1072 = vmatprep.subr.mxu0 0.0
  %1073 = vmatpush1.msra.mxu0 0.0
  %1074 = vmatprep.subr.mxu0 0.0
  %1075 = vmatpush1.msra.mxu0 0.0
  %1076 = vmatprep.subr.mxu0 0.0
  %1077 = vmatpush1.msra.mxu0 0.0
  %1078 = vmatprep.subr.mxu0 0.0
  %1079 = vmatpush1.msra.mxu0 0.0
  %1080 = vmatprep.subr.mxu0 0.0
  %1081 = vmatpush1.msra.mxu0 0.0
  %1082 = vmatprep.subr.mxu0 0.0
  %1083 = vmatpush1.msra.mxu0 0.0
  %1084 = vmatprep.subr.mxu0 0.0
  %1085 = vmatpush1.msra.mxu0 0.0
  %1086 = vmatprep.subr.mxu0 0.0
  %1087 = vmatpush1.msra.mxu0 0.0
  %1088 = vmatprep.subr.mxu0 0.0
  %1089 = vmatpush1.msra.mxu0 0.0
  %1090 = vmatprep.subr.mxu0 0.0
  %1091 = vmatpush1.msra.mxu0 0.0
  %1092 = vmatprep.subr.mxu0 0.0
  %1093 = vmatpush1.msra.mxu0 0.0
  %1094 = vmatprep.subr.mxu0 0.0
  %1095 = vmatpush1.msra.mxu0 0.0
  %1096 = vmatprep.subr.mxu0 0.0
  %1097 = vmatpush1.msra.mxu0 0.0
  %1098 = vmatprep.subr.mxu0 0.0
  %1099 = vmatpush1.msra.mxu0 0.0
  %1100 = vmatprep.subr.mxu0 0.0
  %1101 = vmatpush1.msra.mxu0 0.0
  %1102 = vmatprep.subr.mxu0 0.0
  %1103 = vmatpush1.msra.mxu0 0.0
  %1104 = vmatprep.subr.mxu0 0.0
  %1105 = vmatpush1.msra.mxu0 0.0
  %1106 = vmatprep.subr.mxu0 0.0
  %1107 = vmatpush1.msra.mxu0 0.0
  %1108 = vmatprep.subr.mxu0 0.0
  %1109 = vmatpush1.msra.mxu0 0.0
  %1110 = vmatprep.subr.mxu0 0.0
  %1111 = vmatpush1.msra.mxu0 0.0
  %1112 = vmatprep.subr.mxu0 0.0
  %1113 = vmatpush1.msra.mxu0 0.0
  %1114 = vmatprep.subr.mxu0 0.0
  %1115 = vmatpush1.msra.mxu0 0.0
  %1116 = vmatprep.subr.mxu0 0.0
  %1117 = vmatpush1.msra.mxu0 0.0
  %1118 = vmatprep.subr.mxu0 0.0
  %1119 = vmatpush1.msra.mxu0 0.0
  %1120 = vmatprep.mubr.f32.mxu0 0.0
  %1121 = vmatmul.mubr.f32.gmra.mrb[0].mxu0 %v289
  %v1122 = vpop.f32.mrb[0].mxu0
  %v1123 = vadd.f32 %v285, %v1122
  %v1124 = vpop.f32.mrb[0].mxu0
  %1125 = vmatprep.mubr.f32.mxu0 0.0
  %1126 = vmatmul.mubr.f32.gmra.mrb[0].mxu0 %v292
  %v1127 = vpop.f32.mrb[0].mxu0
  %v1128 = vadd.f32 %v285, %v1127
  %v1129 = vpop.f32.mrb[0].mxu0
  %1130 = vmatprep.mubr.f32.mxu0 0.0
  %1131 = vmatmul.mubr.f32.gmra.mrb[0].mxu0 %v295
  %v1132 = vpop.f32.mrb[0].mxu0
  %v1133 = vadd.f32 %v285, %v1132
  %v1134 = vpop.f32.mrb[0].mxu0
  %1135 = vmatprep.mubr.f32.mxu0 0.0
  %1136 = vmatmul.mubr.f32.gmra.mrb[0].mxu0 %v298
  %v1137 = vpop.f32.mrb[0].mxu0
  %v1138 = vadd.f32 %v285, %v1137
  %v1139 = vpop.f32.mrb[0].mxu0
  %1140 = vmatprep.mubr.f32.mxu0 0.0
  %1141 = vmatmul.mubr.f32.gmra.mrb[0].mxu0 %v301
  %v1142 = vpop.f32.mrb[0].mxu0
  %v1143 = vadd.f32 %v285, %v1142
  %v1144 = vpop.f32.mrb[0].mxu0
  %1145 = vmatprep.mubr.f32.mxu0 0.0
  %1146 = vmatmul.mubr.f32.gmra.mrb[0].mxu0 %v304
  %v1147 = vpop.f32.mrb[0].mxu0
  %v1148 = vadd.f32 %v285, %v1147
  %v1149 = vpop.f32.mrb[0].mxu0
  %1150 = vmatprep.mubr.f32.mxu0 0.0
  %1151 = vmatmul.mubr.f32.gmra.mrb[0].mxu0 %v307
  %v1152 = vpop.f32.mrb[0].mxu0
  %v1153 = vadd.f32 %v285, %v1152
  %v1154 = vpop.f32.mrb[0].mxu0
  %1155 = vmatprep.mubr.f32.mxu0 0.0
  %1156 = vmatmul.mubr.f32.gmra.mrb[0].mxu0 %v310
  %v1157 = vpop.f32.mrb[0].mxu0
  %v1158 = vadd.f32 %v285, %v1157
  %v1159 = vpop.f32.mrb[0].mxu0
  %1160 = vmatprep.mubr.f32.mxu0 0.0
  %1161 = vmatmul.mubr.f32.gmra.mrb[0].mxu0 %v313
  %v1162 = vpop.f32.mrb[0].mxu0
  %v1163 = vadd.f32 %v285, %v1162
  %v1164 = vpop.f32.mrb[0].mxu0
  %1165 = vmatprep.mubr.f32.mxu0 0.0
  %1166 = vmatmul.mubr.f32.gmra.mrb[0].mxu0 %v316
  %v1167 = vpop.f32.mrb[0].mxu0
  %v1168 = vadd.f32 %v285, %v1167
  %v1169 = vpop.f32.mrb[0].mxu0
  %1170 = vmatprep.mubr.f32.mxu0 0.0
  %1171 = vmatmul.mubr.f32.gmra.mrb[0].mxu0 %v319
  %v1172 = vpop.f32.mrb[0].mxu0
  %v1173 = vadd.f32 %v285, %v1172
  %v1174 = vpop.f32.mrb[0].mxu0
  %1175 = vmatprep.mubr.f32.mxu0 0.0
  %1176 = vmatmul.mubr.f32.gmra.mrb[0].mxu0 %v322
  %v1177 = vpop.f32.mrb[0].mxu0
  %v1178 = vadd.f32 %v285, %v1177
  %v1179 = vpop.f32.mrb[0].mxu0
  %1180 = vmatprep.mubr.f32.mxu0 0.0
  %1181 = vmatmul.mubr.f32.gmra.mrb[0].mxu0 %v325
  %v1182 = vpop.f32.mrb[0].mxu0
  %v1183 = vadd.f32 %v285, %v1182
  %v1184 = vpop.f32.mrb[0].mxu0
  %1185 = vmatprep.mubr.f32.mxu0 0.0
  %1186 = vmatmul.mubr.f32.gmra.mrb[0].mxu0 %v328
  %v1187 = vpop.f32.mrb[0].mxu0
  %v1188 = vadd.f32 %v285, %v1187
  %v1189 = vpop.f32.mrb[0].mxu0
  %1190 = vmatprep.mubr.f32.mxu0 0.0
  %1191 = vmatmul.mubr.f32.gmra.mrb[0].mxu0 %v331
  %v1192 = vpop.f32.mrb[0].mxu0
  %v1193 = vadd.f32 %v285, %v1192
  %v1194 = vpop.f32.mrb[0].mxu0
  %1195 = vmatprep.mubr.f32.mxu0 0.0
  %1196 = vmatmul.mubr.f32.gmra.mrb[0].mxu0 %v334
  %v1197 = vpop.f32.mrb[0].mxu0
  %v1198 = vadd.f32 %v285, %v1197
  %v1199 = vpop.f32.mrb[0].mxu0
  %1200 = vmatprep.mubr.f32.mxu0 0.0
  %1201 = vmatmul.mubr.f32.gmra.mrb[0].mxu0 %v337
  %v1202 = vpop.f32.mrb[0].mxu0
  %v1203 = vadd.f32 %v285, %v1202
  %v1204 = vpop.f32.mrb[0].mxu0
  %1205 = vmatprep.mubr.f32.mxu0 0.0
  %1206 = vmatmul.mubr.f32.gmra.mrb[0].mxu0 %v340
  %v1207 = vpop.f32.mrb[0].mxu0
  %v1208 = vadd.f32 %v285, %v1207
  %v1209 = vpop.f32.mrb[0].mxu0
  %1210 = vmatprep.mubr.f32.mxu0 0.0
  %1211 = vmatmul.mubr.f32.gmra.mrb[0].mxu0 %v343
  %v1212 = vpop.f32.mrb[0].mxu0
  %v1213 = vadd.f32 %v285, %v1212
  %v1214 = vpop.f32.mrb[0].mxu0
  %1215 = vmatprep.mubr.f32.mxu0 0.0
  %1216 = vmatmul.mubr.f32.gmra.mrb[0].mxu0 %v346
  %v1217 = vpop.f32.mrb[0].mxu0
  %v1218 = vadd.f32 %v285, %v1217
  %v1219 = vpop.f32.mrb[0].mxu0
  %1220 = vmatprep.mubr.f32.mxu0 0.0
  %1221 = vmatmul.mubr.f32.gmra.mrb[0].mxu0 %v349
  %v1222 = vpop.f32.mrb[0].mxu0
  %v1223 = vadd.f32 %v285, %v1222
  %v1224 = vpop.f32.mrb[0].mxu0
  %1225 = vmatprep.mubr.f32.mxu0 0.0
  %1226 = vmatmul.mubr.f32.gmra.mrb[0].mxu0 %v352
  %v1227 = vpop.f32.mrb[0].mxu0
  %v1228 = vadd.f32 %v285, %v1227
  %v1229 = vpop.f32.mrb[0].mxu0
  %1230 = vmatprep.mubr.f32.mxu0 0.0
  %1231 = vmatmul.mubr.f32.gmra.mrb[0].mxu0 %v355
  %v1232 = vpop.f32.mrb[0].mxu0
  %v1233 = vadd.f32 %v285, %v1232
  %v1234 = vpop.f32.mrb[0].mxu0
  %1235 = vmatprep.mubr.f32.mxu0 0.0
  %1236 = vmatmul.mubr.f32.gmra.mrb[0].mxu0 %v358
  %v1237 = vpop.f32.mrb[0].mxu0
  %v1238 = vadd.f32 %v285, %v1237
  %v1239 = vpop.f32.mrb[0].mxu0
  %1240 = vmatprep.mubr.f32.mxu0 0.0
  %1241 = vmatmul.mubr.f32.gmra.mrb[0].mxu0 %v361
  %v1242 = vpop.f32.mrb[0].mxu0
  %v1243 = vadd.f32 %v285, %v1242
  %v1244 = vpop.f32.mrb[0].mxu0
  %1245 = vmatprep.mubr.f32.mxu0 0.0
  %1246 = vmatmul.mubr.f32.gmra.mrb[0].mxu0 %v364
  %v1247 = vpop.f32.mrb[0].mxu0
  %v1248 = vadd.f32 %v285, %v1247
  %v1249 = vpop.f32.mrb[0].mxu0
  %1250 = vmatprep.mubr.f32.mxu0 0.0
  %1251 = vmatmul.mubr.f32.gmra.mrb[0].mxu0 %v367
  %v1252 = vpop.f32.mrb[0].mxu0
  %v1253 = vadd.f32 %v285, %v1252
  %v1254 = vpop.f32.mrb[0].mxu0
  %1255 = vmatprep.mubr.f32.mxu0 0.0
  %1256 = vmatmul.mubr.f32.gmra.mrb[0].mxu0 %v370
  %v1257 = vpop.f32.mrb[0].mxu0
  %v1258 = vadd.f32 %v285, %v1257
  %v1259 = vpop.f32.mrb[0].mxu0
  %1260 = vmatprep.mubr.f32.mxu0 0.0
  %1261 = vmatmul.mubr.f32.gmra.mrb[0].mxu0 %v373
  %v1262 = vpop.f32.mrb[0].mxu0
  %v1263 = vadd.f32 %v285, %v1262
  %v1264 = vpop.f32.mrb[0].mxu0
  %1265 = vmatprep.mubr.f32.mxu0 0.0
  %1266 = vmatmul.mubr.f32.gmra.mrb[0].mxu0 %v376
  %v1267 = vpop.f32.mrb[0].mxu0
  %v1268 = vadd.f32 %v285, %v1267
  %v1269 = vpop.f32.mrb[0].mxu0
  %1270 = vmatprep.mubr.f32.mxu0 0.0
  %1271 = vmatmul.mubr.f32.gmra.mrb[0].mxu0 %v379
  %v1272 = vpop.f32.mrb[0].mxu0
  %v1273 = vadd.f32 %v285, %v1272
  %v1274 = vpop.f32.mrb[0].mxu0
  %1275 = vmatprep.mubr.f32.mxu0 0.0
  %1276 = vmatmul.mubr.f32.gmra.mrb[0].mxu0 %v382
  %v1277 = vpop.f32.mrb[0].mxu0
  %v1278 = vadd.f32 %v285, %v1277
  %v1279 = vpop.f32.mrb[0].mxu0
  %1280 = vmatprep.mubr.f32.mxu0 0.0
  %1281 = vmatmul.mubr.f32.gmra.mrb[0].mxu0 %v385
  %v1282 = vpop.f32.mrb[0].mxu0
  %v1283 = vadd.f32 %v285, %v1282
  %v1284 = vpop.f32.mrb[0].mxu0
  %1285 = vmatprep.mubr.f32.mxu0 0.0
  %1286 = vmatmul.mubr.f32.gmra.mrb[0].mxu0 %v388
  %v1287 = vpop.f32.mrb[0].mxu0
  %v1288 = vadd.f32 %v285, %v1287
  %v1289 = vpop.f32.mrb[0].mxu0
  %1290 = vmatprep.mubr.f32.mxu0 0.0
  %1291 = vmatmul.mubr.f32.gmra.mrb[0].mxu0 %v391
  %v1292 = vpop.f32.mrb[0].mxu0
  %v1293 = vadd.f32 %v285, %v1292
  %v1294 = vpop.f32.mrb[0].mxu0
  %1295 = vmatprep.mubr.f32.mxu0 0.0
  %1296 = vmatmul.mubr.f32.gmra.mrb[0].mxu0 %v394
  %v1297 = vpop.f32.mrb[0].mxu0
  %v1298 = vadd.f32 %v285, %v1297
  %v1299 = vpop.f32.mrb[0].mxu0
  %1300 = vmatprep.mubr.f32.mxu0 0.0
  %1301 = vmatmul.mubr.f32.gmra.mrb[0].mxu0 %v397
  %v1302 = vpop.f32.mrb[0].mxu0
  %v1303 = vadd.f32 %v285, %v1302
  %v1304 = vpop.f32.mrb[0].mxu0
  %1305 = vmatprep.mubr.f32.mxu0 0.0
  %1306 = vmatmul.mubr.f32.gmra.mrb[0].mxu0 %v400
  %v1307 = vpop.f32.mrb[0].mxu0
  %v1308 = vadd.f32 %v285, %v1307
  %v1309 = vpop.f32.mrb[0].mxu0
  %1310 = vmatprep.mubr.f32.mxu0 0.0
  %1311 = vmatmul.mubr.f32.gmra.mrb[0].mxu0 %v403
  %v1312 = vpop.f32.mrb[0].mxu0
  %v1313 = vadd.f32 %v285, %v1312
  %v1314 = vpop.f32.mrb[0].mxu0
  %1315 = vmatprep.mubr.f32.mxu0 0.0
  %1316 = vmatmul.mubr.f32.gmra.mrb[0].mxu0 %v406
  %v1317 = vpop.f32.mrb[0].mxu0
  %v1318 = vadd.f32 %v285, %v1317
  %v1319 = vpop.f32.mrb[0].mxu0
  %1320 = vmatprep.mubr.f32.mxu0 0.0
  %1321 = vmatmul.mubr.f32.gmra.mrb[0].mxu0 %v409
  %v1322 = vpop.f32.mrb[0].mxu0
  %v1323 = vadd.f32 %v285, %v1322
  %v1324 = vpop.f32.mrb[0].mxu0
  %1325 = vmatprep.mubr.f32.mxu0 0.0
  %1326 = vmatmul.mubr.f32.gmra.mrb[0].mxu0 %v412
  %v1327 = vpop.f32.mrb[0].mxu0
  %v1328 = vadd.f32 %v285, %v1327
  %v1329 = vpop.f32.mrb[0].mxu0
  %1330 = vmatprep.mubr.f32.mxu0 0.0
  %1331 = vmatmul.mubr.f32.gmra.mrb[0].mxu0 %v415
  %v1332 = vpop.f32.mrb[0].mxu0
  %v1333 = vadd.f32 %v285, %v1332
  %v1334 = vpop.f32.mrb[0].mxu0
  %1335 = vmatprep.mubr.f32.mxu0 0.0
  %1336 = vmatmul.mubr.f32.gmra.mrb[0].mxu0 %v418
  %v1337 = vpop.f32.mrb[0].mxu0
  %v1338 = vadd.f32 %v285, %v1337
  %v1339 = vpop.f32.mrb[0].mxu0
  %1340 = vmatprep.mubr.f32.mxu0 0.0
  %1341 = vmatmul.mubr.f32.gmra.mrb[0].mxu0 %v421
  %v1342 = vpop.f32.mrb[0].mxu0
  %v1343 = vadd.f32 %v285, %v1342
  %v1344 = vpop.f32.mrb[0].mxu0
  %1345 = vmatprep.mubr.f32.mxu0 0.0
  %1346 = vmatmul.mubr.f32.gmra.mrb[0].mxu0 %v424
  %v1347 = vpop.f32.mrb[0].mxu0
  %v1348 = vadd.f32 %v285, %v1347
  %v1349 = vpop.f32.mrb[0].mxu0
  %1350 = vmatprep.mubr.f32.mxu0 0.0
  %1351 = vmatmul.mubr.f32.gmra.mrb[0].mxu0 %v427
  %v1352 = vpop.f32.mrb[0].mxu0
  %v1353 = vadd.f32 %v285, %v1352
  %v1354 = vpop.f32.mrb[0].mxu0
  %1355 = vmatprep.mubr.f32.mxu0 0.0
  %1356 = vmatmul.mubr.f32.gmra.mrb[0].mxu0 %v430
  %v1357 = vpop.f32.mrb[0].mxu0
  %v1358 = vadd.f32 %v285, %v1357
  %v1359 = vpop.f32.mrb[0].mxu0
  %1360 = vmatprep.mubr.f32.mxu0 0.0
  %1361 = vmatmul.mubr.f32.gmra.mrb[0].mxu0 %v433
  %v1362 = vpop.f32.mrb[0].mxu0
  %v1363 = vadd.f32 %v285, %v1362
  %v1364 = vpop.f32.mrb[0].mxu0
  %1365 = vmatprep.mubr.f32.mxu0 0.0
  %1366 = vmatmul.mubr.f32.gmra.mrb[0].mxu0 %v436
  %v1367 = vpop.f32.mrb[0].mxu0
  %v1368 = vadd.f32 %v285, %v1367
  %v1369 = vpop.f32.mrb[0].mxu0
  %1370 = vmatprep.mubr.f32.mxu0 0.0
  %1371 = vmatmul.mubr.f32.gmra.mrb[0].mxu0 %v439
  %v1372 = vpop.f32.mrb[0].mxu0
  %v1373 = vadd.f32 %v285, %v1372
  %v1374 = vpop.f32.mrb[0].mxu0
  %1375 = vmatprep.mubr.f32.mxu0 0.0
  %1376 = vmatmul.mubr.f32.gmra.mrb[0].mxu0 %v442
  %v1377 = vpop.f32.mrb[0].mxu0
  %v1378 = vadd.f32 %v285, %v1377
  %v1379 = vpop.f32.mrb[0].mxu0
  %1380 = vmatprep.mubr.f32.mxu0 0.0
  %1381 = vmatmul.mubr.f32.gmra.mrb[0].mxu0 %v445
  %v1382 = vpop.f32.mrb[0].mxu0
  %v1383 = vadd.f32 %v285, %v1382
  %v1384 = vpop.f32.mrb[0].mxu0
  %1385 = vmatprep.mubr.f32.mxu0 0.0
  %1386 = vmatmul.mubr.f32.gmra.mrb[0].mxu0 %v448
  %v1387 = vpop.f32.mrb[0].mxu0
  %v1388 = vadd.f32 %v285, %v1387
  %v1389 = vpop.f32.mrb[0].mxu0
  %1390 = vmatprep.mubr.f32.mxu0 0.0
  %1391 = vmatmul.mubr.f32.gmra.mrb[0].mxu0 %v451
  %v1392 = vpop.f32.mrb[0].mxu0
  %v1393 = vadd.f32 %v285, %v1392
  %v1394 = vpop.f32.mrb[0].mxu0
  %1395 = vmatprep.mubr.f32.mxu0 0.0
  %1396 = vmatmul.mubr.f32.gmra.mrb[0].mxu0 %v454
  %v1397 = vpop.f32.mrb[0].mxu0
  %v1398 = vadd.f32 %v285, %v1397
  %v1399 = vpop.f32.mrb[0].mxu0
  %1400 = vmatprep.mubr.f32.mxu0 0.0
  %1401 = vmatmul.mubr.f32.gmra.mrb[0].mxu0 %v457
  %v1402 = vpop.f32.mrb[0].mxu0
  %v1403 = vadd.f32 %v285, %v1402
  %v1404 = vpop.f32.mrb[0].mxu0
  %1405 = vmatprep.mubr.f32.mxu0 0.0
  %1406 = vmatmul.mubr.f32.gmra.mrb[0].mxu0 %v460
  %v1407 = vpop.f32.mrb[0].mxu0
  %v1408 = vadd.f32 %v285, %v1407
  %v1409 = vpop.f32.mrb[0].mxu0
  %1410 = vmatprep.mubr.f32.mxu0 0.0
  %1411 = vmatmul.mubr.f32.gmra.mrb[0].mxu0 %v463
  %v1412 = vpop.f32.mrb[0].mxu0
  %v1413 = vadd.f32 %v285, %v1412
  %v1414 = vpop.f32.mrb[0].mxu0
  %1415 = vmatprep.mubr.f32.mxu0 0.0
  %1416 = vmatmul.mubr.f32.gmra.mrb[0].mxu0 %v466
  %v1417 = vpop.f32.mrb[0].mxu0
  %v1418 = vadd.f32 %v285, %v1417
  %v1419 = vpop.f32.mrb[0].mxu0
  %1420 = vmatprep.mubr.f32.mxu0 0.0
  %1421 = vmatmul.mubr.f32.gmra.mrb[0].mxu0 %v469
  %v1422 = vpop.f32.mrb[0].mxu0
  %v1423 = vadd.f32 %v285, %v1422
  %v1424 = vpop.f32.mrb[0].mxu0
  %1425 = vmatprep.mubr.f32.mxu0 0.0
  %1426 = vmatmul.mubr.f32.gmra.mrb[0].mxu0 %v472
  %v1427 = vpop.f32.mrb[0].mxu0
  %v1428 = vadd.f32 %v285, %v1427
  %v1429 = vpop.f32.mrb[0].mxu0
  %1430 = vmatprep.mubr.f32.mxu0 0.0
  %1431 = vmatmul.mubr.f32.gmra.mrb[0].mxu0 %v475
  %v1432 = vpop.f32.mrb[0].mxu0
  %v1433 = vadd.f32 %v285, %v1432
  %v1434 = vpop.f32.mrb[0].mxu0
  %1435 = vmatprep.mubr.f32.mxu0 0.0
  %1436 = vmatmul.mubr.f32.gmra.mrb[0].mxu0 %v478
  %v1437 = vpop.f32.mrb[0].mxu0
  %v1438 = vadd.f32 %v285, %v1437
  %v1439 = vpop.f32.mrb[0].mxu0
  %1440 = vmatprep.mubr.f32.mxu0 0.0
  %1441 = vmatmul.mubr.f32.gmra.mrb[0].mxu0 %v481
  %v1442 = vpop.f32.mrb[0].mxu0
  %v1443 = vadd.f32 %v285, %v1442
  %v1444 = vpop.f32.mrb[0].mxu0
  %1445 = vmatprep.mubr.f32.mxu0 0.0
  %1446 = vmatmul.mubr.f32.gmra.mrb[0].mxu0 %v484
  %v1447 = vpop.f32.mrb[0].mxu0
  %v1448 = vadd.f32 %v285, %v1447
  %v1449 = vpop.f32.mrb[0].mxu0
  %1450 = vmatprep.mubr.f32.mxu0 0.0
  %1451 = vmatmul.mubr.f32.gmra.mrb[0].mxu0 %v487
  %v1452 = vpop.f32.mrb[0].mxu0
  %v1453 = vadd.f32 %v285, %v1452
  %v1454 = vpop.f32.mrb[0].mxu0
  %1455 = vmatprep.mubr.f32.mxu0 0.0
  %1456 = vmatmul.mubr.f32.gmra.mrb[0].mxu0 %v490
  %v1457 = vpop.f32.mrb[0].mxu0
  %v1458 = vadd.f32 %v285, %v1457
  %v1459 = vpop.f32.mrb[0].mxu0
  %1460 = vmatprep.mubr.f32.mxu0 0.0
  %1461 = vmatmul.mubr.f32.gmra.mrb[0].mxu0 %v493
  %v1462 = vpop.f32.mrb[0].mxu0
  %v1463 = vadd.f32 %v285, %v1462
  %v1464 = vpop.f32.mrb[0].mxu0
  %1465 = vmatprep.mubr.f32.mxu0 0.0
  %1466 = vmatmul.mubr.f32.gmra.mrb[0].mxu0 %v496
  %v1467 = vpop.f32.mrb[0].mxu0
  %v1468 = vadd.f32 %v285, %v1467
  %v1469 = vpop.f32.mrb[0].mxu0
  %1470 = vmatprep.mubr.f32.mxu0 0.0
  %1471 = vmatmul.mubr.f32.gmra.mrb[0].mxu0 %v499
  %v1472 = vpop.f32.mrb[0].mxu0
  %v1473 = vadd.f32 %v285, %v1472
  %v1474 = vpop.f32.mrb[0].mxu0
  %1475 = vmatprep.mubr.f32.mxu0 0.0
  %1476 = vmatmul.mubr.f32.gmra.mrb[0].mxu0 %v502
  %v1477 = vpop.f32.mrb[0].mxu0
  %v1478 = vadd.f32 %v285, %v1477
  %v1479 = vpop.f32.mrb[0].mxu0
  %1480 = vmatprep.mubr.f32.mxu0 0.0
  %1481 = vmatmul.mubr.f32.gmra.mrb[0].mxu0 %v505
  %v1482 = vpop.f32.mrb[0].mxu0
  %v1483 = vadd.f32 %v285, %v1482
  %v1484 = vpop.f32.mrb[0].mxu0
  %1485 = vmatprep.mubr.f32.mxu0 0.0
  %1486 = vmatmul.mubr.f32.gmra.mrb[0].mxu0 %v508
  %v1487 = vpop.f32.mrb[0].mxu0
  %v1488 = vadd.f32 %v285, %v1487
  %v1489 = vpop.f32.mrb[0].mxu0
  %1490 = vmatprep.mubr.f32.mxu0 0.0
  %1491 = vmatmul.mubr.f32.gmra.mrb[0].mxu0 %v511
  %v1492 = vpop.f32.mrb[0].mxu0
  %v1493 = vadd.f32 %v285, %v1492
  %v1494 = vpop.f32.mrb[0].mxu0
  %1495 = vmatprep.mubr.f32.mxu0 0.0
  %1496 = vmatmul.mubr.f32.gmra.mrb[0].mxu0 %v514
  %v1497 = vpop.f32.mrb[0].mxu0
  %v1498 = vadd.f32 %v285, %v1497
  %v1499 = vpop.f32.mrb[0].mxu0
  %1500 = vmatprep.mubr.f32.mxu0 0.0
  %1501 = vmatmul.mubr.f32.gmra.mrb[0].mxu0 %v517
  %v1502 = vpop.f32.mrb[0].mxu0
  %v1503 = vadd.f32 %v285, %v1502
  %v1504 = vpop.f32.mrb[0].mxu0
  %1505 = vmatprep.mubr.f32.mxu0 0.0
  %1506 = vmatmul.mubr.f32.gmra.mrb[0].mxu0 %v520
  %v1507 = vpop.f32.mrb[0].mxu0
  %v1508 = vadd.f32 %v285, %v1507
  %v1509 = vpop.f32.mrb[0].mxu0
  %1510 = vmatprep.mubr.f32.mxu0 0.0
  %1511 = vmatmul.mubr.f32.gmra.mrb[0].mxu0 %v523
  %v1512 = vpop.f32.mrb[0].mxu0
  %v1513 = vadd.f32 %v285, %v1512
  %v1514 = vpop.f32.mrb[0].mxu0
  %1515 = vmatprep.mubr.f32.mxu0 0.0
  %1516 = vmatmul.mubr.f32.gmra.mrb[0].mxu0 %v526
  %v1517 = vpop.f32.mrb[0].mxu0
  %v1518 = vadd.f32 %v285, %v1517
  %v1519 = vpop.f32.mrb[0].mxu0
  %1520 = vmatprep.mubr.f32.mxu0 0.0
  %1521 = vmatmul.mubr.f32.gmra.mrb[0].mxu0 %v529
  %v1522 = vpop.f32.mrb[0].mxu0
  %v1523 = vadd.f32 %v285, %v1522
  %v1524 = vpop.f32.mrb[0].mxu0
  %1525 = vmatprep.mubr.f32.mxu0 0.0
  %1526 = vmatmul.mubr.f32.gmra.mrb[0].mxu0 %v532
  %v1527 = vpop.f32.mrb[0].mxu0
  %v1528 = vadd.f32 %v285, %v1527
  %v1529 = vpop.f32.mrb[0].mxu0
  %1530 = vmatprep.mubr.f32.mxu0 0.0
  %1531 = vmatmul.mubr.f32.gmra.mrb[0].mxu0 %v535
  %v1532 = vpop.f32.mrb[0].mxu0
  %v1533 = vadd.f32 %v285, %v1532
  %v1534 = vpop.f32.mrb[0].mxu0
  %1535 = vmatprep.mubr.f32.mxu0 0.0
  %1536 = vmatmul.mubr.f32.gmra.mrb[0].mxu0 %v538
  %v1537 = vpop.f32.mrb[0].mxu0
  %v1538 = vadd.f32 %v285, %v1537
  %v1539 = vpop.f32.mrb[0].mxu0
  %1540 = vmatprep.mubr.f32.mxu0 0.0
  %1541 = vmatmul.mubr.f32.gmra.mrb[0].mxu0 %v541
  %v1542 = vpop.f32.mrb[0].mxu0
  %v1543 = vadd.f32 %v285, %v1542
  %v1544 = vpop.f32.mrb[0].mxu0
  %1545 = vmatprep.mubr.f32.mxu0 0.0
  %1546 = vmatmul.mubr.f32.gmra.mrb[0].mxu0 %v544
  %v1547 = vpop.f32.mrb[0].mxu0
  %v1548 = vadd.f32 %v285, %v1547
  %v1549 = vpop.f32.mrb[0].mxu0
  %1550 = vmatprep.mubr.f32.mxu0 0.0
  %1551 = vmatmul.mubr.f32.gmra.mrb[0].mxu0 %v547
  %v1552 = vpop.f32.mrb[0].mxu0
  %v1553 = vadd.f32 %v285, %v1552
  %v1554 = vpop.f32.mrb[0].mxu0
  %1555 = vmatprep.mubr.f32.mxu0 0.0
  %1556 = vmatmul.mubr.f32.gmra.mrb[0].mxu0 %v550
  %v1557 = vpop.f32.mrb[0].mxu0
  %v1558 = vadd.f32 %v285, %v1557
  %v1559 = vpop.f32.mrb[0].mxu0
  %1560 = vmatprep.mubr.f32.mxu0 0.0
  %1561 = vmatmul.mubr.f32.gmra.mrb[0].mxu0 %v553
  %v1562 = vpop.f32.mrb[0].mxu0
  %v1563 = vadd.f32 %v285, %v1562
  %v1564 = vpop.f32.mrb[0].mxu0
  %1565 = vmatprep.mubr.f32.mxu0 0.0
  %1566 = vmatmul.mubr.f32.gmra.mrb[0].mxu0 %v556
  %v1567 = vpop.f32.mrb[0].mxu0
  %v1568 = vadd.f32 %v285, %v1567
  %v1569 = vpop.f32.mrb[0].mxu0
  %1570 = vmatprep.mubr.f32.mxu0 0.0
  %1571 = vmatmul.mubr.f32.gmra.mrb[0].mxu0 %v559
  %v1572 = vpop.f32.mrb[0].mxu0
  %v1573 = vadd.f32 %v285, %v1572
  %v1574 = vpop.f32.mrb[0].mxu0
  %1575 = vmatprep.mubr.f32.mxu0 0.0
  %1576 = vmatmul.mubr.f32.gmra.mrb[0].mxu0 %v562
  %v1577 = vpop.f32.mrb[0].mxu0
  %v1578 = vadd.f32 %v285, %v1577
  %v1579 = vpop.f32.mrb[0].mxu0
  %1580 = vmatprep.mubr.f32.mxu0 0.0
  %1581 = vmatmul.mubr.f32.gmra.mrb[0].mxu0 %v565
  %v1582 = vpop.f32.mrb[0].mxu0
  %v1583 = vadd.f32 %v285, %v1582
  %v1584 = vpop.f32.mrb[0].mxu0
  %1585 = vmatprep.mubr.f32.mxu0 0.0
  %1586 = vmatmul.mubr.f32.gmra.mrb[0].mxu0 %v568
  %v1587 = vpop.f32.mrb[0].mxu0
  %v1588 = vadd.f32 %v285, %v1587
  %v1589 = vpop.f32.mrb[0].mxu0
  %1590 = vmatprep.mubr.f32.mxu0 0.0
  %1591 = vmatmul.mubr.f32.gmra.mrb[0].mxu0 %v571
  %v1592 = vpop.f32.mrb[0].mxu0
  %v1593 = vadd.f32 %v285, %v1592
  %v1594 = vpop.f32.mrb[0].mxu0
  %1595 = vmatprep.mubr.f32.mxu0 0.0
  %1596 = vmatmul.mubr.f32.gmra.mrb[0].mxu0 %v574
  %v1597 = vpop.f32.mrb[0].mxu0
  %v1598 = vadd.f32 %v285, %v1597
  %v1599 = vpop.f32.mrb[0].mxu0
  %1600 = vmatprep.mubr.f32.mxu0 0.0
  %1601 = vmatmul.mubr.f32.gmra.mrb[0].mxu0 %v577
  %v1602 = vpop.f32.mrb[0].mxu0
  %v1603 = vadd.f32 %v285, %v1602
  %v1604 = vpop.f32.mrb[0].mxu0
  %1605 = vmatprep.mubr.f32.mxu0 0.0
  %1606 = vmatmul.mubr.f32.gmra.mrb[0].mxu0 %v580
  %v1607 = vpop.f32.mrb[0].mxu0
  %v1608 = vadd.f32 %v285, %v1607
  %v1609 = vpop.f32.mrb[0].mxu0
  %1610 = vmatprep.mubr.f32.mxu0 0.0
  %1611 = vmatmul.mubr.f32.gmra.mrb[0].mxu0 %v583
  %v1612 = vpop.f32.mrb[0].mxu0
  %v1613 = vadd.f32 %v285, %v1612
  %v1614 = vpop.f32.mrb[0].mxu0
  %1615 = vmatprep.mubr.f32.mxu0 0.0
  %1616 = vmatmul.mubr.f32.gmra.mrb[0].mxu0 %v586
  %v1617 = vpop.f32.mrb[0].mxu0
  %v1618 = vadd.f32 %v285, %v1617
  %v1619 = vpop.f32.mrb[0].mxu0
  %1620 = vmatprep.mubr.f32.mxu0 0.0
  %1621 = vmatmul.mubr.f32.gmra.mrb[0].mxu0 %v589
  %v1622 = vpop.f32.mrb[0].mxu0
  %v1623 = vadd.f32 %v285, %v1622
  %v1624 = vpop.f32.mrb[0].mxu0
  %1625 = vmatprep.mubr.f32.mxu0 0.0
  %1626 = vmatmul.mubr.f32.gmra.mrb[0].mxu0 %v592
  %v1627 = vpop.f32.mrb[0].mxu0
  %v1628 = vadd.f32 %v285, %v1627
  %v1629 = vpop.f32.mrb[0].mxu0
  %1630 = vmatprep.mubr.f32.mxu0 0.0
  %1631 = vmatmul.mubr.f32.gmra.mrb[0].mxu0 %v595
  %v1632 = vpop.f32.mrb[0].mxu0
  %v1633 = vadd.f32 %v285, %v1632
  %v1634 = vpop.f32.mrb[0].mxu0
  %1635 = vmatprep.mubr.f32.mxu0 0.0
  %1636 = vmatmul.mubr.f32.gmra.mrb[0].mxu0 %v598
  %v1637 = vpop.f32.mrb[0].mxu0
  %v1638 = vadd.f32 %v285, %v1637
  %v1639 = vpop.f32.mrb[0].mxu0
  %1640 = vmatprep.mubr.f32.mxu0 0.0
  %1641 = vmatmul.mubr.f32.gmra.mrb[0].mxu0 %v601
  %v1642 = vpop.f32.mrb[0].mxu0
  %v1643 = vadd.f32 %v285, %v1642
  %v1644 = vpop.f32.mrb[0].mxu0
  %1645 = vmatprep.mubr.f32.mxu0 0.0
  %1646 = vmatmul.mubr.f32.gmra.mrb[0].mxu0 %v604
  %v1647 = vpop.f32.mrb[0].mxu0
  %v1648 = vadd.f32 %v285, %v1647
  %v1649 = vpop.f32.mrb[0].mxu0
  %1650 = vmatprep.mubr.f32.mxu0 0.0
  %1651 = vmatmul.mubr.f32.gmra.mrb[0].mxu0 %v607
  %v1652 = vpop.f32.mrb[0].mxu0
  %v1653 = vadd.f32 %v285, %v1652
  %v1654 = vpop.f32.mrb[0].mxu0
  %1655 = vmatprep.mubr.f32.mxu0 0.0
  %1656 = vmatmul.mubr.f32.gmra.mrb[0].mxu0 %v610
  %v1657 = vpop.f32.mrb[0].mxu0
  %v1658 = vadd.f32 %v285, %v1657
  %v1659 = vpop.f32.mrb[0].mxu0
  %1660 = vmatprep.mubr.f32.mxu0 0.0
  %1661 = vmatmul.mubr.f32.gmra.mrb[0].mxu0 %v613
  %v1662 = vpop.f32.mrb[0].mxu0
  %v1663 = vadd.f32 %v285, %v1662
  %v1664 = vpop.f32.mrb[0].mxu0
  %1665 = vmatprep.mubr.f32.mxu0 0.0
  %1666 = vmatmul.mubr.f32.gmra.mrb[0].mxu0 %v616
  %v1667 = vpop.f32.mrb[0].mxu0
  %v1668 = vadd.f32 %v285, %v1667
  %v1669 = vpop.f32.mrb[0].mxu0
  %1670 = vmatprep.mubr.f32.mxu0 0.0
  %1671 = vmatmul.mubr.f32.gmra.mrb[0].mxu0 %v619
  %v1672 = vpop.f32.mrb[0].mxu0
  %v1673 = vadd.f32 %v285, %v1672
  %v1674 = vpop.f32.mrb[0].mxu0
  %1675 = vmatprep.mubr.f32.mxu0 0.0
  %1676 = vmatmul.mubr.f32.gmra.mrb[0].mxu0 %v622
  %v1677 = vpop.f32.mrb[0].mxu0
  %v1678 = vadd.f32 %v285, %v1677
  %v1679 = vpop.f32.mrb[0].mxu0
  %1680 = vmatprep.mubr.f32.mxu0 0.0
  %1681 = vmatmul.mubr.f32.gmra.mrb[0].mxu0 %v625
  %v1682 = vpop.f32.mrb[0].mxu0
  %v1683 = vadd.f32 %v285, %v1682
  %v1684 = vpop.f32.mrb[0].mxu0
  %1685 = vmatprep.mubr.f32.mxu0 0.0
  %1686 = vmatmul.mubr.f32.gmra.mrb[0].mxu0 %v628
  %v1687 = vpop.f32.mrb[0].mxu0
  %v1688 = vadd.f32 %v285, %v1687
  %v1689 = vpop.f32.mrb[0].mxu0
  %1690 = vmatprep.mubr.f32.mxu0 0.0
  %1691 = vmatmul.mubr.f32.gmra.mrb[0].mxu0 %v631
  %v1692 = vpop.f32.mrb[0].mxu0
  %v1693 = vadd.f32 %v285, %v1692
  %v1694 = vpop.f32.mrb[0].mxu0
  %1695 = vmatprep.mubr.f32.mxu0 0.0
  %1696 = vmatmul.mubr.f32.gmra.mrb[0].mxu0 %v634
  %v1697 = vpop.f32.mrb[0].mxu0
  %v1698 = vadd.f32 %v285, %v1697
  %v1699 = vpop.f32.mrb[0].mxu0
  %1700 = vmatprep.mubr.f32.mxu0 0.0
  %1701 = vmatmul.mubr.f32.gmra.mrb[0].mxu0 %v637
  %v1702 = vpop.f32.mrb[0].mxu0
  %v1703 = vadd.f32 %v285, %v1702
  %v1704 = vpop.f32.mrb[0].mxu0
  %1705 = vmatprep.mubr.f32.mxu0 0.0
  %1706 = vmatmul.mubr.f32.gmra.mrb[0].mxu0 %v640
  %v1707 = vpop.f32.mrb[0].mxu0
  %v1708 = vadd.f32 %v285, %v1707
  %v1709 = vpop.f32.mrb[0].mxu0
  %1710 = vmatprep.mubr.f32.mxu0 0.0
  %1711 = vmatmul.mubr.f32.gmra.mrb[0].mxu0 %v643
  %v1712 = vpop.f32.mrb[0].mxu0
  %v1713 = vadd.f32 %v285, %v1712
  %v1714 = vpop.f32.mrb[0].mxu0
  %1715 = vmatprep.mubr.f32.mxu0 0.0
  %1716 = vmatmul.mubr.f32.gmra.mrb[0].mxu0 %v646
  %v1717 = vpop.f32.mrb[0].mxu0
  %v1718 = vadd.f32 %v285, %v1717
  %v1719 = vpop.f32.mrb[0].mxu0
  %1720 = vmatprep.mubr.f32.mxu0 0.0
  %1721 = vmatmul.mubr.f32.gmra.mrb[0].mxu0 %v649
  %v1722 = vpop.f32.mrb[0].mxu0
  %v1723 = vadd.f32 %v285, %v1722
  %v1724 = vpop.f32.mrb[0].mxu0
  %1725 = vmatprep.mubr.f32.mxu0 0.0
  %1726 = vmatmul.mubr.f32.gmra.mrb[0].mxu0 %v652
  %v1727 = vpop.f32.mrb[0].mxu0
  %v1728 = vadd.f32 %v285, %v1727
  %v1729 = vpop.f32.mrb[0].mxu0
  %1730 = vmatprep.mubr.f32.mxu0 0.0
  %1731 = vmatmul.mubr.f32.gmra.mrb[0].mxu0 %v655
  %v1732 = vpop.f32.mrb[0].mxu0
  %v1733 = vadd.f32 %v285, %v1732
  %v1734 = vpop.f32.mrb[0].mxu0
  %1735 = vmatprep.mubr.f32.mxu0 0.0
  %1736 = vmatmul.mubr.f32.gmra.mrb[0].mxu0 %v658
  %v1737 = vpop.f32.mrb[0].mxu0
  %v1738 = vadd.f32 %v285, %v1737
  %v1739 = vpop.f32.mrb[0].mxu0
  %1740 = vmatprep.mubr.f32.mxu0 0.0
  %1741 = vmatmul.mubr.f32.gmra.mrb[0].mxu0 %v661
  %v1742 = vpop.f32.mrb[0].mxu0
  %v1743 = vadd.f32 %v285, %v1742
  %v1744 = vpop.f32.mrb[0].mxu0
  %1745 = vmatprep.mubr.f32.mxu0 0.0
  %1746 = vmatmul.mubr.f32.gmra.mrb[0].mxu0 %v664
  %v1747 = vpop.f32.mrb[0].mxu0
  %v1748 = vadd.f32 %v285, %v1747
  %v1749 = vpop.f32.mrb[0].mxu0
  %1750 = vmatprep.mubr.f32.mxu0 0.0
  %1751 = vmatmul.mubr.f32.gmra.mrb[0].mxu0 %v667
  %v1752 = vpop.f32.mrb[0].mxu0
  %v1753 = vadd.f32 %v285, %v1752
  %v1754 = vpop.f32.mrb[0].mxu0
  %1755 = vmatprep.mubr.f32.mxu0 0.0
  %1756 = vmatmul.mubr.f32.gmra.mrb[0].mxu0 %v670
  %v1757 = vpop.f32.mrb[0].mxu0
  %v1758 = vadd.f32 %v285, %v1757
  %v1759 = vpop.f32.mrb[0].mxu0
  %1760 = vmatprep.mubr.f32.mxu0 0.0
  %1761 = vmatmul.mubr.f32.gmra.mrb[0].mxu0 %v673
  %v1762 = vpop.f32.mrb[0].mxu0
  %v1763 = vadd.f32 %v285, %v1762
  %v1764 = vpop.f32.mrb[0].mxu0
  %1765 = vmatprep.mubr.f32.mxu0 0.0
  %1766 = vmatmul.mubr.f32.gmra.mrb[0].mxu0 %v676
  %v1767 = vpop.f32.mrb[0].mxu0
  %v1768 = vadd.f32 %v285, %v1767
  %v1769 = vpop.f32.mrb[0].mxu0
  %1770 = vmatprep.mubr.f32.mxu0 0.0
  %1771 = vmatmul.mubr.f32.gmra.mrb[0].mxu0 %v679
  %v1772 = vpop.f32.mrb[0].mxu0
  %v1773 = vadd.f32 %v285, %v1772
  %v1774 = vpop.f32.mrb[0].mxu0
  %1775 = vmatprep.mubr.f32.mxu0 0.0
  %1776 = vmatmul.mubr.f32.gmra.mrb[0].mxu0 %v682
  %v1777 = vpop.f32.mrb[0].mxu0
  %v1778 = vadd.f32 %v285, %v1777
  %v1779 = vpop.f32.mrb[0].mxu0
  %1780 = vmatprep.mubr.f32.mxu0 0.0
  %1781 = vmatmul.mubr.f32.gmra.mrb[0].mxu0 %v685
  %v1782 = vpop.f32.mrb[0].mxu0
  %v1783 = vadd.f32 %v285, %v1782
  %v1784 = vpop.f32.mrb[0].mxu0
  %1785 = vmatprep.mubr.f32.mxu0 0.0
  %1786 = vmatmul.mubr.f32.gmra.mrb[0].mxu0 %v688
  %v1787 = vpop.f32.mrb[0].mxu0
  %v1788 = vadd.f32 %v285, %v1787
  %v1789 = vpop.f32.mrb[0].mxu0
  %1790 = vmatprep.mubr.f32.mxu0 0.0
  %1791 = vmatmul.mubr.f32.gmra.mrb[0].mxu0 %v691
  %v1792 = vpop.f32.mrb[0].mxu0
  %v1793 = vadd.f32 %v285, %v1792
  %v1794 = vpop.f32.mrb[0].mxu0
  %1795 = vmatprep.mubr.f32.mxu0 0.0
  %1796 = vmatmul.mubr.f32.gmra.mrb[0].mxu0 %v694
  %v1797 = vpop.f32.mrb[0].mxu0
  %v1798 = vadd.f32 %v285, %v1797
  %v1799 = vpop.f32.mrb[0].mxu0
  %1800 = vmatprep.mubr.f32.mxu0 0.0
  %1801 = vmatmul.mubr.f32.gmra.mrb[0].mxu0 %v697
  %v1802 = vpop.f32.mrb[0].mxu0
  %v1803 = vadd.f32 %v285, %v1802
  %v1804 = vpop.f32.mrb[0].mxu0
  %1805 = vmatprep.mubr.f32.mxu0 0.0
  %1806 = vmatmul.mubr.f32.gmra.mrb[0].mxu0 %v700
  %v1807 = vpop.f32.mrb[0].mxu0
  %v1808 = vadd.f32 %v285, %v1807
  %v1809 = vpop.f32.mrb[0].mxu0
  %1810 = vmatprep.mubr.f32.mxu0 0.0
  %1811 = vmatmul.mubr.f32.gmra.mrb[0].mxu0 %v703
  %v1812 = vpop.f32.mrb[0].mxu0
  %v1813 = vadd.f32 %v285, %v1812
  %v1814 = vpop.f32.mrb[0].mxu0
  %1815 = vmatprep.mubr.f32.mxu0 0.0
  %1816 = vmatmul.mubr.f32.gmra.mrb[0].mxu0 %v706
  %v1817 = vpop.f32.mrb[0].mxu0
  %v1818 = vadd.f32 %v285, %v1817
  %v1819 = vpop.f32.mrb[0].mxu0
  %1820 = vmatprep.mubr.f32.mxu0 0.0
  %1821 = vmatmul.mubr.f32.gmra.mrb[0].mxu0 %v709
  %v1822 = vpop.f32.mrb[0].mxu0
  %v1823 = vadd.f32 %v285, %v1822
  %v1824 = vpop.f32.mrb[0].mxu0
  %1825 = vmatprep.mubr.f32.mxu0 0.0
  %1826 = vmatmul.mubr.f32.gmra.mrb[0].mxu0 %v712
  %v1827 = vpop.f32.mrb[0].mxu0
  %v1828 = vadd.f32 %v285, %v1827
  %v1829 = vpop.f32.mrb[0].mxu0
  %1830 = vmatprep.mubr.f32.mxu0 0.0
  %1831 = vmatmul.mubr.f32.gmra.mrb[0].mxu0 %v715
  %v1832 = vpop.f32.mrb[0].mxu0
  %v1833 = vadd.f32 %v285, %v1832
  %v1834 = vpop.f32.mrb[0].mxu0
  %1835 = vmatprep.mubr.f32.mxu0 0.0
  %1836 = vmatmul.mubr.f32.gmra.mrb[0].mxu0 %v718
  %v1837 = vpop.f32.mrb[0].mxu0
  %v1838 = vadd.f32 %v285, %v1837
  %v1839 = vpop.f32.mrb[0].mxu0
  %1840 = vmatprep.mubr.f32.mxu0 0.0
  %1841 = vmatmul.mubr.f32.gmra.mrb[0].mxu0 %v721
  %v1842 = vpop.f32.mrb[0].mxu0
  %v1843 = vadd.f32 %v285, %v1842
  %v1844 = vpop.f32.mrb[0].mxu0
  %1845 = vmatprep.mubr.f32.mxu0 0.0
  %1846 = vmatmul.mubr.f32.gmra.mrb[0].mxu0 %v724
  %v1847 = vpop.f32.mrb[0].mxu0
  %v1848 = vadd.f32 %v285, %v1847
  %v1849 = vpop.f32.mrb[0].mxu0
  %1850 = vmatprep.mubr.f32.mxu0 0.0
  %1851 = vmatmul.mubr.f32.gmra.mrb[0].mxu0 %v727
  %v1852 = vpop.f32.mrb[0].mxu0
  %v1853 = vadd.f32 %v285, %v1852
  %v1854 = vpop.f32.mrb[0].mxu0
  %1855 = vmatprep.mubr.f32.mxu0 0.0
  %1856 = vmatmul.mubr.f32.gmra.mrb[0].mxu0 %v730
  %v1857 = vpop.f32.mrb[0].mxu0
  %v1858 = vadd.f32 %v285, %v1857
  %v1859 = vpop.f32.mrb[0].mxu0
  %1860 = vmatprep.mubr.f32.mxu0 0.0
  %1861 = vmatmul.mubr.f32.gmra.mrb[0].mxu0 %v733
  %v1862 = vpop.f32.mrb[0].mxu0
  %v1863 = vadd.f32 %v285, %v1862
  %v1864 = vpop.f32.mrb[0].mxu0
  %1865 = vmatprep.mubr.f32.mxu0 0.0
  %1866 = vmatmul.mubr.f32.gmra.mrb[0].mxu0 %v736
  %v1867 = vpop.f32.mrb[0].mxu0
  %v1868 = vadd.f32 %v285, %v1867
  %v1869 = vpop.f32.mrb[0].mxu0
  %1870 = vmatprep.mubr.f32.mxu0 0.0
  %1871 = vmatmul.mubr.f32.gmra.mrb[0].mxu0 %v739
  %v1872 = vpop.f32.mrb[0].mxu0
  %v1873 = vadd.f32 %v285, %v1872
  %v1874 = vpop.f32.mrb[0].mxu0
  %1875 = vmatprep.mubr.f32.mxu0 0.0
  %1876 = vmatmul.mubr.f32.gmra.mrb[0].mxu0 %v742
  %v1877 = vpop.f32.mrb[0].mxu0
  %v1878 = vadd.f32 %v285, %v1877
  %v1879 = vpop.f32.mrb[0].mxu0
  %1880 = vmatprep.mubr.f32.mxu0 0.0
  %1881 = vmatmul.mubr.f32.gmra.mrb[0].mxu0 %v745
  %v1882 = vpop.f32.mrb[0].mxu0
  %v1883 = vadd.f32 %v285, %v1882
  %v1884 = vpop.f32.mrb[0].mxu0
  %1885 = vmatprep.mubr.f32.mxu0 0.0
  %1886 = vmatmul.mubr.f32.gmra.mrb[0].mxu0 %v748
  %v1887 = vpop.f32.mrb[0].mxu0
  %v1888 = vadd.f32 %v285, %v1887
  %v1889 = vpop.f32.mrb[0].mxu0
  %1890 = vmatprep.mubr.f32.mxu0 0.0
  %1891 = vmatmul.mubr.f32.gmra.mrb[0].mxu0 %v751
  %v1892 = vpop.f32.mrb[0].mxu0
  %v1893 = vadd.f32 %v285, %v1892
  %v1894 = vpop.f32.mrb[0].mxu0
  %1895 = vmatprep.mubr.f32.mxu0 0.0
  %1896 = vmatmul.mubr.f32.gmra.mrb[0].mxu0 %v754
  %v1897 = vpop.f32.mrb[0].mxu0
  %v1898 = vadd.f32 %v285, %v1897
  %v1899 = vpop.f32.mrb[0].mxu0
  %1900 = vmatprep.mubr.f32.mxu0 0.0
  %1901 = vmatmul.mubr.f32.gmra.mrb[0].mxu0 %v757
  %v1902 = vpop.f32.mrb[0].mxu0
  %v1903 = vadd.f32 %v285, %v1902
  %v1904 = vpop.f32.mrb[0].mxu0
  %1905 = vmatprep.mubr.f32.mxu0 0.0
  %1906 = vmatmul.mubr.f32.gmra.mrb[0].mxu0 %v760
  %v1907 = vpop.f32.mrb[0].mxu0
  %v1908 = vadd.f32 %v285, %v1907
  %v1909 = vpop.f32.mrb[0].mxu0
  %1910 = vmatprep.mubr.f32.mxu0 0.0
  %1911 = vmatmul.mubr.f32.gmra.mrb[0].mxu0 %v763
  %v1912 = vpop.f32.mrb[0].mxu0
  %v1913 = vadd.f32 %v285, %v1912
  %v1914 = vpop.f32.mrb[0].mxu0
  %1915 = vmatprep.mubr.f32.mxu0 0.0
  %1916 = vmatmul.mubr.f32.gmra.mrb[0].mxu0 %v766
  %v1917 = vpop.f32.mrb[0].mxu0
  %v1918 = vadd.f32 %v285, %v1917
  %v1919 = vpop.f32.mrb[0].mxu0
  %1920 = vmatprep.mubr.f32.mxu0 0.0
  %1921 = vmatmul.mubr.f32.gmra.mrb[0].mxu0 %v769
  %v1922 = vpop.f32.mrb[0].mxu0
  %v1923 = vadd.f32 %v285, %v1922
  %v1924 = vpop.f32.mrb[0].mxu0
  %1925 = vmatprep.mubr.f32.mxu0 0.0
  %1926 = vmatmul.mubr.f32.gmra.mrb[0].mxu0 %v772
  %v1927 = vpop.f32.mrb[0].mxu0
  %v1928 = vadd.f32 %v285, %v1927
  %v1929 = vpop.f32.mrb[0].mxu0
  %1930 = vmatprep.mubr.f32.mxu0 0.0
  %1931 = vmatmul.mubr.f32.gmra.mrb[0].mxu0 %v775
  %v1932 = vpop.f32.mrb[0].mxu0
  %v1933 = vadd.f32 %v285, %v1932
  %v1934 = vpop.f32.mrb[0].mxu0
  %1935 = vmatprep.mubr.f32.mxu0 0.0
  %1936 = vmatmul.mubr.f32.gmra.mrb[0].mxu0 %v778
  %v1937 = vpop.f32.mrb[0].mxu0
  %v1938 = vadd.f32 %v285, %v1937
  %v1939 = vpop.f32.mrb[0].mxu0
  %1940 = vmatprep.mubr.f32.mxu0 0.0
  %1941 = vmatmul.mubr.f32.gmra.mrb[0].mxu0 %v781
  %v1942 = vpop.f32.mrb[0].mxu0
  %v1943 = vadd.f32 %v285, %v1942
  %v1944 = vpop.f32.mrb[0].mxu0
  %1945 = vmatprep.mubr.f32.mxu0 0.0
  %1946 = vmatmul.mubr.f32.gmra.mrb[0].mxu0 %v784
  %v1947 = vpop.f32.mrb[0].mxu0
  %v1948 = vadd.f32 %v285, %v1947
  %v1949 = vpop.f32.mrb[0].mxu0
  %1950 = vmatprep.mubr.f32.mxu0 0.0
  %1951 = vmatmul.mubr.f32.gmra.mrb[0].mxu0 %v787
  %v1952 = vpop.f32.mrb[0].mxu0
  %v1953 = vadd.f32 %v285, %v1952
  %v1954 = vpop.f32.mrb[0].mxu0
  %1955 = vmatprep.mubr.f32.mxu0 0.0
  %1956 = vmatmul.mubr.f32.gmra.mrb[0].mxu0 %v790
  %v1957 = vpop.f32.mrb[0].mxu0
  %v1958 = vadd.f32 %v285, %v1957
  %v1959 = vpop.f32.mrb[0].mxu0
  %1960 = vmatprep.mubr.f32.mxu0 0.0
  %1961 = vmatmul.mubr.f32.gmra.mrb[0].mxu0 %v793
  %v1962 = vpop.f32.mrb[0].mxu0
  %v1963 = vadd.f32 %v285, %v1962
  %v1964 = vpop.f32.mrb[0].mxu0
  %1965 = vmatprep.mubr.f32.mxu0 0.0
  %1966 = vmatmul.mubr.f32.gmra.mrb[0].mxu0 %v796
  %v1967 = vpop.f32.mrb[0].mxu0
  %v1968 = vadd.f32 %v285, %v1967
  %v1969 = vpop.f32.mrb[0].mxu0
  %1970 = vmatprep.mubr.f32.mxu0 0.0
  %1971 = vmatmul.mubr.f32.gmra.mrb[0].mxu0 %v799
  %v1972 = vpop.f32.mrb[0].mxu0
  %v1973 = vadd.f32 %v285, %v1972
  %v1974 = vpop.f32.mrb[0].mxu0
  %1975 = vmatprep.mubr.f32.mxu0 0.0
  %1976 = vmatmul.mubr.f32.gmra.mrb[0].mxu0 %v802
  %v1977 = vpop.f32.mrb[0].mxu0
  %v1978 = vadd.f32 %v285, %v1977
  %v1979 = vpop.f32.mrb[0].mxu0
  %1980 = vmatprep.mubr.f32.mxu0 0.0
  %1981 = vmatmul.mubr.f32.gmra.mrb[0].mxu0 %v805
  %v1982 = vpop.f32.mrb[0].mxu0
  %v1983 = vadd.f32 %v285, %v1982
  %v1984 = vpop.f32.mrb[0].mxu0
  %1985 = vmatprep.mubr.f32.mxu0 0.0
  %1986 = vmatmul.mubr.f32.gmra.mrb[0].mxu0 %v808
  %v1987 = vpop.f32.mrb[0].mxu0
  %v1988 = vadd.f32 %v285, %v1987
  %v1989 = vpop.f32.mrb[0].mxu0
  %1990 = vmatprep.mubr.f32.mxu0 0.0
  %1991 = vmatmul.mubr.f32.gmra.mrb[0].mxu0 %v811
  %v1992 = vpop.f32.mrb[0].mxu0
  %v1993 = vadd.f32 %v285, %v1992
  %v1994 = vpop.f32.mrb[0].mxu0
  %1995 = vmatprep.mubr.f32.mxu0 0.0
  %1996 = vmatmul.mubr.f32.gmra.mrb[0].mxu0 %v814
  %v1997 = vpop.f32.mrb[0].mxu0
  %v1998 = vadd.f32 %v285, %v1997
  %v1999 = vpop.f32.mrb[0].mxu0
  %2000 = vmatprep.mubr.f32.mxu0 0.0
  %2001 = vmatmul.mubr.f32.gmra.mrb[0].mxu0 %v817
  %v2002 = vpop.f32.mrb[0].mxu0
  %v2003 = vadd.f32 %v285, %v2002
  %v2004 = vpop.f32.mrb[0].mxu0
  %2005 = vmatprep.mubr.f32.mxu0 0.0
  %2006 = vmatmul.mubr.f32.gmra.mrb[0].mxu0 %v820
  %v2007 = vpop.f32.mrb[0].mxu0
  %v2008 = vadd.f32 %v285, %v2007
  %v2009 = vpop.f32.mrb[0].mxu0
  %2010 = vmatprep.mubr.f32.mxu0 0.0
  %2011 = vmatmul.mubr.f32.gmra.mrb[0].mxu0 %v823
  %v2012 = vpop.f32.mrb[0].mxu0
  %v2013 = vadd.f32 %v285, %v2012
  %v2014 = vpop.f32.mrb[0].mxu0
  %2015 = vmatprep.mubr.f32.mxu0 0.0
  %2016 = vmatmul.mubr.f32.gmra.mrb[0].mxu0 %v826
  %v2017 = vpop.f32.mrb[0].mxu0
  %v2018 = vadd.f32 %v285, %v2017
  %v2019 = vpop.f32.mrb[0].mxu0
  %2020 = vmatprep.mubr.f32.mxu0 0.0
  %2021 = vmatmul.mubr.f32.gmra.mrb[0].mxu0 %v829
  %v2022 = vpop.f32.mrb[0].mxu0
  %v2023 = vadd.f32 %v285, %v2022
  %v2024 = vpop.f32.mrb[0].mxu0
  %2025 = vmatprep.mubr.f32.mxu0 0.0
  %2026 = vmatmul.mubr.f32.gmra.mrb[0].mxu0 %v832
  %v2027 = vpop.f32.mrb[0].mxu0
  %v2028 = vadd.f32 %v285, %v2027
  %v2029 = vpop.f32.mrb[0].mxu0
  %2030 = vmatprep.mubr.f32.mxu0 0.0
  %2031 = vmatmul.mubr.f32.gmra.mrb[0].mxu0 %v835
  %v2032 = vpop.f32.mrb[0].mxu0
  %v2033 = vadd.f32 %v285, %v2032
  %v2034 = vpop.f32.mrb[0].mxu0
  %2035 = vmatprep.mubr.f32.mxu0 0.0
  %2036 = vmatmul.mubr.f32.gmra.mrb[0].mxu0 %v838
  %v2037 = vpop.f32.mrb[0].mxu0
  %v2038 = vadd.f32 %v285, %v2037
  %v2039 = vpop.f32.mrb[0].mxu0
  %2040 = vmatprep.mubr.f32.mxu0 0.0
  %2041 = vmatmul.mubr.f32.gmra.mrb[0].mxu0 %v841
  %v2042 = vpop.f32.mrb[0].mxu0
  %v2043 = vadd.f32 %v285, %v2042
  %v2044 = vpop.f32.mrb[0].mxu0
  %2045 = vmatprep.mubr.f32.mxu0 0.0
  %2046 = vmatmul.mubr.f32.gmra.mrb[0].mxu0 %v844
  %v2047 = vpop.f32.mrb[0].mxu0
  %v2048 = vadd.f32 %v285, %v2047
  %v2049 = vpop.f32.mrb[0].mxu0
  %2050 = vmatprep.mubr.f32.mxu0 0.0
  %2051 = vmatmul.mubr.f32.gmra.mrb[0].mxu0 %v847
  %v2052 = vpop.f32.mrb[0].mxu0
  %v2053 = vadd.f32 %v285, %v2052
  %v2054 = vpop.f32.mrb[0].mxu0
  %2055 = vmatprep.mubr.f32.mxu0 0.0
  %2056 = vmatmul.mubr.f32.gmra.mrb[0].mxu0 %v850
  %v2057 = vpop.f32.mrb[0].mxu0
  %v2058 = vadd.f32 %v285, %v2057
  %v2059 = vpop.f32.mrb[0].mxu0
  %2060 = vmatprep.mubr.f32.mxu0 0.0
  %2061 = vmatmul.mubr.f32.gmra.mrb[0].mxu0 %v853
  %v2062 = vpop.f32.mrb[0].mxu0
  %v2063 = vadd.f32 %v285, %v2062
  %v2064 = vpop.f32.mrb[0].mxu0
  %2065 = vmatprep.mubr.f32.mxu0 0.0
  %2066 = vmatmul.mubr.f32.gmra.mrb[0].mxu0 %v856
  %v2067 = vpop.f32.mrb[0].mxu0
  %v2068 = vadd.f32 %v285, %v2067
  %v2069 = vpop.f32.mrb[0].mxu0
  %2070 = vmatprep.mubr.f32.mxu0 0.0
  %2071 = vmatmul.mubr.f32.gmra.mrb[0].mxu0 %v859
  %v2072 = vpop.f32.mrb[0].mxu0
  %v2073 = vadd.f32 %v285, %v2072
  %v2074 = vpop.f32.mrb[0].mxu0
  %2075 = vmatprep.mubr.f32.mxu0 0.0
  %2076 = vmatmul.mubr.f32.gmra.mrb[0].mxu0 %v862
  %v2077 = vpop.f32.mrb[0].mxu0
  %v2078 = vadd.f32 %v285, %v2077
  %v2079 = vpop.f32.mrb[0].mxu0
  %2080 = vmatprep.mubr.f32.mxu0 0.0
  %2081 = vmatmul.mubr.f32.gmra.mrb[0].mxu0 %v865
  %v2082 = vpop.f32.mrb[0].mxu0
  %v2083 = vadd.f32 %v285, %v2082
  %v2084 = vpop.f32.mrb[0].mxu0
  %2085 = vmatprep.mubr.f32.mxu0 0.0
  %2086 = vmatmul.mubr.f32.gmra.mrb[0].mxu0 %v868
  %v2087 = vpop.f32.mrb[0].mxu0
  %v2088 = vadd.f32 %v285, %v2087
  %v2089 = vpop.f32.mrb[0].mxu0
  %2090 = vmatprep.mubr.f32.mxu0 0.0
  %2091 = vmatmul.mubr.f32.gmra.mrb[0].mxu0 %v871
  %v2092 = vpop.f32.mrb[0].mxu0
  %v2093 = vadd.f32 %v285, %v2092
  %v2094 = vpop.f32.mrb[0].mxu0
  %2095 = vmatprep.mubr.f32.mxu0 0.0
  %2096 = vmatmul.mubr.f32.gmra.mrb[0].mxu0 %v874
  %v2097 = vpop.f32.mrb[0].mxu0
  %v2098 = vadd.f32 %v285, %v2097
  %v2099 = vpop.f32.mrb[0].mxu0
  %2100 = vmatprep.mubr.f32.mxu0 0.0
  %2101 = vmatmul.mubr.f32.gmra.mrb[0].mxu0 %v877
  %v2102 = vpop.f32.mrb[0].mxu0
  %v2103 = vadd.f32 %v285, %v2102
  %v2104 = vpop.f32.mrb[0].mxu0
  %2105 = vmatprep.mubr.f32.mxu0 0.0
  %2106 = vmatmul.mubr.f32.gmra.mrb[0].mxu0 %v880
  %v2107 = vpop.f32.mrb[0].mxu0
  %v2108 = vadd.f32 %v285, %v2107
  %v2109 = vpop.f32.mrb[0].mxu0
  %2110 = vmatprep.mubr.f32.mxu0 0.0
  %2111 = vmatmul.mubr.f32.gmra.mrb[0].mxu0 %v883
  %v2112 = vpop.f32.mrb[0].mxu0
  %v2113 = vadd.f32 %v285, %v2112
  %v2114 = vpop.f32.mrb[0].mxu0
  %2115 = vmatprep.mubr.f32.mxu0 0.0
  %2116 = vmatmul.mubr.f32.gmra.mrb[0].mxu0 %v886
  %v2117 = vpop.f32.mrb[0].mxu0
  %v2118 = vadd.f32 %v285, %v2117
  %v2119 = vpop.f32.mrb[0].mxu0
  %2120 = vmatprep.mubr.f32.mxu0 0.0
  %2121 = vmatmul.mubr.f32.gmra.mrb[0].mxu0 %v889
  %v2122 = vpop.f32.mrb[0].mxu0
  %v2123 = vadd.f32 %v285, %v2122
  %v2124 = vpop.f32.mrb[0].mxu0
  %2125 = vmatprep.mubr.f32.mxu0 0.0
  %2126 = vmatmul.mubr.f32.gmra.mrb[0].mxu0 %v892
  %v2127 = vpop.f32.mrb[0].mxu0
  %v2128 = vadd.f32 %v285, %v2127
  %v2129 = vpop.f32.mrb[0].mxu0
  %2130 = vmatprep.mubr.f32.mxu0 0.0
  %2131 = vmatmul.mubr.f32.gmra.mrb[0].mxu0 %v895
  %v2132 = vpop.f32.mrb[0].mxu0
  %v2133 = vadd.f32 %v285, %v2132
  %v2134 = vpop.f32.mrb[0].mxu0
  %2135 = vmatprep.mubr.f32.mxu0 0.0
  %2136 = vmatmul.mubr.f32.gmra.mrb[0].mxu0 %v898
  %v2137 = vpop.f32.mrb[0].mxu0
  %v2138 = vadd.f32 %v285, %v2137
  %v2139 = vpop.f32.mrb[0].mxu0
  %2140 = vmatprep.mubr.f32.mxu0 0.0
  %2141 = vmatmul.mubr.f32.gmra.mrb[0].mxu0 %v901
  %v2142 = vpop.f32.mrb[0].mxu0
  %v2143 = vadd.f32 %v285, %v2142
  %v2144 = vpop.f32.mrb[0].mxu0
  %2145 = vmatprep.mubr.f32.mxu0 0.0
  %2146 = vmatmul.mubr.f32.gmra.mrb[0].mxu0 %v904
  %v2147 = vpop.f32.mrb[0].mxu0
  %v2148 = vadd.f32 %v285, %v2147
  %v2149 = vpop.f32.mrb[0].mxu0
  %2150 = vmatprep.mubr.f32.mxu0 0.0
  %2151 = vmatmul.mubr.f32.gmra.mrb[0].mxu0 %v907
  %v2152 = vpop.f32.mrb[0].mxu0
  %v2153 = vadd.f32 %v285, %v2152
  %v2154 = vpop.f32.mrb[0].mxu0
  %2155 = vmatprep.mubr.f32.mxu0 0.0
  %2156 = vmatmul.mubr.f32.gmra.mrb[0].mxu0 %v910
  %v2157 = vpop.f32.mrb[0].mxu0
  %v2158 = vadd.f32 %v285, %v2157
  %v2159 = vpop.f32.mrb[0].mxu0
  %2160 = vmatprep.mubr.f32.mxu0 0.0
  %2161 = vmatmul.mubr.f32.gmra.mrb[0].mxu0 %v913
  %v2162 = vpop.f32.mrb[0].mxu0
  %v2163 = vadd.f32 %v285, %v2162
  %v2164 = vpop.f32.mrb[0].mxu0
  %2165 = vmatprep.mubr.f32.mxu0 0.0
  %2166 = vmatmul.mubr.f32.gmra.mrb[0].mxu0 %v916
  %v2167 = vpop.f32.mrb[0].mxu0
  %v2168 = vadd.f32 %v285, %v2167
  %v2169 = vpop.f32.mrb[0].mxu0
  %2170 = vmatprep.mubr.f32.mxu0 0.0
  %2171 = vmatmul.mubr.f32.gmra.mrb[0].mxu0 %v919
  %v2172 = vpop.f32.mrb[0].mxu0
  %v2173 = vadd.f32 %v285, %v2172
  %v2174 = vpop.f32.mrb[0].mxu0
  %2175 = vmatprep.mubr.f32.mxu0 0.0
  %2176 = vmatmul.mubr.f32.gmra.mrb[0].mxu0 %v922
  %v2177 = vpop.f32.mrb[0].mxu0
  %v2178 = vadd.f32 %v285, %v2177
  %v2179 = vpop.f32.mrb[0].mxu0
  %2180 = vmatprep.mubr.f32.mxu0 0.0
  %2181 = vmatmul.mubr.f32.gmra.mrb[0].mxu0 %v925
  %v2182 = vpop.f32.mrb[0].mxu0
  %v2183 = vadd.f32 %v285, %v2182
  %v2184 = vpop.f32.mrb[0].mxu0
  %2185 = vmatprep.mubr.f32.mxu0 0.0
  %2186 = vmatmul.mubr.f32.gmra.mrb[0].mxu0 %v928
  %v2187 = vpop.f32.mrb[0].mxu0
  %v2188 = vadd.f32 %v285, %v2187
  %v2189 = vpop.f32.mrb[0].mxu0
  %2190 = vmatprep.mubr.f32.mxu0 0.0
  %2191 = vmatmul.mubr.f32.gmra.mrb[0].mxu0 %v931
  %v2192 = vpop.f32.mrb[0].mxu0
  %v2193 = vadd.f32 %v285, %v2192
  %v2194 = vpop.f32.mrb[0].mxu0
  %2195 = vmatprep.mubr.f32.mxu0 0.0
  %2196 = vmatmul.mubr.f32.gmra.mrb[0].mxu0 %v934
  %v2197 = vpop.f32.mrb[0].mxu0
  %v2198 = vadd.f32 %v285, %v2197
  %v2199 = vpop.f32.mrb[0].mxu0
  %2200 = vmatprep.mubr.f32.mxu0 0.0
  %2201 = vmatmul.mubr.f32.gmra.mrb[0].mxu0 %v937
  %v2202 = vpop.f32.mrb[0].mxu0
  %v2203 = vadd.f32 %v285, %v2202
  %v2204 = vpop.f32.mrb[0].mxu0
  %2205 = vmatprep.mubr.f32.mxu0 0.0
  %2206 = vmatmul.mubr.f32.gmra.mrb[0].mxu0 %v940
  %v2207 = vpop.f32.mrb[0].mxu0
  %v2208 = vadd.f32 %v285, %v2207
  %v2209 = vpop.f32.mrb[0].mxu0
  %2210 = vmatprep.mubr.f32.mxu0 0.0
  %2211 = vmatmul.mubr.f32.gmra.mrb[0].mxu0 %v943
  %v2212 = vpop.f32.mrb[0].mxu0
  %v2213 = vadd.f32 %v285, %v2212
  %v2214 = vpop.f32.mrb[0].mxu0
  %2215 = vmatprep.mubr.f32.mxu0 0.0
  %2216 = vmatmul.mubr.f32.gmra.mrb[0].mxu0 %v946
  %v2217 = vpop.f32.mrb[0].mxu0
  %v2218 = vadd.f32 %v285, %v2217
  %v2219 = vpop.f32.mrb[0].mxu0
  %2220 = vmatprep.mubr.f32.mxu0 0.0
  %2221 = vmatmul.mubr.f32.gmra.mrb[0].mxu0 %v949
  %v2222 = vpop.f32.mrb[0].mxu0
  %v2223 = vadd.f32 %v285, %v2222
  %v2224 = vpop.f32.mrb[0].mxu0
  %2225 = vmatprep.mubr.f32.mxu0 0.0
  %2226 = vmatmul.mubr.f32.gmra.mrb[0].mxu0 %v952
  %v2227 = vpop.f32.mrb[0].mxu0
  %v2228 = vadd.f32 %v285, %v2227
  %v2229 = vpop.f32.mrb[0].mxu0
  %2230 = vmatprep.mubr.f32.mxu0 0.0
  %2231 = vmatmul.mubr.f32.gmra.mrb[0].mxu0 %v955
  %v2232 = vpop.f32.mrb[0].mxu0
  %v2233 = vadd.f32 %v285, %v2232
  %v2234 = vpop.f32.mrb[0].mxu0
  %2235 = vmatprep.mubr.f32.mxu0 0.0
  %2236 = vmatmul.mubr.f32.gmra.mrb[0].mxu0 %v958
  %v2237 = vpop.f32.mrb[0].mxu0
  %v2238 = vadd.f32 %v285, %v2237
  %v2239 = vpop.f32.mrb[0].mxu0
  %2240 = vmatprep.mubr.f32.mxu0 0.0
  %2241 = vmatmul.mubr.f32.gmra.mrb[0].mxu0 %v961
  %v2242 = vpop.f32.mrb[0].mxu0
  %v2243 = vadd.f32 %v285, %v2242
  %v2244 = vpop.f32.mrb[0].mxu0
  %2245 = vmatprep.mubr.f32.mxu0 0.0
  %2246 = vmatmul.mubr.f32.gmra.mrb[0].mxu0 %v964
  %v2247 = vpop.f32.mrb[0].mxu0
  %v2248 = vadd.f32 %v285, %v2247
  %v2249 = vpop.f32.mrb[0].mxu0
  %2250 = vmatprep.mubr.f32.mxu0 0.0
  %2251 = vmatmul.mubr.f32.gmra.mrb[0].mxu0 %v967
  %v2252 = vpop.f32.mrb[0].mxu0
  %v2253 = vadd.f32 %v285, %v2252
  %v2254 = vpop.f32.mrb[0].mxu0
  %2255 = vmatprep.mubr.f32.mxu0 0.0
  %2256 = vmatmul.mubr.f32.gmra.mrb[0].mxu0 %v970
  %v2257 = vpop.f32.mrb[0].mxu0
  %v2258 = vadd.f32 %v285, %v2257
  %v2259 = vpop.f32.mrb[0].mxu0
  %2260 = vmatprep.mubr.f32.mxu0 0.0
  %2261 = vmatmul.mubr.f32.gmra.mrb[0].mxu0 %v973
  %v2262 = vpop.f32.mrb[0].mxu0
  %v2263 = vadd.f32 %v285, %v2262
  %v2264 = vpop.f32.mrb[0].mxu0
  %2265 = vmatprep.mubr.f32.mxu0 0.0
  %2266 = vmatmul.mubr.f32.gmra.mrb[0].mxu0 %v976
  %v2267 = vpop.f32.mrb[0].mxu0
  %v2268 = vadd.f32 %v285, %v2267
  %v2269 = vpop.f32.mrb[0].mxu0
  %2270 = vmatprep.mubr.f32.mxu0 0.0
  %2271 = vmatmul.mubr.f32.gmra.mrb[0].mxu0 %v979
  %v2272 = vpop.f32.mrb[0].mxu0
  %v2273 = vadd.f32 %v285, %v2272
  %v2274 = vpop.f32.mrb[0].mxu0
  %2275 = vmatprep.mubr.f32.mxu0 0.0
  %2276 = vmatmul.mubr.f32.gmra.mrb[0].mxu0 %v982
  %v2277 = vpop.f32.mrb[0].mxu0
  %v2278 = vadd.f32 %v285, %v2277
  %v2279 = vpop.f32.mrb[0].mxu0
  %2280 = vmatprep.mubr.f32.mxu0 0.0
  %2281 = vmatmul.mubr.f32.gmra.mrb[0].mxu0 %v985
  %v2282 = vpop.f32.mrb[0].mxu0
  %v2283 = vadd.f32 %v285, %v2282
  %v2284 = vpop.f32.mrb[0].mxu0
  %2285 = vmatprep.mubr.f32.mxu0 0.0
  %2286 = vmatmul.mubr.f32.gmra.mrb[0].mxu0 %v988
  %v2287 = vpop.f32.mrb[0].mxu0
  %v2288 = vadd.f32 %v285, %v2287
  %v2289 = vpop.f32.mrb[0].mxu0
  %2290 = vmatprep.mubr.f32.mxu0 0.0
  %2291 = vmatmul.mubr.f32.gmra.mrb[0].mxu0 %v991
  %v2292 = vpop.f32.mrb[0].mxu0
  %v2293 = vadd.f32 %v285, %v2292
  %v2294 = vpop.f32.mrb[0].mxu0
  %2295 = vmatprep.mubr.f32.mxu0 0.0
  %2296 = vmatmul.mubr.f32.gmra.mrb[0].mxu0 %v994
  %v2297 = vpop.f32.mrb[0].mxu0
  %v2298 = vadd.f32 %v285, %v2297
  %v2299 = vpop.f32.mrb[0].mxu0
  %2300 = vmatprep.mubr.f32.mxu0 0.0
  %2301 = vmatmul.mubr.f32.gmra.mrb[0].mxu0 %v997
  %v2302 = vpop.f32.mrb[0].mxu0
  %v2303 = vadd.f32 %v285, %v2302
  %v2304 = vpop.f32.mrb[0].mxu0
  %2305 = vmatprep.mubr.f32.mxu0 0.0
  %2306 = vmatmul.mubr.f32.gmra.mrb[0].mxu0 %v1000
  %v2307 = vpop.f32.mrb[0].mxu0
  %v2308 = vadd.f32 %v285, %v2307
  %v2309 = vpop.f32.mrb[0].mxu0
  %2310 = vmatprep.mubr.f32.mxu0 0.0
  %2311 = vmatmul.mubr.f32.gmra.mrb[0].mxu0 %v1003
  %v2312 = vpop.f32.mrb[0].mxu0
  %v2313 = vadd.f32 %v285, %v2312
  %v2314 = vpop.f32.mrb[0].mxu0
  %2315 = vmatprep.mubr.f32.mxu0 0.0
  %2316 = vmatmul.mubr.f32.gmra.mrb[0].mxu0 %v1006
  %v2317 = vpop.f32.mrb[0].mxu0
  %v2318 = vadd.f32 %v285, %v2317
  %v2319 = vpop.f32.mrb[0].mxu0
  %2320 = vmatprep.mubr.f32.mxu0 0.0
  %2321 = vmatmul.mubr.f32.gmra.mrb[0].mxu0 %v1009
  %v2322 = vpop.f32.mrb[0].mxu0
  %v2323 = vadd.f32 %v285, %v2322
  %v2324 = vpop.f32.mrb[0].mxu0
  %2325 = vmatprep.mubr.f32.mxu0 0.0
  %2326 = vmatmul.mubr.f32.gmra.mrb[0].mxu0 %v1012
  %v2327 = vpop.f32.mrb[0].mxu0
  %v2328 = vadd.f32 %v285, %v2327
  %v2329 = vpop.f32.mrb[0].mxu0
  %2330 = vmatprep.mubr.f32.mxu0 0.0
  %2331 = vmatmul.mubr.f32.gmra.mrb[0].mxu0 %v1015
  %v2332 = vpop.f32.mrb[0].mxu0
  %v2333 = vadd.f32 %v285, %v2332
  %v2334 = vpop.f32.mrb[0].mxu0
  %2335 = vmatprep.mubr.f32.mxu0 0.0
  %2336 = vmatmul.mubr.f32.gmra.mrb[0].mxu0 %v1018
  %v2337 = vpop.f32.mrb[0].mxu0
  %v2338 = vadd.f32 %v285, %v2337
  %v2339 = vpop.f32.mrb[0].mxu0
  %2340 = vmatprep.mubr.f32.mxu0 0.0
  %2341 = vmatmul.mubr.f32.gmra.mrb[0].mxu0 %v1021
  %v2342 = vpop.f32.mrb[0].mxu0
  %v2343 = vadd.f32 %v285, %v2342
  %v2344 = vpop.f32.mrb[0].mxu0
  %2345 = vmatprep.mubr.f32.mxu0 0.0
  %2346 = vmatmul.mubr.f32.gmra.mrb[0].mxu0 %v1024
  %v2347 = vpop.f32.mrb[0].mxu0
  %v2348 = vadd.f32 %v285, %v2347
  %v2349 = vpop.f32.mrb[0].mxu0
  %2350 = vmatprep.mubr.f32.mxu0 0.0
  %2351 = vmatmul.mubr.f32.gmra.mrb[0].mxu0 %v1027
  %v2352 = vpop.f32.mrb[0].mxu0
  %v2353 = vadd.f32 %v285, %v2352
  %v2354 = vpop.f32.mrb[0].mxu0
  %2355 = vmatprep.mubr.f32.mxu0 0.0
  %2356 = vmatmul.mubr.f32.gmra.mrb[0].mxu0 %v1030
  %v2357 = vpop.f32.mrb[0].mxu0
  %v2358 = vadd.f32 %v285, %v2357
  %v2359 = vpop.f32.mrb[0].mxu0
  %2360 = vmatprep.mubr.f32.mxu0 0.0
  %2361 = vmatmul.mubr.f32.gmra.mrb[0].mxu0 %v1033
  %v2362 = vpop.f32.mrb[0].mxu0
  %v2363 = vadd.f32 %v285, %v2362
  %v2364 = vpop.f32.mrb[0].mxu0
  %2365 = vmatprep.mubr.f32.mxu0 0.0
  %2366 = vmatmul.mubr.f32.gmra.mrb[0].mxu0 %v1036
  %v2367 = vpop.f32.mrb[0].mxu0
  %v2368 = vadd.f32 %v285, %v2367
  %v2369 = vpop.f32.mrb[0].mxu0
  %2370 = vmatprep.mubr.f32.mxu0 0.0
  %2371 = vmatmul.mubr.f32.gmra.mrb[0].mxu0 %v1039
  %v2372 = vpop.f32.mrb[0].mxu0
  %v2373 = vadd.f32 %v285, %v2372
  %v2374 = vpop.f32.mrb[0].mxu0
  %2375 = vmatprep.mubr.f32.mxu0 0.0
  %2376 = vmatmul.mubr.f32.gmra.mrb[0].mxu0 %v1042
  %v2377 = vpop.f32.mrb[0].mxu0
  %v2378 = vadd.f32 %v285, %v2377
  %v2379 = vpop.f32.mrb[0].mxu0
  %2380 = vmatprep.mubr.f32.mxu0 0.0
  %2381 = vmatmul.mubr.f32.gmra.mrb[0].mxu0 %v1045
  %v2382 = vpop.f32.mrb[0].mxu0
  %v2383 = vadd.f32 %v285, %v2382
  %v2384 = vpop.f32.mrb[0].mxu0
  %2385 = vmatprep.mubr.f32.mxu0 0.0
  %2386 = vmatmul.mubr.f32.gmra.mrb[0].mxu0 %v1048
  %v2387 = vpop.f32.mrb[0].mxu0
  %v2388 = vadd.f32 %v285, %v2387
  %v2389 = vpop.f32.mrb[0].mxu0
  %2390 = vmatprep.mubr.f32.mxu0 0.0
  %2391 = vmatmul.mubr.f32.gmra.mrb[0].mxu0 %v1051
  %v2392 = vpop.f32.mrb[0].mxu0
  %v2393 = vadd.f32 %v285, %v2392
  %v2394 = vpop.f32.mrb[0].mxu0
  %2395 = vmatprep.mubr.f32.mxu0 0.0
  %2396 = vmatmul.mubr.f32.gmra.mrb[0].mxu0 %v1054
  %v2397 = vpop.f32.mrb[0].mxu0
  %v2398 = vadd.f32 %v285, %v2397
  %v2399 = vpop.f32.mrb[0].mxu0
  %2400 = vdwg.mxu0
  %v2401 = vmax.f32 %v1123, 0.0
  %v2402 = vmax.f32 %v1128, 0.0
  %v2403 = vmax.f32 %v1133, 0.0
  %v2404 = vmax.f32 %v1138, 0.0
  %v2405 = vmax.f32 %v1143, 0.0
  %v2406 = vmax.f32 %v1148, 0.0
  %v2407 = vmax.f32 %v1153, 0.0
  %v2408 = vmax.f32 %v1158, 0.0
  %v2409 = vmax.f32 %v1163, 0.0
  %v2410 = vmax.f32 %v1168, 0.0
  %v2411 = vmax.f32 %v1173, 0.0
  %v2412 = vmax.f32 %v1178, 0.0
  %v2413 = vmax.f32 %v1183, 0.0
  %v2414 = vmax.f32 %v1188, 0.0
  %v2415 = vmax.f32 %v1193, 0.0
  %v2416 = vmax.f32 %v1198, 0.0
  %v2417 = vmax.f32 %v1203, 0.0
  %v2418 = vmax.f32 %v1208, 0.0
  %v2419 = vmax.f32 %v1213, 0.0
  %v2420 = vmax.f32 %v1218, 0.0
  %v2421 = vmax.f32 %v1223, 0.0
  %v2422 = vmax.f32 %v1228, 0.0
  %v2423 = vmax.f32 %v1233, 0.0
  %v2424 = vmax.f32 %v1238, 0.0
  %v2425 = vmax.f32 %v1243, 0.0
  %v2426 = vmax.f32 %v1248, 0.0
  %v2427 = vmax.f32 %v1253, 0.0
  %v2428 = vmax.f32 %v1258, 0.0
  %v2429 = vmax.f32 %v1263, 0.0
  %v2430 = vmax.f32 %v1268, 0.0
  %v2431 = vmax.f32 %v1273, 0.0
  %v2432 = vmax.f32 %v1278, 0.0
  %v2433 = vmax.f32 %v1283, 0.0
  %v2434 = vmax.f32 %v1288, 0.0
  %v2435 = vmax.f32 %v1293, 0.0
  %v2436 = vmax.f32 %v1298, 0.0
  %v2437 = vmax.f32 %v1303, 0.0
  %v2438 = vmax.f32 %v1308, 0.0
  %v2439 = vmax.f32 %v1313, 0.0
  %v2440 = vmax.f32 %v1318, 0.0
  %v2441 = vmax.f32 %v1323, 0.0
  %v2442 = vmax.f32 %v1328, 0.0
  %v2443 = vmax.f32 %v1333, 0.0
  %v2444 = vmax.f32 %v1338, 0.0
  %v2445 = vmax.f32 %v1343, 0.0
  %v2446 = vmax.f32 %v1348, 0.0
  %v2447 = vmax.f32 %v1353, 0.0
  %v2448 = vmax.f32 %v1358, 0.0
  %v2449 = vmax.f32 %v1363, 0.0
  %v2450 = vmax.f32 %v1368, 0.0
  %v2451 = vmax.f32 %v1373, 0.0
  %v2452 = vmax.f32 %v1378, 0.0
  %v2453 = vmax.f32 %v1383, 0.0
  %v2454 = vmax.f32 %v1388, 0.0
  %v2455 = vmax.f32 %v1393, 0.0
  %v2456 = vmax.f32 %v1398, 0.0
  %v2457 = vmax.f32 %v1403, 0.0
  %v2458 = vmax.f32 %v1408, 0.0
  %v2459 = vmax.f32 %v1413, 0.0
  %v2460 = vmax.f32 %v1418, 0.0
  %v2461 = vmax.f32 %v1423, 0.0
  %v2462 = vmax.f32 %v1428, 0.0
  %v2463 = vmax.f32 %v1433, 0.0
  %v2464 = vmax.f32 %v1438, 0.0
  %v2465 = vmax.f32 %v1443, 0.0
  %v2466 = vmax.f32 %v1448, 0.0
  %v2467 = vmax.f32 %v1453, 0.0
  %v2468 = vmax.f32 %v1458, 0.0
  %v2469 = vmax.f32 %v1463, 0.0
  %v2470 = vmax.f32 %v1468, 0.0
  %v2471 = vmax.f32 %v1473, 0.0
  %v2472 = vmax.f32 %v1478, 0.0
  %v2473 = vmax.f32 %v1483, 0.0
  %v2474 = vmax.f32 %v1488, 0.0
  %v2475 = vmax.f32 %v1493, 0.0
  %v2476 = vmax.f32 %v1498, 0.0
  %v2477 = vmax.f32 %v1503, 0.0
  %v2478 = vmax.f32 %v1508, 0.0
  %v2479 = vmax.f32 %v1513, 0.0
  %v2480 = vmax.f32 %v1518, 0.0
  %v2481 = vmax.f32 %v1523, 0.0
  %v2482 = vmax.f32 %v1528, 0.0
  %v2483 = vmax.f32 %v1533, 0.0
  %v2484 = vmax.f32 %v1538, 0.0
  %v2485 = vmax.f32 %v1543, 0.0
  %v2486 = vmax.f32 %v1548, 0.0
  %v2487 = vmax.f32 %v1553, 0.0
  %v2488 = vmax.f32 %v1558, 0.0
  %v2489 = vmax.f32 %v1563, 0.0
  %v2490 = vmax.f32 %v1568, 0.0
  %v2491 = vmax.f32 %v1573, 0.0
  %v2492 = vmax.f32 %v1578, 0.0
  %v2493 = vmax.f32 %v1583, 0.0
  %v2494 = vmax.f32 %v1588, 0.0
  %v2495 = vmax.f32 %v1593, 0.0
  %v2496 = vmax.f32 %v1598, 0.0
  %v2497 = vmax.f32 %v1603, 0.0
  %v2498 = vmax.f32 %v1608, 0.0
  %v2499 = vmax.f32 %v1613, 0.0
  %v2500 = vmax.f32 %v1618, 0.0
  %v2501 = vmax.f32 %v1623, 0.0
  %v2502 = vmax.f32 %v1628, 0.0
  %v2503 = vmax.f32 %v1633, 0.0
  %v2504 = vmax.f32 %v1638, 0.0
  %v2505 = vmax.f32 %v1643, 0.0
  %v2506 = vmax.f32 %v1648, 0.0
  %v2507 = vmax.f32 %v1653, 0.0
  %v2508 = vmax.f32 %v1658, 0.0
  %v2509 = vmax.f32 %v1663, 0.0
  %v2510 = vmax.f32 %v1668, 0.0
  %v2511 = vmax.f32 %v1673, 0.0
  %v2512 = vmax.f32 %v1678, 0.0
  %v2513 = vmax.f32 %v1683, 0.0
  %v2514 = vmax.f32 %v1688, 0.0
  %v2515 = vmax.f32 %v1693, 0.0
  %v2516 = vmax.f32 %v1698, 0.0
  %v2517 = vmax.f32 %v1703, 0.0
  %v2518 = vmax.f32 %v1708, 0.0
  %v2519 = vmax.f32 %v1713, 0.0
  %v2520 = vmax.f32 %v1718, 0.0
  %v2521 = vmax.f32 %v1723, 0.0
  %v2522 = vmax.f32 %v1728, 0.0
  %v2523 = vmax.f32 %v1733, 0.0
  %v2524 = vmax.f32 %v1738, 0.0
  %v2525 = vmax.f32 %v1743, 0.0
  %v2526 = vmax.f32 %v1748, 0.0
  %v2527 = vmax.f32 %v1753, 0.0
  %v2528 = vmax.f32 %v1758, 0.0
  %v2529 = vmax.f32 %v1763, 0.0
  %v2530 = vmax.f32 %v1768, 0.0
  %v2531 = vmax.f32 %v1773, 0.0
  %v2532 = vmax.f32 %v1778, 0.0
  %v2533 = vmax.f32 %v1783, 0.0
  %v2534 = vmax.f32 %v1788, 0.0
  %v2535 = vmax.f32 %v1793, 0.0
  %v2536 = vmax.f32 %v1798, 0.0
  %v2537 = vmax.f32 %v1803, 0.0
  %v2538 = vmax.f32 %v1808, 0.0
  %v2539 = vmax.f32 %v1813, 0.0
  %v2540 = vmax.f32 %v1818, 0.0
  %v2541 = vmax.f32 %v1823, 0.0
  %v2542 = vmax.f32 %v1828, 0.0
  %v2543 = vmax.f32 %v1833, 0.0
  %v2544 = vmax.f32 %v1838, 0.0
  %v2545 = vmax.f32 %v1843, 0.0
  %v2546 = vmax.f32 %v1848, 0.0
  %v2547 = vmax.f32 %v1853, 0.0
  %v2548 = vmax.f32 %v1858, 0.0
  %v2549 = vmax.f32 %v1863, 0.0
  %v2550 = vmax.f32 %v1868, 0.0
  %v2551 = vmax.f32 %v1873, 0.0
  %v2552 = vmax.f32 %v1878, 0.0
  %v2553 = vmax.f32 %v1883, 0.0
  %v2554 = vmax.f32 %v1888, 0.0
  %v2555 = vmax.f32 %v1893, 0.0
  %v2556 = vmax.f32 %v1898, 0.0
  %v2557 = vmax.f32 %v1903, 0.0
  %v2558 = vmax.f32 %v1908, 0.0
  %v2559 = vmax.f32 %v1913, 0.0
  %v2560 = vmax.f32 %v1918, 0.0
  %v2561 = vmax.f32 %v1923, 0.0
  %v2562 = vmax.f32 %v1928, 0.0
  %v2563 = vmax.f32 %v1933, 0.0
  %v2564 = vmax.f32 %v1938, 0.0
  %v2565 = vmax.f32 %v1943, 0.0
  %v2566 = vmax.f32 %v1948, 0.0
  %v2567 = vmax.f32 %v1953, 0.0
  %v2568 = vmax.f32 %v1958, 0.0
  %v2569 = vmax.f32 %v1963, 0.0
  %v2570 = vmax.f32 %v1968, 0.0
  %v2571 = vmax.f32 %v1973, 0.0
  %v2572 = vmax.f32 %v1978, 0.0
  %v2573 = vmax.f32 %v1983, 0.0
  %v2574 = vmax.f32 %v1988, 0.0
  %v2575 = vmax.f32 %v1993, 0.0
  %v2576 = vmax.f32 %v1998, 0.0
  %v2577 = vmax.f32 %v2003, 0.0
  %v2578 = vmax.f32 %v2008, 0.0
  %v2579 = vmax.f32 %v2013, 0.0
  %v2580 = vmax.f32 %v2018, 0.0
  %v2581 = vmax.f32 %v2023, 0.0
  %v2582 = vmax.f32 %v2028, 0.0
  %v2583 = vmax.f32 %v2033, 0.0
  %v2584 = vmax.f32 %v2038, 0.0
  %v2585 = vmax.f32 %v2043, 0.0
  %v2586 = vmax.f32 %v2048, 0.0
  %v2587 = vmax.f32 %v2053, 0.0
  %v2588 = vmax.f32 %v2058, 0.0
  %v2589 = vmax.f32 %v2063, 0.0
  %v2590 = vmax.f32 %v2068, 0.0
  %v2591 = vmax.f32 %v2073, 0.0
  %v2592 = vmax.f32 %v2078, 0.0
  %v2593 = vmax.f32 %v2083, 0.0
  %v2594 = vmax.f32 %v2088, 0.0
  %v2595 = vmax.f32 %v2093, 0.0
  %v2596 = vmax.f32 %v2098, 0.0
  %v2597 = vmax.f32 %v2103, 0.0
  %v2598 = vmax.f32 %v2108, 0.0
  %v2599 = vmax.f32 %v2113, 0.0
  %v2600 = vmax.f32 %v2118, 0.0
  %v2601 = vmax.f32 %v2123, 0.0
  %v2602 = vmax.f32 %v2128, 0.0
  %v2603 = vmax.f32 %v2133, 0.0
  %v2604 = vmax.f32 %v2138, 0.0
  %v2605 = vmax.f32 %v2143, 0.0
  %v2606 = vmax.f32 %v2148, 0.0
  %v2607 = vmax.f32 %v2153, 0.0
  %v2608 = vmax.f32 %v2158, 0.0
  %v2609 = vmax.f32 %v2163, 0.0
  %v2610 = vmax.f32 %v2168, 0.0
  %v2611 = vmax.f32 %v2173, 0.0
  %v2612 = vmax.f32 %v2178, 0.0
  %v2613 = vmax.f32 %v2183, 0.0
  %v2614 = vmax.f32 %v2188, 0.0
  %v2615 = vmax.f32 %v2193, 0.0
  %v2616 = vmax.f32 %v2198, 0.0
  %v2617 = vmax.f32 %v2203, 0.0
  %v2618 = vmax.f32 %v2208, 0.0
  %v2619 = vmax.f32 %v2213, 0.0
  %v2620 = vmax.f32 %v2218, 0.0
  %v2621 = vmax.f32 %v2223, 0.0
  %v2622 = vmax.f32 %v2228, 0.0
  %v2623 = vmax.f32 %v2233, 0.0
  %v2624 = vmax.f32 %v2238, 0.0
  %v2625 = vmax.f32 %v2243, 0.0
  %v2626 = vmax.f32 %v2248, 0.0
  %v2627 = vmax.f32 %v2253, 0.0
  %v2628 = vmax.f32 %v2258, 0.0
  %v2629 = vmax.f32 %v2263, 0.0
  %v2630 = vmax.f32 %v2268, 0.0
  %v2631 = vmax.f32 %v2273, 0.0
  %v2632 = vmax.f32 %v2278, 0.0
  %v2633 = vmax.f32 %v2283, 0.0
  %v2634 = vmax.f32 %v2288, 0.0
  %v2635 = vmax.f32 %v2293, 0.0
  %v2636 = vmax.f32 %v2298, 0.0
  %v2637 = vmax.f32 %v2303, 0.0
  %v2638 = vmax.f32 %v2308, 0.0
  %v2639 = vmax.f32 %v2313, 0.0
  %v2640 = vmax.f32 %v2318, 0.0
  %v2641 = vmax.f32 %v2323, 0.0
  %v2642 = vmax.f32 %v2328, 0.0
  %v2643 = vmax.f32 %v2333, 0.0
  %v2644 = vmax.f32 %v2338, 0.0
  %v2645 = vmax.f32 %v2343, 0.0
  %v2646 = vmax.f32 %v2348, 0.0
  %v2647 = vmax.f32 %v2353, 0.0
  %v2648 = vmax.f32 %v2358, 0.0
  %v2649 = vmax.f32 %v2363, 0.0
  %v2650 = vmax.f32 %v2368, 0.0
  %v2651 = vmax.f32 %v2373, 0.0
  %v2652 = vmax.f32 %v2378, 0.0
  %v2653 = vmax.f32 %v2383, 0.0
  %v2654 = vmax.f32 %v2388, 0.0
  %v2655 = vmax.f32 %v2393, 0.0
  %v2656 = vmax.f32 %v2398, 0.0
  %vm2657 = vcmask 523264
  %v2658 = vsel %vm2657, %v2401, 0.0
  %v2659 = vsel %vm2657, %v2402, 0.0
  %v2660 = vadd.f32 %v2658, %v2659
  %v2661 = vsel %vm2657, %v2403, 0.0
  %v2662 = vadd.f32 %v2660, %v2661
  %v2663 = vsel %vm2657, %v2404, 0.0
  %v2664 = vadd.f32 %v2662, %v2663
  %v2665 = vsel %vm2657, %v2405, 0.0
  %v2666 = vadd.f32 %v2664, %v2665
  %v2667 = vsel %vm2657, %v2406, 0.0
  %v2668 = vadd.f32 %v2666, %v2667
  %v2669 = vsel %vm2657, %v2407, 0.0
  %v2670 = vadd.f32 %v2668, %v2669
  %v2671 = vsel %vm2657, %v2408, 0.0
  %v2672 = vadd.f32 %v2670, %v2671
  %v2673 = vsel %vm2657, %v2409, 0.0
  %v2674 = vadd.f32 %v2672, %v2673
  %v2675 = vsel %vm2657, %v2410, 0.0
  %v2676 = vadd.f32 %v2674, %v2675
  %v2677 = vsel %vm2657, %v2411, 0.0
  %v2678 = vadd.f32 %v2676, %v2677
  %v2679 = vsel %vm2657, %v2412, 0.0
  %v2680 = vadd.f32 %v2678, %v2679
  %v2681 = vsel %vm2657, %v2413, 0.0
  %v2682 = vadd.f32 %v2680, %v2681
  %v2683 = vsel %vm2657, %v2414, 0.0
  %v2684 = vadd.f32 %v2682, %v2683
  %v2685 = vsel %vm2657, %v2415, 0.0
  %v2686 = vadd.f32 %v2684, %v2685
  %v2687 = vsel %vm2657, %v2416, 0.0
  %v2688 = vadd.f32 %v2686, %v2687
  %v2689 = vsel %vm2657, %v2417, 0.0
  %v2690 = vadd.f32 %v2688, %v2689
  %v2691 = vsel %vm2657, %v2418, 0.0
  %v2692 = vadd.f32 %v2690, %v2691
  %v2693 = vsel %vm2657, %v2419, 0.0
  %v2694 = vadd.f32 %v2692, %v2693
  %v2695 = vsel %vm2657, %v2420, 0.0
  %v2696 = vadd.f32 %v2694, %v2695
  %v2697 = vsel %vm2657, %v2421, 0.0
  %v2698 = vadd.f32 %v2696, %v2697
  %v2699 = vsel %vm2657, %v2422, 0.0
  %v2700 = vadd.f32 %v2698, %v2699
  %v2701 = vsel %vm2657, %v2423, 0.0
  %v2702 = vadd.f32 %v2700, %v2701
  %v2703 = vsel %vm2657, %v2424, 0.0
  %v2704 = vadd.f32 %v2702, %v2703
  %v2705 = vsel %vm2657, %v2425, 0.0
  %v2706 = vadd.f32 %v2704, %v2705
  %v2707 = vsel %vm2657, %v2426, 0.0
  %v2708 = vadd.f32 %v2706, %v2707
  %v2709 = vsel %vm2657, %v2427, 0.0
  %v2710 = vadd.f32 %v2708, %v2709
  %v2711 = vsel %vm2657, %v2428, 0.0
  %v2712 = vadd.f32 %v2710, %v2711
  %v2713 = vsel %vm2657, %v2429, 0.0
  %v2714 = vadd.f32 %v2712, %v2713
  %v2715 = vsel %vm2657, %v2430, 0.0
  %v2716 = vadd.f32 %v2714, %v2715
  %v2717 = vsel %vm2657, %v2431, 0.0
  %v2718 = vadd.f32 %v2716, %v2717
  %v2719 = vsel %vm2657, %v2432, 0.0
  %v2720 = vadd.f32 %v2718, %v2719
  %v2721 = vrot.slane %v2720, 4
  %v2722 = vadd.f32 %v2720, %v2721
  %v2723 = vrot.slane %v2722, 2
  %v2724 = vadd.f32 %v2722, %v2723
  %v2725 = vrot.slane %v2724, 1
  %v2726 = vadd.f32 %v2724, %v2725
  %v2727 = vsel %vm2657, %v2433, 0.0
  %v2728 = vsel %vm2657, %v2434, 0.0
  %v2729 = vadd.f32 %v2727, %v2728
  %v2730 = vsel %vm2657, %v2435, 0.0
  %v2731 = vadd.f32 %v2729, %v2730
  %v2732 = vsel %vm2657, %v2436, 0.0
  %v2733 = vadd.f32 %v2731, %v2732
  %v2734 = vsel %vm2657, %v2437, 0.0
  %v2735 = vadd.f32 %v2733, %v2734
  %v2736 = vsel %vm2657, %v2438, 0.0
  %v2737 = vadd.f32 %v2735, %v2736
  %v2738 = vsel %vm2657, %v2439, 0.0
  %v2739 = vadd.f32 %v2737, %v2738
  %v2740 = vsel %vm2657, %v2440, 0.0
  %v2741 = vadd.f32 %v2739, %v2740
  %v2742 = vsel %vm2657, %v2441, 0.0
  %v2743 = vadd.f32 %v2741, %v2742
  %v2744 = vsel %vm2657, %v2442, 0.0
  %v2745 = vadd.f32 %v2743, %v2744
  %v2746 = vsel %vm2657, %v2443, 0.0
  %v2747 = vadd.f32 %v2745, %v2746
  %v2748 = vsel %vm2657, %v2444, 0.0
  %v2749 = vadd.f32 %v2747, %v2748
  %v2750 = vsel %vm2657, %v2445, 0.0
  %v2751 = vadd.f32 %v2749, %v2750
  %v2752 = vsel %vm2657, %v2446, 0.0
  %v2753 = vadd.f32 %v2751, %v2752
  %v2754 = vsel %vm2657, %v2447, 0.0
  %v2755 = vadd.f32 %v2753, %v2754
  %v2756 = vsel %vm2657, %v2448, 0.0
  %v2757 = vadd.f32 %v2755, %v2756
  %v2758 = vsel %vm2657, %v2449, 0.0
  %v2759 = vadd.f32 %v2757, %v2758
  %v2760 = vsel %vm2657, %v2450, 0.0
  %v2761 = vadd.f32 %v2759, %v2760
  %v2762 = vsel %vm2657, %v2451, 0.0
  %v2763 = vadd.f32 %v2761, %v2762
  %v2764 = vsel %vm2657, %v2452, 0.0
  %v2765 = vadd.f32 %v2763, %v2764
  %v2766 = vsel %vm2657, %v2453, 0.0
  %v2767 = vadd.f32 %v2765, %v2766
  %v2768 = vsel %vm2657, %v2454, 0.0
  %v2769 = vadd.f32 %v2767, %v2768
  %v2770 = vsel %vm2657, %v2455, 0.0
  %v2771 = vadd.f32 %v2769, %v2770
  %v2772 = vsel %vm2657, %v2456, 0.0
  %v2773 = vadd.f32 %v2771, %v2772
  %v2774 = vsel %vm2657, %v2457, 0.0
  %v2775 = vadd.f32 %v2773, %v2774
  %v2776 = vsel %vm2657, %v2458, 0.0
  %v2777 = vadd.f32 %v2775, %v2776
  %v2778 = vsel %vm2657, %v2459, 0.0
  %v2779 = vadd.f32 %v2777, %v2778
  %v2780 = vsel %vm2657, %v2460, 0.0
  %v2781 = vadd.f32 %v2779, %v2780
  %v2782 = vsel %vm2657, %v2461, 0.0
  %v2783 = vadd.f32 %v2781, %v2782
  %v2784 = vsel %vm2657, %v2462, 0.0
  %v2785 = vadd.f32 %v2783, %v2784
  %v2786 = vsel %vm2657, %v2463, 0.0
  %v2787 = vadd.f32 %v2785, %v2786
  %v2788 = vsel %vm2657, %v2464, 0.0
  %v2789 = vadd.f32 %v2787, %v2788
  %v2790 = vrot.slane %v2789, 4
  %v2791 = vadd.f32 %v2789, %v2790
  %v2792 = vrot.slane %v2791, 2
  %v2793 = vadd.f32 %v2791, %v2792
  %v2794 = vrot.slane %v2793, 1
  %v2795 = vadd.f32 %v2793, %v2794
  %v2796 = vsel %vm2657, %v2465, 0.0
  %v2797 = vsel %vm2657, %v2466, 0.0
  %v2798 = vadd.f32 %v2796, %v2797
  %v2799 = vsel %vm2657, %v2467, 0.0
  %v2800 = vadd.f32 %v2798, %v2799
  %v2801 = vsel %vm2657, %v2468, 0.0
  %v2802 = vadd.f32 %v2800, %v2801
  %v2803 = vsel %vm2657, %v2469, 0.0
  %v2804 = vadd.f32 %v2802, %v2803
  %v2805 = vsel %vm2657, %v2470, 0.0
  %v2806 = vadd.f32 %v2804, %v2805
  %v2807 = vsel %vm2657, %v2471, 0.0
  %v2808 = vadd.f32 %v2806, %v2807
  %v2809 = vsel %vm2657, %v2472, 0.0
  %v2810 = vadd.f32 %v2808, %v2809
  %v2811 = vsel %vm2657, %v2473, 0.0
  %v2812 = vadd.f32 %v2810, %v2811
  %v2813 = vsel %vm2657, %v2474, 0.0
  %v2814 = vadd.f32 %v2812, %v2813
  %v2815 = vsel %vm2657, %v2475, 0.0
  %v2816 = vadd.f32 %v2814, %v2815
  %v2817 = vsel %vm2657, %v2476, 0.0
  %v2818 = vadd.f32 %v2816, %v2817
  %v2819 = vsel %vm2657, %v2477, 0.0
  %v2820 = vadd.f32 %v2818, %v2819
  %v2821 = vsel %vm2657, %v2478, 0.0
  %v2822 = vadd.f32 %v2820, %v2821
  %v2823 = vsel %vm2657, %v2479, 0.0
  %v2824 = vadd.f32 %v2822, %v2823
  %v2825 = vsel %vm2657, %v2480, 0.0
  %v2826 = vadd.f32 %v2824, %v2825
  %v2827 = vsel %vm2657, %v2481, 0.0
  %v2828 = vadd.f32 %v2826, %v2827
  %v2829 = vsel %vm2657, %v2482, 0.0
  %v2830 = vadd.f32 %v2828, %v2829
  %v2831 = vsel %vm2657, %v2483, 0.0
  %v2832 = vadd.f32 %v2830, %v2831
  %v2833 = vsel %vm2657, %v2484, 0.0
  %v2834 = vadd.f32 %v2832, %v2833
  %v2835 = vsel %vm2657, %v2485, 0.0
  %v2836 = vadd.f32 %v2834, %v2835
  %v2837 = vsel %vm2657, %v2486, 0.0
  %v2838 = vadd.f32 %v2836, %v2837
  %v2839 = vsel %vm2657, %v2487, 0.0
  %v2840 = vadd.f32 %v2838, %v2839
  %v2841 = vsel %vm2657, %v2488, 0.0
  %v2842 = vadd.f32 %v2840, %v2841
  %v2843 = vsel %vm2657, %v2489, 0.0
  %v2844 = vadd.f32 %v2842, %v2843
  %v2845 = vsel %vm2657, %v2490, 0.0
  %v2846 = vadd.f32 %v2844, %v2845
  %v2847 = vsel %vm2657, %v2491, 0.0
  %v2848 = vadd.f32 %v2846, %v2847
  %v2849 = vsel %vm2657, %v2492, 0.0
  %v2850 = vadd.f32 %v2848, %v2849
  %v2851 = vsel %vm2657, %v2493, 0.0
  %v2852 = vadd.f32 %v2850, %v2851
  %v2853 = vsel %vm2657, %v2494, 0.0
  %v2854 = vadd.f32 %v2852, %v2853
  %v2855 = vsel %vm2657, %v2495, 0.0
  %v2856 = vadd.f32 %v2854, %v2855
  %v2857 = vsel %vm2657, %v2496, 0.0
  %v2858 = vadd.f32 %v2856, %v2857
  %v2859 = vrot.slane %v2858, 4
  %v2860 = vadd.f32 %v2858, %v2859
  %v2861 = vrot.slane %v2860, 2
  %v2862 = vadd.f32 %v2860, %v2861
  %v2863 = vrot.slane %v2862, 1
  %v2864 = vadd.f32 %v2862, %v2863
  %v2865 = vsel %vm2657, %v2497, 0.0
  %v2866 = vsel %vm2657, %v2498, 0.0
  %v2867 = vadd.f32 %v2865, %v2866
  %v2868 = vsel %vm2657, %v2499, 0.0
  %v2869 = vadd.f32 %v2867, %v2868
  %v2870 = vsel %vm2657, %v2500, 0.0
  %v2871 = vadd.f32 %v2869, %v2870
  %v2872 = vsel %vm2657, %v2501, 0.0
  %v2873 = vadd.f32 %v2871, %v2872
  %v2874 = vsel %vm2657, %v2502, 0.0
  %v2875 = vadd.f32 %v2873, %v2874
  %v2876 = vsel %vm2657, %v2503, 0.0
  %v2877 = vadd.f32 %v2875, %v2876
  %v2878 = vsel %vm2657, %v2504, 0.0
  %v2879 = vadd.f32 %v2877, %v2878
  %v2880 = vsel %vm2657, %v2505, 0.0
  %v2881 = vadd.f32 %v2879, %v2880
  %v2882 = vsel %vm2657, %v2506, 0.0
  %v2883 = vadd.f32 %v2881, %v2882
  %v2884 = vsel %vm2657, %v2507, 0.0
  %v2885 = vadd.f32 %v2883, %v2884
  %v2886 = vsel %vm2657, %v2508, 0.0
  %v2887 = vadd.f32 %v2885, %v2886
  %v2888 = vsel %vm2657, %v2509, 0.0
  %v2889 = vadd.f32 %v2887, %v2888
  %v2890 = vsel %vm2657, %v2510, 0.0
  %v2891 = vadd.f32 %v2889, %v2890
  %v2892 = vsel %vm2657, %v2511, 0.0
  %v2893 = vadd.f32 %v2891, %v2892
  %v2894 = vsel %vm2657, %v2512, 0.0
  %v2895 = vadd.f32 %v2893, %v2894
  %v2896 = vsel %vm2657, %v2513, 0.0
  %v2897 = vadd.f32 %v2895, %v2896
  %v2898 = vsel %vm2657, %v2514, 0.0
  %v2899 = vadd.f32 %v2897, %v2898
  %v2900 = vsel %vm2657, %v2515, 0.0
  %v2901 = vadd.f32 %v2899, %v2900
  %v2902 = vsel %vm2657, %v2516, 0.0
  %v2903 = vadd.f32 %v2901, %v2902
  %v2904 = vsel %vm2657, %v2517, 0.0
  %v2905 = vadd.f32 %v2903, %v2904
  %v2906 = vsel %vm2657, %v2518, 0.0
  %v2907 = vadd.f32 %v2905, %v2906
  %v2908 = vsel %vm2657, %v2519, 0.0
  %v2909 = vadd.f32 %v2907, %v2908
  %v2910 = vsel %vm2657, %v2520, 0.0
  %v2911 = vadd.f32 %v2909, %v2910
  %v2912 = vsel %vm2657, %v2521, 0.0
  %v2913 = vadd.f32 %v2911, %v2912
  %v2914 = vsel %vm2657, %v2522, 0.0
  %v2915 = vadd.f32 %v2913, %v2914
  %v2916 = vsel %vm2657, %v2523, 0.0
  %v2917 = vadd.f32 %v2915, %v2916
  %v2918 = vsel %vm2657, %v2524, 0.0
  %v2919 = vadd.f32 %v2917, %v2918
  %v2920 = vsel %vm2657, %v2525, 0.0
  %v2921 = vadd.f32 %v2919, %v2920
  %v2922 = vsel %vm2657, %v2526, 0.0
  %v2923 = vadd.f32 %v2921, %v2922
  %v2924 = vsel %vm2657, %v2527, 0.0
  %v2925 = vadd.f32 %v2923, %v2924
  %v2926 = vsel %vm2657, %v2528, 0.0
  %v2927 = vadd.f32 %v2925, %v2926
  %v2928 = vrot.slane %v2927, 4
  %v2929 = vadd.f32 %v2927, %v2928
  %v2930 = vrot.slane %v2929, 2
  %v2931 = vadd.f32 %v2929, %v2930
  %v2932 = vrot.slane %v2931, 1
  %v2933 = vadd.f32 %v2931, %v2932
  %v2934 = vsel %vm2657, %v2529, 0.0
  %v2935 = vsel %vm2657, %v2530, 0.0
  %v2936 = vadd.f32 %v2934, %v2935
  %v2937 = vsel %vm2657, %v2531, 0.0
  %v2938 = vadd.f32 %v2936, %v2937
  %v2939 = vsel %vm2657, %v2532, 0.0
  %v2940 = vadd.f32 %v2938, %v2939
  %v2941 = vsel %vm2657, %v2533, 0.0
  %v2942 = vadd.f32 %v2940, %v2941
  %v2943 = vsel %vm2657, %v2534, 0.0
  %v2944 = vadd.f32 %v2942, %v2943
  %v2945 = vsel %vm2657, %v2535, 0.0
  %v2946 = vadd.f32 %v2944, %v2945
  %v2947 = vsel %vm2657, %v2536, 0.0
  %v2948 = vadd.f32 %v2946, %v2947
  %v2949 = vsel %vm2657, %v2537, 0.0
  %v2950 = vadd.f32 %v2948, %v2949
  %v2951 = vsel %vm2657, %v2538, 0.0
  %v2952 = vadd.f32 %v2950, %v2951
  %v2953 = vsel %vm2657, %v2539, 0.0
  %v2954 = vadd.f32 %v2952, %v2953
  %v2955 = vsel %vm2657, %v2540, 0.0
  %v2956 = vadd.f32 %v2954, %v2955
  %v2957 = vsel %vm2657, %v2541, 0.0
  %v2958 = vadd.f32 %v2956, %v2957
  %v2959 = vsel %vm2657, %v2542, 0.0
  %v2960 = vadd.f32 %v2958, %v2959
  %v2961 = vsel %vm2657, %v2543, 0.0
  %v2962 = vadd.f32 %v2960, %v2961
  %v2963 = vsel %vm2657, %v2544, 0.0
  %v2964 = vadd.f32 %v2962, %v2963
  %v2965 = vsel %vm2657, %v2545, 0.0
  %v2966 = vadd.f32 %v2964, %v2965
  %v2967 = vsel %vm2657, %v2546, 0.0
  %v2968 = vadd.f32 %v2966, %v2967
  %v2969 = vsel %vm2657, %v2547, 0.0
  %v2970 = vadd.f32 %v2968, %v2969
  %v2971 = vsel %vm2657, %v2548, 0.0
  %v2972 = vadd.f32 %v2970, %v2971
  %v2973 = vsel %vm2657, %v2549, 0.0
  %v2974 = vadd.f32 %v2972, %v2973
  %v2975 = vsel %vm2657, %v2550, 0.0
  %v2976 = vadd.f32 %v2974, %v2975
  %v2977 = vsel %vm2657, %v2551, 0.0
  %v2978 = vadd.f32 %v2976, %v2977
  %v2979 = vsel %vm2657, %v2552, 0.0
  %v2980 = vadd.f32 %v2978, %v2979
  %v2981 = vsel %vm2657, %v2553, 0.0
  %v2982 = vadd.f32 %v2980, %v2981
  %v2983 = vsel %vm2657, %v2554, 0.0
  %v2984 = vadd.f32 %v2982, %v2983
  %v2985 = vsel %vm2657, %v2555, 0.0
  %v2986 = vadd.f32 %v2984, %v2985
  %v2987 = vsel %vm2657, %v2556, 0.0
  %v2988 = vadd.f32 %v2986, %v2987
  %v2989 = vsel %vm2657, %v2557, 0.0
  %v2990 = vadd.f32 %v2988, %v2989
  %v2991 = vsel %vm2657, %v2558, 0.0
  %v2992 = vadd.f32 %v2990, %v2991
  %v2993 = vsel %vm2657, %v2559, 0.0
  %v2994 = vadd.f32 %v2992, %v2993
  %v2995 = vsel %vm2657, %v2560, 0.0
  %v2996 = vadd.f32 %v2994, %v2995
  %v2997 = vrot.slane %v2996, 4
  %v2998 = vadd.f32 %v2996, %v2997
  %v2999 = vrot.slane %v2998, 2
  %v3000 = vadd.f32 %v2998, %v2999
  %v3001 = vrot.slane %v3000, 1
  %v3002 = vadd.f32 %v3000, %v3001
  %v3003 = vsel %vm2657, %v2561, 0.0
  %v3004 = vsel %vm2657, %v2562, 0.0
  %v3005 = vadd.f32 %v3003, %v3004
  %v3006 = vsel %vm2657, %v2563, 0.0
  %v3007 = vadd.f32 %v3005, %v3006
  %v3008 = vsel %vm2657, %v2564, 0.0
  %v3009 = vadd.f32 %v3007, %v3008
  %v3010 = vsel %vm2657, %v2565, 0.0
  %v3011 = vadd.f32 %v3009, %v3010
  %v3012 = vsel %vm2657, %v2566, 0.0
  %v3013 = vadd.f32 %v3011, %v3012
  %v3014 = vsel %vm2657, %v2567, 0.0
  %v3015 = vadd.f32 %v3013, %v3014
  %v3016 = vsel %vm2657, %v2568, 0.0
  %v3017 = vadd.f32 %v3015, %v3016
  %v3018 = vsel %vm2657, %v2569, 0.0
  %v3019 = vadd.f32 %v3017, %v3018
  %v3020 = vsel %vm2657, %v2570, 0.0
  %v3021 = vadd.f32 %v3019, %v3020
  %v3022 = vsel %vm2657, %v2571, 0.0
  %v3023 = vadd.f32 %v3021, %v3022
  %v3024 = vsel %vm2657, %v2572, 0.0
  %v3025 = vadd.f32 %v3023, %v3024
  %v3026 = vsel %vm2657, %v2573, 0.0
  %v3027 = vadd.f32 %v3025, %v3026
  %v3028 = vsel %vm2657, %v2574, 0.0
  %v3029 = vadd.f32 %v3027, %v3028
  %v3030 = vsel %vm2657, %v2575, 0.0
  %v3031 = vadd.f32 %v3029, %v3030
  %v3032 = vsel %vm2657, %v2576, 0.0
  %v3033 = vadd.f32 %v3031, %v3032
  %v3034 = vsel %vm2657, %v2577, 0.0
  %v3035 = vadd.f32 %v3033, %v3034
  %v3036 = vsel %vm2657, %v2578, 0.0
  %v3037 = vadd.f32 %v3035, %v3036
  %v3038 = vsel %vm2657, %v2579, 0.0
  %v3039 = vadd.f32 %v3037, %v3038
  %v3040 = vsel %vm2657, %v2580, 0.0
  %v3041 = vadd.f32 %v3039, %v3040
  %v3042 = vsel %vm2657, %v2581, 0.0
  %v3043 = vadd.f32 %v3041, %v3042
  %v3044 = vsel %vm2657, %v2582, 0.0
  %v3045 = vadd.f32 %v3043, %v3044
  %v3046 = vsel %vm2657, %v2583, 0.0
  %v3047 = vadd.f32 %v3045, %v3046
  %v3048 = vsel %vm2657, %v2584, 0.0
  %v3049 = vadd.f32 %v3047, %v3048
  %v3050 = vsel %vm2657, %v2585, 0.0
  %v3051 = vadd.f32 %v3049, %v3050
  %v3052 = vsel %vm2657, %v2586, 0.0
  %v3053 = vadd.f32 %v3051, %v3052
  %v3054 = vsel %vm2657, %v2587, 0.0
  %v3055 = vadd.f32 %v3053, %v3054
  %v3056 = vsel %vm2657, %v2588, 0.0
  %v3057 = vadd.f32 %v3055, %v3056
  %v3058 = vsel %vm2657, %v2589, 0.0
  %v3059 = vadd.f32 %v3057, %v3058
  %v3060 = vsel %vm2657, %v2590, 0.0
  %v3061 = vadd.f32 %v3059, %v3060
  %v3062 = vsel %vm2657, %v2591, 0.0
  %v3063 = vadd.f32 %v3061, %v3062
  %v3064 = vsel %vm2657, %v2592, 0.0
  %v3065 = vadd.f32 %v3063, %v3064
  %v3066 = vrot.slane %v3065, 4
  %v3067 = vadd.f32 %v3065, %v3066
  %v3068 = vrot.slane %v3067, 2
  %v3069 = vadd.f32 %v3067, %v3068
  %v3070 = vrot.slane %v3069, 1
  %v3071 = vadd.f32 %v3069, %v3070
  %v3072 = vsel %vm2657, %v2593, 0.0
  %v3073 = vsel %vm2657, %v2594, 0.0
  %v3074 = vadd.f32 %v3072, %v3073
  %v3075 = vsel %vm2657, %v2595, 0.0
  %v3076 = vadd.f32 %v3074, %v3075
  %v3077 = vsel %vm2657, %v2596, 0.0
  %v3078 = vadd.f32 %v3076, %v3077
  %v3079 = vsel %vm2657, %v2597, 0.0
  %v3080 = vadd.f32 %v3078, %v3079
  %v3081 = vsel %vm2657, %v2598, 0.0
  %v3082 = vadd.f32 %v3080, %v3081
  %v3083 = vsel %vm2657, %v2599, 0.0
  %v3084 = vadd.f32 %v3082, %v3083
  %v3085 = vsel %vm2657, %v2600, 0.0
  %v3086 = vadd.f32 %v3084, %v3085
  %v3087 = vsel %vm2657, %v2601, 0.0
  %v3088 = vadd.f32 %v3086, %v3087
  %v3089 = vsel %vm2657, %v2602, 0.0
  %v3090 = vadd.f32 %v3088, %v3089
  %v3091 = vsel %vm2657, %v2603, 0.0
  %v3092 = vadd.f32 %v3090, %v3091
  %v3093 = vsel %vm2657, %v2604, 0.0
  %v3094 = vadd.f32 %v3092, %v3093
  %v3095 = vsel %vm2657, %v2605, 0.0
  %v3096 = vadd.f32 %v3094, %v3095
  %v3097 = vsel %vm2657, %v2606, 0.0
  %v3098 = vadd.f32 %v3096, %v3097
  %v3099 = vsel %vm2657, %v2607, 0.0
  %v3100 = vadd.f32 %v3098, %v3099
  %v3101 = vsel %vm2657, %v2608, 0.0
  %v3102 = vadd.f32 %v3100, %v3101
  %v3103 = vsel %vm2657, %v2609, 0.0
  %v3104 = vadd.f32 %v3102, %v3103
  %v3105 = vsel %vm2657, %v2610, 0.0
  %v3106 = vadd.f32 %v3104, %v3105
  %v3107 = vsel %vm2657, %v2611, 0.0
  %v3108 = vadd.f32 %v3106, %v3107
  %v3109 = vsel %vm2657, %v2612, 0.0
  %v3110 = vadd.f32 %v3108, %v3109
  %v3111 = vsel %vm2657, %v2613, 0.0
  %v3112 = vadd.f32 %v3110, %v3111
  %v3113 = vsel %vm2657, %v2614, 0.0
  %v3114 = vadd.f32 %v3112, %v3113
  %v3115 = vsel %vm2657, %v2615, 0.0
  %v3116 = vadd.f32 %v3114, %v3115
  %v3117 = vsel %vm2657, %v2616, 0.0
  %v3118 = vadd.f32 %v3116, %v3117
  %v3119 = vsel %vm2657, %v2617, 0.0
  %v3120 = vadd.f32 %v3118, %v3119
  %v3121 = vsel %vm2657, %v2618, 0.0
  %v3122 = vadd.f32 %v3120, %v3121
  %v3123 = vsel %vm2657, %v2619, 0.0
  %v3124 = vadd.f32 %v3122, %v3123
  %v3125 = vsel %vm2657, %v2620, 0.0
  %v3126 = vadd.f32 %v3124, %v3125
  %v3127 = vsel %vm2657, %v2621, 0.0
  %v3128 = vadd.f32 %v3126, %v3127
  %v3129 = vsel %vm2657, %v2622, 0.0
  %v3130 = vadd.f32 %v3128, %v3129
  %v3131 = vsel %vm2657, %v2623, 0.0
  %v3132 = vadd.f32 %v3130, %v3131
  %v3133 = vsel %vm2657, %v2624, 0.0
  %v3134 = vadd.f32 %v3132, %v3133
  %v3135 = vrot.slane %v3134, 4
  %v3136 = vadd.f32 %v3134, %v3135
  %v3137 = vrot.slane %v3136, 2
  %v3138 = vadd.f32 %v3136, %v3137
  %v3139 = vrot.slane %v3138, 1
  %v3140 = vadd.f32 %v3138, %v3139
  %v3141 = vsel %vm2657, %v2625, 0.0
  %v3142 = vsel %vm2657, %v2626, 0.0
  %v3143 = vadd.f32 %v3141, %v3142
  %v3144 = vsel %vm2657, %v2627, 0.0
  %v3145 = vadd.f32 %v3143, %v3144
  %v3146 = vsel %vm2657, %v2628, 0.0
  %v3147 = vadd.f32 %v3145, %v3146
  %v3148 = vsel %vm2657, %v2629, 0.0
  %v3149 = vadd.f32 %v3147, %v3148
  %v3150 = vsel %vm2657, %v2630, 0.0
  %v3151 = vadd.f32 %v3149, %v3150
  %v3152 = vsel %vm2657, %v2631, 0.0
  %v3153 = vadd.f32 %v3151, %v3152
  %v3154 = vsel %vm2657, %v2632, 0.0
  %v3155 = vadd.f32 %v3153, %v3154
  %v3156 = vsel %vm2657, %v2633, 0.0
  %v3157 = vadd.f32 %v3155, %v3156
  %v3158 = vsel %vm2657, %v2634, 0.0
  %v3159 = vadd.f32 %v3157, %v3158
  %v3160 = vsel %vm2657, %v2635, 0.0
  %v3161 = vadd.f32 %v3159, %v3160
  %v3162 = vsel %vm2657, %v2636, 0.0
  %v3163 = vadd.f32 %v3161, %v3162
  %v3164 = vsel %vm2657, %v2637, 0.0
  %v3165 = vadd.f32 %v3163, %v3164
  %v3166 = vsel %vm2657, %v2638, 0.0
  %v3167 = vadd.f32 %v3165, %v3166
  %v3168 = vsel %vm2657, %v2639, 0.0
  %v3169 = vadd.f32 %v3167, %v3168
  %v3170 = vsel %vm2657, %v2640, 0.0
  %v3171 = vadd.f32 %v3169, %v3170
  %v3172 = vsel %vm2657, %v2641, 0.0
  %v3173 = vadd.f32 %v3171, %v3172
  %v3174 = vsel %vm2657, %v2642, 0.0
  %v3175 = vadd.f32 %v3173, %v3174
  %v3176 = vsel %vm2657, %v2643, 0.0
  %v3177 = vadd.f32 %v3175, %v3176
  %v3178 = vsel %vm2657, %v2644, 0.0
  %v3179 = vadd.f32 %v3177, %v3178
  %v3180 = vsel %vm2657, %v2645, 0.0
  %v3181 = vadd.f32 %v3179, %v3180
  %v3182 = vsel %vm2657, %v2646, 0.0
  %v3183 = vadd.f32 %v3181, %v3182
  %v3184 = vsel %vm2657, %v2647, 0.0
  %v3185 = vadd.f32 %v3183, %v3184
  %v3186 = vsel %vm2657, %v2648, 0.0
  %v3187 = vadd.f32 %v3185, %v3186
  %v3188 = vsel %vm2657, %v2649, 0.0
  %v3189 = vadd.f32 %v3187, %v3188
  %v3190 = vsel %vm2657, %v2650, 0.0
  %v3191 = vadd.f32 %v3189, %v3190
  %v3192 = vsel %vm2657, %v2651, 0.0
  %v3193 = vadd.f32 %v3191, %v3192
  %v3194 = vsel %vm2657, %v2652, 0.0
  %v3195 = vadd.f32 %v3193, %v3194
  %v3196 = vsel %vm2657, %v2653, 0.0
  %v3197 = vadd.f32 %v3195, %v3196
  %v3198 = vsel %vm2657, %v2654, 0.0
  %v3199 = vadd.f32 %v3197, %v3198
  %v3200 = vsel %vm2657, %v2655, 0.0
  %v3201 = vadd.f32 %v3199, %v3200
  %v3202 = vsel %vm2657, %v2656, 0.0
  %v3203 = vadd.f32 %v3201, %v3202
  %v3204 = vrot.slane %v3203, 4
  %v3205 = vadd.f32 %v3203, %v3204
  %v3206 = vrot.slane %v3205, 2
  %v3207 = vadd.f32 %v3205, %v3206
  %v3208 = vrot.slane %v3207, 1
  %v3209 = vadd.f32 %v3207, %v3208
  %v3210 = vrcp.pop 256.0
  %v3211 = vmul.f32 %v2726, %v3210
  %v3212 = vmul.f32 %v2795, %v3210
  %v3213 = vmul.f32 %v2864, %v3210
  %v3214 = vmul.f32 %v2933, %v3210
  %v3215 = vmul.f32 %v3002, %v3210
  %v3216 = vmul.f32 %v3071, %v3210
  %v3217 = vmul.f32 %v3140, %v3210
  %v3218 = vmul.f32 %v3209, %v3210
  %v3219 = vld [vmem:[%s3] sm:$0xff]
  %v3220 = vld [vmem:[%s3 + $0x8] sm:$0xff]
  %v3221 = vld [vmem:[%s3 + $0x10] sm:$0xff]
  %v3222 = vld [vmem:[%s3 + $0x18] sm:$0xff]
  %v3223 = vld [vmem:[%s3 + $0x20] sm:$0xff]
  %v3224 = vld [vmem:[%s3 + $0x28] sm:$0xff]
  %v3225 = vld [vmem:[%s3 + $0x30] sm:$0xff]
  %v3226 = vld [vmem:[%s3 + $0x38] sm:$0xff]
  %v3227 = vld [vmem:[%s4] sm:$0x1]
  %v3229 = vlaneseq
  %v3230 = vshrl.u32 %v3229, 7
  %v3231 = vsub.s32 0, %v3230
  %v3232 = vrot.slane %v3227, %v3231
  %vm3242 = vcmask 1041409
  %v3243 = vsel %vm3242, %v3212, %v3211
  %vm3244 = vcmask 1042434
  %v3245 = vsel %vm3244, %v3213, %v3243
  %vm3246 = vcmask 1043459
  %v3247 = vsel %vm3246, %v3214, %v3245
  %vm3248 = vcmask 1044484
  %v3249 = vsel %vm3248, %v3215, %v3247
  %vm3250 = vcmask 1045509
  %v3251 = vsel %vm3250, %v3216, %v3249
  %vm3252 = vcmask 1046534
  %v3253 = vsel %vm3252, %v3217, %v3251
  %vm3254 = vcmask 1047559
  %v3255 = vsel %vm3254, %v3218, %v3253
  %v3256 = vsel %vm2657, %v3255, 0
  %3258 = vmatprep.subr.mxu0 0.0
  %3259 = vmatpush1.msra.mxu0 %v3219
  %3260 = vmatprep.subr.mxu0 0.0
  %3261 = vmatpush1.msra.mxu0 %v3220
  %3262 = vmatprep.subr.mxu0 0.0
  %3263 = vmatpush1.msra.mxu0 %v3221
  %3264 = vmatprep.subr.mxu0 0.0
  %3265 = vmatpush1.msra.mxu0 %v3222
  %3266 = vmatprep.subr.mxu0 0.0
  %3267 = vmatpush1.msra.mxu0 %v3223
  %3268 = vmatprep.subr.mxu0 0.0
  %3269 = vmatpush1.msra.mxu0 %v3224
  %3270 = vmatprep.subr.mxu0 0.0
  %3271 = vmatpush1.msra.mxu0 %v3225
  %3272 = vmatprep.subr.mxu0 0.0
  %3273 = vmatpush1.msra.mxu0 %v3226
  %3274 = vmatprep.subr.mxu0 0.0
  %3275 = vmatpush1.msra.mxu0 0.0
  %3276 = vmatprep.subr.mxu0 0.0
  %3277 = vmatpush1.msra.mxu0 0.0
  %3278 = vmatprep.subr.mxu0 0.0
  %3279 = vmatpush1.msra.mxu0 0.0
  %3280 = vmatprep.subr.mxu0 0.0
  %3281 = vmatpush1.msra.mxu0 0.0
  %3282 = vmatprep.subr.mxu0 0.0
  %3283 = vmatpush1.msra.mxu0 0.0
  %3284 = vmatprep.subr.mxu0 0.0
  %3285 = vmatpush1.msra.mxu0 0.0
  %3286 = vmatprep.subr.mxu0 0.0
  %3287 = vmatpush1.msra.mxu0 0.0
  %3288 = vmatprep.subr.mxu0 0.0
  %3289 = vmatpush1.msra.mxu0 0.0
  %3290 = vmatprep.subr.mxu0 0.0
  %3291 = vmatpush1.msra.mxu0 0.0
  %3292 = vmatprep.subr.mxu0 0.0
  %3293 = vmatpush1.msra.mxu0 0.0
  %3294 = vmatprep.subr.mxu0 0.0
  %3295 = vmatpush1.msra.mxu0 0.0
  %3296 = vmatprep.subr.mxu0 0.0
  %3297 = vmatpush1.msra.mxu0 0.0
  %3298 = vmatprep.subr.mxu0 0.0
  %3299 = vmatpush1.msra.mxu0 0.0
  %3300 = vmatprep.subr.mxu0 0.0
  %3301 = vmatpush1.msra.mxu0 0.0
  %3302 = vmatprep.subr.mxu0 0.0
  %3303 = vmatpush1.msra.mxu0 0.0
  %3304 = vmatprep.subr.mxu0 0.0
  %3305 = vmatpush1.msra.mxu0 0.0
  %3306 = vmatprep.subr.mxu0 0.0
  %3307 = vmatpush1.msra.mxu0 0.0
  %3308 = vmatprep.subr.mxu0 0.0
  %3309 = vmatpush1.msra.mxu0 0.0
  %3310 = vmatprep.subr.mxu0 0.0
  %3311 = vmatpush1.msra.mxu0 0.0
  %3312 = vmatprep.subr.mxu0 0.0
  %3313 = vmatpush1.msra.mxu0 0.0
  %3314 = vmatprep.subr.mxu0 0.0
  %3315 = vmatpush1.msra.mxu0 0.0
  %3316 = vmatprep.subr.mxu0 0.0
  %3317 = vmatpush1.msra.mxu0 0.0
  %3318 = vmatprep.subr.mxu0 0.0
  %3319 = vmatpush1.msra.mxu0 0.0
  %3320 = vmatprep.subr.mxu0 0.0
  %3321 = vmatpush1.msra.mxu0 0.0
  %3322 = vmatprep.mubr.f32.mxu0 0.0
  %3323 = vmatmul.mubr.f32.gmra.mrb[0].mxu0 %v3256
  %v3324 = vpop.f32.mrb[0].mxu0
  %v3325 = vadd.f32 %v3232, %v3324
  %v3326 = vpop.f32.mrb[0].mxu0
  %3327 = vdwg.mxu0
  %v3328 = vmax.f32 %v3325, 0.0
  %3329 = vst.msk [vmem:[%s5] sm:$0xff] %vm287, %v3328
  // Predicated region
  $region22: #{cnn_to_rnn_forward.2} parent=0 // pred_check
    _
  $region23: #{cnn_to_rnn_forward.2} parent=0 // pred_check_branch
    %3331 = sbr.rel (0) target = $region25
  $region24: #{cnn_to_rnn_forward.2} parent=0 // pred_region
    _
  $region25: #{cnn_to_rnn_forward.2} parent=0 // pred_fallthru
    _
  // Predicated region
  $region26: #{cnn_to_rnn_forward.2} parent=0 // pred_check
    _
  $region27: #{cnn_to_rnn_forward.2} parent=0 // pred_check_branch
    %3333 = sbr.rel (0) target = $region29
  $region28: #{cnn_to_rnn_forward.2} parent=0 // pred_region
    _
  $region29: #{cnn_to_rnn_forward.2} parent=0 // pred_fallthru
    _

</llo_original>
